<compile_context>
chip_gen: v6e
topology: v6e:2x2x1
jax: 0.10.0
libtpu: 0.0.40
codegen_flags: <defaults>
</compile_context>

<pallas_src>
import functools

import jax
import jax.numpy as jnp
from jax import lax
from jax.experimental import pallas as pl
from jax.experimental.pallas import tpu as pltpu


def _residual_block_kernel(H, W, C, compute_dtype,
                           xp_ref, s1_ref, b1_ref, w1_ref,
                           s2_ref, b2_ref, w2_ref, cb2_ref,
                           o_ref, hp2_ref):
    """One batch image per grid step.

    xp_ref : (1, H+2, W+2, C)  replicate-padded input (padded once in the wrapper)
    s*/b*  : (1, C)            folded inference BatchNorm scale / bias (cb1 folded into b2)
    w*_ref : (9*C, C)          conv weights, tap-major ((dy*3+dx)*C + ci) -> co
    cb2_ref: (1, C)            conv2 bias
    o_ref  : (1, H, W, C)
    hp2_ref: (H+2, W+2, C) f32 VMEM scratch = replicate-padded BN2+ReLU output
    """
    xp = xp_ref[0]                                                   # (H+2, W+2, C)

    def conv3x3(hp, w_ref):
        # Fused im2col: dy slices are leading-axis (free), dx slices are small static
        # sublane shifts; a single (H*W, 9C) @ (9C, C) matmul replaces 9 K=C matmuls.
        cols = [hp[dy:dy + H, dx:dx + W, :]
                for dy in range(3) for dx in range(3)]
        patch = jnp.concatenate(cols, axis=-1)                       # (H, W, 9C)
        patch = patch.reshape(H * W, 9 * C).astype(compute_dtype)
        return jnp.dot(patch, w_ref[...],
                       preferred_element_type=jnp.float32)           # (H*W, C) f32

    # ---- stage 1: folded BN + ReLU on the padded tensor, then conv1 (bias folded into b2)
    hp1 = jnp.maximum(xp * s1_ref[...] + b1_ref[...], 0.0)
    y1 = conv3x3(hp1, w1_ref)                                        # (H*W, C)

    # ---- stage 2: BN + ReLU written into a pre-padded VMEM scratch; replicate the edges
    #      with slice stores instead of concatenates.
    h2 = jnp.maximum(y1 * s2_ref[...] + b2_ref[...], 0.0).reshape(H, W, C)
    hp2_ref[1:H + 1, 1:W + 1, :] = h2
    hp2_ref[0:1, 1:W + 1, :] = h2[0:1]                               # top edge row
    hp2_ref[H + 1:H + 2, 1:W + 1, :] = h2[H - 1:H]                   # bottom edge row
    hp2_ref[:, 0:1, :] = hp2_ref[:, 1:2, :]                          # left edge col (+corners)
    hp2_ref[:, W + 1:W + 2, :] = hp2_ref[:, W:W + 1, :]              # right edge col (+corners)

    y2 = conv3x3(hp2_ref[...], w2_ref) + cb2_ref[...]                # (H*W, C)

    # ---- residual add: the unpadded x is the interior of the padded block
    x = xp[1:H + 1, 1:W + 1, :]
    o_ref[0] = (x + y2.reshape(H, W, C)).astype(o_ref.dtype)


def _fold_params(params, compute_dtype):
    C = params["s1"].shape[0]
    s1 = params["s1"].reshape(1, C).astype(jnp.float32)
    b1 = params["b1"].reshape(1, C).astype(jnp.float32)
    s2 = params["s2"].reshape(1, C).astype(jnp.float32)
    # conv1 bias folded into BN2 bias:  s2*(y + cb1) + b2 == s2*y + (s2*cb1 + b2)
    b2 = (params["s2"] * params["cb1"] + params["b2"]).reshape(1, C).astype(jnp.float32)
    cb2 = params["cb2"].reshape(1, C).astype(jnp.float32)
    # (kh, kw, Cin, Cout) -> (9*Cin, Cout), tap-major, matching the in-kernel im2col order
    w1 = params["w1"].reshape(9 * C, C).astype(compute_dtype)
    w2 = params["w2"].reshape(9 * C, C).astype(compute_dtype)
    return s1, b1, w1, s2, b2, w2, cb2


def residual_block_pallas_nhwc(x_nhwc, params, compute_dtype=jnp.float32):
    """Core NHWC path (no layout transposes)."""
    x = x_nhwc.astype(jnp.float32)
    B, H, W, C = x.shape
    # One-time replicate pad in XLA; BN+ReLU commute with replicate padding (pointwise).
    xp = jnp.pad(x, ((0, 0), (1, 1), (1, 1), (0, 0)), mode="edge")
    s1, b1, w1, s2, b2, w2, cb2 = _fold_params(params, compute_dtype)

    kernel = functools.partial(_residual_block_kernel, H, W, C, compute_dtype)

    vec_spec = pl.BlockSpec((1, C), lambda b: (0, 0))          # resident across grid steps
    w_spec = pl.BlockSpec((9 * C, C), lambda b: (0, 0))        # resident across grid steps

    out = pl.pallas_call(
        kernel,
        out_shape=jax.ShapeDtypeStruct((B, H, W, C), jnp.float32),
        grid_spec=pltpu.PrefetchScalarGridSpec(
            num_scalar_prefetch=0,
            grid=(B,),
            in_specs=[
                pl.BlockSpec((1, H + 2, W + 2, C), lambda b: (b, 0, 0, 0)),
                vec_spec, vec_spec, w_spec,          # stage 1: s1, b1, w1
                vec_spec, vec_spec, w_spec,          # stage 2: s2, b2(+cb1), w2
                vec_spec,                            # cb2
            ],
            out_specs=pl.BlockSpec((1, H, W, C), lambda b: (b, 0, 0, 0)),
            scratch_shapes=[pltpu.VMEM((H + 2, W + 2, C), jnp.float32)],
        ),
        compiler_params=pltpu.CompilerParams(
            dimension_semantics=("parallel",)),
    )(xp, s1, b1, w1, s2, b2, w2, cb2)
    return out


def residual_block_pallas(x_nchw, params, compute_dtype=jnp.float32):
    # TODO(synk): if the surrounding model is NHWC end-to-end, call
    # residual_block_pallas_nhwc directly and drop these two full-tensor transposes.
    x = jnp.transpose(x_nchw, (0, 2, 3, 1))
    y = residual_block_pallas_nhwc(x, params, compute_dtype=compute_dtype)
    return jnp.transpose(y, (0, 3, 1, 2))


# ---------------- pure-JAX reference (for correctness check) ----------------

def _conv3x3_replicate_ref(h_nhwc, w_hwio, bias_c):
    hp = jnp.pad(h_nhwc, ((0, 0), (1, 1), (1, 1), (0, 0)), mode="edge")
    y = lax.conv_general_dilated(
        hp, w_hwio, window_strides=(1, 1), padding="VALID",
        dimension_numbers=("NHWC", "HWIO", "NHWC"))
    return y + bias_c


def residual_block_ref(x_nchw, params):
    x = jnp.transpose(x_nchw, (0, 2, 3, 1)).astype(jnp.float32)
    C = x.shape[-1]

    def bn(h, s, b):
        return h * s.reshape(1, 1, 1, C) + b.reshape(1, 1, 1, C)

    h = jnp.maximum(bn(x, params["s1"], params["b1"]), 0.0)
    h = _conv3x3_replicate_ref(h, params["w1"], params["cb1"].reshape(1, 1, 1, C))
    h = jnp.maximum(bn(h, params["s2"], params["b2"]), 0.0)
    h = _conv3x3_replicate_ref(h, params["w2"], params["cb2"].reshape(1, 1, 1, C))
    return jnp.transpose(x + h, (0, 3, 1, 2))


# ---------------- deterministic parameter construction ----------------

def make_params(key, c_in):
    eps = 1e-5
    ks = jax.random.split(key, 12)
    # BatchNorm2d #1 (inference-mode running stats, folded to scale/bias)
    g1 = 1.0 + 0.1 * jax.random.normal(ks[0], (c_in,), jnp.float32)
    beta1 = 0.1 * jax.random.normal(ks[1], (c_in,), jnp.float32)
    rm1 = 0.1 * jax.random.normal(ks[2], (c_in,), jnp.float32)
    rv1 = 1.0 + jnp.abs(0.1 * jax.random.normal(ks[3], (c_in,), jnp.float32))
    # BatchNorm2d #2
    g2 = 1.0 + 0.1 * jax.random.normal(ks[4], (c_in,), jnp.float32)
    beta2 = 0.1 * jax.random.normal(ks[5], (c_in,), jnp.float32)
    rm2 = 0.1 * jax.random.normal(ks[6], (c_in,), jnp.float32)
    rv2 = 1.0 + jnp.abs(0.1 * jax.random.normal(ks[7], (c_in,), jnp.float32))
    # Conv weights generated directly in HWIO (kh, kw, Cin, Cout); groups=1
    w1 = 0.1 * jax.random.normal(ks[8], (3, 3, c_in, c_in), jnp.float32)
    cb1 = 0.1 * jax.random.normal(ks[9], (c_in,), jnp.float32)
    w2 = 0.1 * jax.random.normal(ks[10], (3, 3, c_in, c_in), jnp.float32)
    cb2 = 0.1 * jax.random.normal(ks[11], (c_in,), jnp.float32)

    s1 = g1 / jnp.sqrt(rv1 + eps)
    b1 = beta1 - rm1 * s1
    s2 = g2 / jnp.sqrt(rv2 + eps)
    b2 = beta2 - rm2 * s2

    return {"s1": s1, "b1": b1, "s2": s2, "b2": b2,
            "w1": w1, "w2": w2, "cb1": cb1, "cb2": cb2}


if __name__ == "__main__":
    key = jax.random.PRNGKey(0)
    k_x, k_p = jax.random.split(key)

    B, C, H, W = 2, 4, 16, 16
    x = jax.random.normal(k_x, (B, C, H, W), jnp.float32)   # NCHW, PyTorch convention
    params = make_params(k_p, C)

    ref = residual_block_ref(x, params)

    # f32 MXU-operand path (exact parity with the reference)
    fwd_f32 = jax.jit(residual_block_pallas)
    out = jax.block_until_ready(fwd_f32(x, params))
    assert out.shape == (B, C, H, W)
    err = jnp.max(jnp.abs(out - ref))
    assert jnp.allclose(out, ref, atol=1e-4, rtol=1e-4), f"f32 max abs err = {err}"

    # bf16 MXU-operand path (recommended on v6e/v7x), f32 accumulation
    fwd_bf16 = jax.jit(functools.partial(residual_block_pallas,
                                         compute_dtype=jnp.bfloat16))
    out_bf16 = jax.block_until_ready(fwd_bf16(x, params))
    err16 = jnp.max(jnp.abs(out_bf16 - ref))
    assert jnp.allclose(out_bf16, ref, atol=5e-2, rtol=5e-2), f"bf16 max abs err = {err16}"

    print("KERNEL_OK")
</pallas_src>

<mosaic_0001>
module attributes {stable_mosaic.version = 11 : i64} {
  func.func @_residual_block_kernel(%arg0: i32, %arg1: memref<1x18x18x4xf32, #tpu.memory_space<vmem>>, %arg2: memref<1x4xf32, #tpu.memory_space<vmem>>, %arg3: memref<1x4xf32, #tpu.memory_space<vmem>>, %arg4: memref<36x4xf32, #tpu.memory_space<vmem>>, %arg5: memref<1x4xf32, #tpu.memory_space<vmem>>, %arg6: memref<1x4xf32, #tpu.memory_space<vmem>>, %arg7: memref<36x4xf32, #tpu.memory_space<vmem>>, %arg8: memref<1x4xf32, #tpu.memory_space<vmem>>, %arg9: memref<1x16x16x4xf32, #tpu.memory_space<vmem>>, %arg10: memref<18x18x4xf32, #tpu.memory_space<vmem>>) attributes {dimension_semantics = [#tpu.dimension_semantics<parallel>], iteration_bounds = array<i64: 2>, scalar_prefetch = 0 : i64, scratch_operands = 1 : i64, tpu.core_type = #tpu.core_type<tc>, window_params = [{transform_indices = @transform_0, window_bounds = array<i64: 1, 18, 18, 4>}, {pipeline_mode = #tpu.pipeline_mode<synchronous>, transform_indices = @transform_1, window_bounds = array<i64: 1, 4>}, {pipeline_mode = #tpu.pipeline_mode<synchronous>, transform_indices = @transform_2, window_bounds = array<i64: 1, 4>}, {pipeline_mode = #tpu.pipeline_mode<synchronous>, transform_indices = @transform_3, window_bounds = array<i64: 36, 4>}, {pipeline_mode = #tpu.pipeline_mode<synchronous>, transform_indices = @transform_4, window_bounds = array<i64: 1, 4>}, {pipeline_mode = #tpu.pipeline_mode<synchronous>, transform_indices = @transform_5, window_bounds = array<i64: 1, 4>}, {pipeline_mode = #tpu.pipeline_mode<synchronous>, transform_indices = @transform_6, window_bounds = array<i64: 36, 4>}, {pipeline_mode = #tpu.pipeline_mode<synchronous>, transform_indices = @transform_7, window_bounds = array<i64: 1, 4>}, {transform_indices = @transform_8, window_bounds = array<i64: 1, 16, 16, 4>}]} {
    %c0 = arith.constant 0 : index
    %c0_0 = arith.constant 0 : index
    %c0_1 = arith.constant 0 : index
    %c0_2 = arith.constant 0 : index
    %0 = vector.load %arg1[%c0, %c0_0, %c0_1, %c0_2] : memref<1x18x18x4xf32, #tpu.memory_space<vmem>>, vector<1x18x18x4xf32>
    %1 = vector.shape_cast %0 : vector<1x18x18x4xf32> to vector<18x18x4xf32>
    %c0_3 = arith.constant 0 : index
    %c0_4 = arith.constant 0 : index
    %2 = vector.load %arg2[%c0_3, %c0_4] : memref<1x4xf32, #tpu.memory_space<vmem>>, vector<1x4xf32>
    %3 = vector.shape_cast %2 : vector<1x4xf32> to vector<1x1x4xf32>
    %4 = vector.broadcast %3 : vector<1x1x4xf32> to vector<18x18x4xf32>
    %5 = arith.mulf %1, %4 : vector<18x18x4xf32>
    %c0_5 = arith.constant 0 : index
    %c0_6 = arith.constant 0 : index
    %6 = vector.load %arg3[%c0_5, %c0_6] : memref<1x4xf32, #tpu.memory_space<vmem>>, vector<1x4xf32>
    %7 = vector.shape_cast %6 : vector<1x4xf32> to vector<1x1x4xf32>
    %8 = vector.broadcast %7 : vector<1x1x4xf32> to vector<18x18x4xf32>
    %9 = arith.addf %5, %8 : vector<18x18x4xf32>
    %cst = arith.constant 0.000000e+00 : f32
    %10 = vector.broadcast %cst : f32 to vector<18x18x4xf32>
    %11 = arith.maximumf %9, %10 : vector<18x18x4xf32>
    %12 = vector.extract_strided_slice %11 {offsets = [0, 0, 0], sizes = [16, 16, 4], strides = [1, 1, 1]} : vector<18x18x4xf32> to vector<16x16x4xf32>
    %13 = vector.extract_strided_slice %11 {offsets = [0, 1, 0], sizes = [16, 16, 4], strides = [1, 1, 1]} : vector<18x18x4xf32> to vector<16x16x4xf32>
    %14 = vector.extract_strided_slice %11 {offsets = [0, 2, 0], sizes = [16, 16, 4], strides = [1, 1, 1]} : vector<18x18x4xf32> to vector<16x16x4xf32>
    %15 = vector.extract_strided_slice %11 {offsets = [1, 0, 0], sizes = [16, 16, 4], strides = [1, 1, 1]} : vector<18x18x4xf32> to vector<16x16x4xf32>
    %16 = vector.extract_strided_slice %11 {offsets = [1, 1, 0], sizes = [16, 16, 4], strides = [1, 1, 1]} : vector<18x18x4xf32> to vector<16x16x4xf32>
    %17 = vector.extract_strided_slice %11 {offsets = [1, 2, 0], sizes = [16, 16, 4], strides = [1, 1, 1]} : vector<18x18x4xf32> to vector<16x16x4xf32>
    %18 = vector.extract_strided_slice %11 {offsets = [2, 0, 0], sizes = [16, 16, 4], strides = [1, 1, 1]} : vector<18x18x4xf32> to vector<16x16x4xf32>
    %19 = vector.extract_strided_slice %11 {offsets = [2, 1, 0], sizes = [16, 16, 4], strides = [1, 1, 1]} : vector<18x18x4xf32> to vector<16x16x4xf32>
    %20 = vector.extract_strided_slice %11 {offsets = [2, 2, 0], sizes = [16, 16, 4], strides = [1, 1, 1]} : vector<18x18x4xf32> to vector<16x16x4xf32>
    %21 = tpu.concatenate %12, %13, %14, %15, %16, %17, %18, %19, %20 in 2 : vector<16x16x4xf32>, vector<16x16x4xf32>, vector<16x16x4xf32>, vector<16x16x4xf32>, vector<16x16x4xf32>, vector<16x16x4xf32>, vector<16x16x4xf32>, vector<16x16x4xf32>, vector<16x16x4xf32> -> vector<16x16x36xf32>
    %22 = vector.shape_cast %21 : vector<16x16x36xf32> to vector<256x36xf32>
    %c0_7 = arith.constant 0 : index
    %c0_8 = arith.constant 0 : index
    %23 = vector.load %arg4[%c0_7, %c0_8] : memref<36x4xf32, #tpu.memory_space<vmem>>, vector<36x4xf32>
    %cst_9 = arith.constant dense<0.000000e+00> : vector<256x4xf32>
    %24 = tpu.matmul %22, %23, %cst_9 {dimension_numbers = #tpu.dot_dimension_numbers<[1], [0], [0], [1], [0, 0, 1, 1], [], []>} : vector<256x36xf32>, vector<36x4xf32>, vector<256x4xf32> -> vector<256x4xf32>
    %c0_10 = arith.constant 0 : index
    %c0_11 = arith.constant 0 : index
    %25 = vector.load %arg5[%c0_10, %c0_11] : memref<1x4xf32, #tpu.memory_space<vmem>>, vector<1x4xf32>
    %26 = vector.broadcast %25 : vector<1x4xf32> to vector<256x4xf32>
    %27 = arith.mulf %24, %26 : vector<256x4xf32>
    %c0_12 = arith.constant 0 : index
    %c0_13 = arith.constant 0 : index
    %28 = vector.load %arg6[%c0_12, %c0_13] : memref<1x4xf32, #tpu.memory_space<vmem>>, vector<1x4xf32>
    %29 = vector.broadcast %28 : vector<1x4xf32> to vector<256x4xf32>
    %30 = arith.addf %27, %29 : vector<256x4xf32>
    %cst_14 = arith.constant 0.000000e+00 : f32
    %31 = vector.broadcast %cst_14 : f32 to vector<256x4xf32>
    %32 = arith.maximumf %30, %31 : vector<256x4xf32>
    %33 = vector.shape_cast %32 : vector<256x4xf32> to vector<16x16x4xf32>
    %c1 = arith.constant 1 : index
    %c1_15 = arith.constant 1 : index
    %c0_16 = arith.constant 0 : index
    %34 = vector.load %arg10[%c1, %c1_15, %c0_16] : memref<18x18x4xf32, #tpu.memory_space<vmem>>, vector<16x16x4xf32>
    tpu.vector_store %arg10[%c1, %c1_15, %c0_16], %33 {strides = array<i32>} : memref<18x18x4xf32, #tpu.memory_space<vmem>>, vector<16x16x4xf32>,
    %35 = vector.extract_strided_slice %33 {offsets = [0, 0, 0], sizes = [1, 16, 4], strides = [1, 1, 1]} : vector<16x16x4xf32> to vector<1x16x4xf32>
    %c0_17 = arith.constant 0 : index
    %c1_18 = arith.constant 1 : index
    %c0_19 = arith.constant 0 : index
    %36 = vector.load %arg10[%c0_17, %c1_18, %c0_19] : memref<18x18x4xf32, #tpu.memory_space<vmem>>, vector<1x16x4xf32>
    tpu.vector_store %arg10[%c0_17, %c1_18, %c0_19], %35 {strides = array<i32>} : memref<18x18x4xf32, #tpu.memory_space<vmem>>, vector<1x16x4xf32>,
    %37 = vector.extract_strided_slice %33 {offsets = [15, 0, 0], sizes = [1, 16, 4], strides = [1, 1, 1]} : vector<16x16x4xf32> to vector<1x16x4xf32>
    %c17 = arith.constant 17 : index
    %c1_20 = arith.constant 1 : index
    %c0_21 = arith.constant 0 : index
    %38 = vector.load %arg10[%c17, %c1_20, %c0_21] : memref<18x18x4xf32, #tpu.memory_space<vmem>>, vector<1x16x4xf32>
    tpu.vector_store %arg10[%c17, %c1_20, %c0_21], %37 {strides = array<i32>} : memref<18x18x4xf32, #tpu.memory_space<vmem>>, vector<1x16x4xf32>,
    %c0_22 = arith.constant 0 : index
    %c1_23 = arith.constant 1 : index
    %c0_24 = arith.constant 0 : index
    %39 = vector.load %arg10[%c0_22, %c1_23, %c0_24] : memref<18x18x4xf32, #tpu.memory_space<vmem>>, vector<18x1x4xf32>
    %c0_25 = arith.constant 0 : index
    %c0_26 = arith.constant 0 : index
    %c0_27 = arith.constant 0 : index
    %40 = vector.load %arg10[%c0_25, %c0_26, %c0_27] : memref<18x18x4xf32, #tpu.memory_space<vmem>>, vector<18x1x4xf32>
    tpu.vector_store %arg10[%c0_25, %c0_26, %c0_27], %39 {strides = array<i32>} : memref<18x18x4xf32, #tpu.memory_space<vmem>>, vector<18x1x4xf32>,
    %c0_28 = arith.constant 0 : index
    %c16 = arith.constant 16 : index
    %c0_29 = arith.constant 0 : index
    %41 = vector.load %arg10[%c0_28, %c16, %c0_29] : memref<18x18x4xf32, #tpu.memory_space<vmem>>, vector<18x1x4xf32>
    %c0_30 = arith.constant 0 : index
    %c17_31 = arith.constant 17 : index
    %c0_32 = arith.constant 0 : index
    %42 = vector.load %arg10[%c0_30, %c17_31, %c0_32] : memref<18x18x4xf32, #tpu.memory_space<vmem>>, vector<18x1x4xf32>
    tpu.vector_store %arg10[%c0_30, %c17_31, %c0_32], %41 {strides = array<i32>} : memref<18x18x4xf32, #tpu.memory_space<vmem>>, vector<18x1x4xf32>,
    %c0_33 = arith.constant 0 : index
    %c0_34 = arith.constant 0 : index
    %c0_35 = arith.constant 0 : index
    %43 = vector.load %arg10[%c0_33, %c0_34, %c0_35] : memref<18x18x4xf32, #tpu.memory_space<vmem>>, vector<18x18x4xf32>
    %44 = vector.extract_strided_slice %43 {offsets = [0, 0, 0], sizes = [16, 16, 4], strides = [1, 1, 1]} : vector<18x18x4xf32> to vector<16x16x4xf32>
    %45 = vector.extract_strided_slice %43 {offsets = [0, 1, 0], sizes = [16, 16, 4], strides = [1, 1, 1]} : vector<18x18x4xf32> to vector<16x16x4xf32>
    %46 = vector.extract_strided_slice %43 {offsets = [0, 2, 0], sizes = [16, 16, 4], strides = [1, 1, 1]} : vector<18x18x4xf32> to vector<16x16x4xf32>
    %47 = vector.extract_strided_slice %43 {offsets = [1, 0, 0], sizes = [16, 16, 4], strides = [1, 1, 1]} : vector<18x18x4xf32> to vector<16x16x4xf32>
    %48 = vector.extract_strided_slice %43 {offsets = [1, 1, 0], sizes = [16, 16, 4], strides = [1, 1, 1]} : vector<18x18x4xf32> to vector<16x16x4xf32>
    %49 = vector.extract_strided_slice %43 {offsets = [1, 2, 0], sizes = [16, 16, 4], strides = [1, 1, 1]} : vector<18x18x4xf32> to vector<16x16x4xf32>
    %50 = vector.extract_strided_slice %43 {offsets = [2, 0, 0], sizes = [16, 16, 4], strides = [1, 1, 1]} : vector<18x18x4xf32> to vector<16x16x4xf32>
    %51 = vector.extract_strided_slice %43 {offsets = [2, 1, 0], sizes = [16, 16, 4], strides = [1, 1, 1]} : vector<18x18x4xf32> to vector<16x16x4xf32>
    %52 = vector.extract_strided_slice %43 {offsets = [2, 2, 0], sizes = [16, 16, 4], strides = [1, 1, 1]} : vector<18x18x4xf32> to vector<16x16x4xf32>
    %53 = tpu.concatenate %44, %45, %46, %47, %48, %49, %50, %51, %52 in 2 : vector<16x16x4xf32>, vector<16x16x4xf32>, vector<16x16x4xf32>, vector<16x16x4xf32>, vector<16x16x4xf32>, vector<16x16x4xf32>, vector<16x16x4xf32>, vector<16x16x4xf32>, vector<16x16x4xf32> -> vector<16x16x36xf32>
    %54 = vector.shape_cast %53 : vector<16x16x36xf32> to vector<256x36xf32>
    %c0_36 = arith.constant 0 : index
    %c0_37 = arith.constant 0 : index
    %55 = vector.load %arg7[%c0_36, %c0_37] : memref<36x4xf32, #tpu.memory_space<vmem>>, vector<36x4xf32>
    %cst_38 = arith.constant dense<0.000000e+00> : vector<256x4xf32>
    %56 = tpu.matmul %54, %55, %cst_38 {dimension_numbers = #tpu.dot_dimension_numbers<[1], [0], [0], [1], [0, 0, 1, 1], [], []>} : vector<256x36xf32>, vector<36x4xf32>, vector<256x4xf32> -> vector<256x4xf32>
    %c0_39 = arith.constant 0 : index
    %c0_40 = arith.constant 0 : index
    %57 = vector.load %arg8[%c0_39, %c0_40] : memref<1x4xf32, #tpu.memory_space<vmem>>, vector<1x4xf32>
    %58 = vector.broadcast %57 : vector<1x4xf32> to vector<256x4xf32>
    %59 = arith.addf %56, %58 : vector<256x4xf32>
    %60 = vector.extract_strided_slice %1 {offsets = [1, 1, 0], sizes = [16, 16, 4], strides = [1, 1, 1]} : vector<18x18x4xf32> to vector<16x16x4xf32>
    %61 = vector.shape_cast %59 : vector<256x4xf32> to vector<16x16x4xf32>
    %62 = arith.addf %60, %61 : vector<16x16x4xf32>
    %c0_41 = arith.constant 0 : index
    %c0_42 = arith.constant 0 : index
    %c0_43 = arith.constant 0 : index
    %c0_44 = arith.constant 0 : index
    %63 = vector.load %arg9[%c0_41, %c0_42, %c0_43, %c0_44] : memref<1x16x16x4xf32, #tpu.memory_space<vmem>>, vector<1x16x16x4xf32>
    %64 = vector.shape_cast %63 : vector<1x16x16x4xf32> to vector<16x16x4xf32>
    %65 = vector.shape_cast %62 : vector<16x16x4xf32> to vector<1x16x16x4xf32>
    tpu.vector_store %arg9[%c0_41, %c0_42, %c0_43, %c0_44], %65 {strides = array<i32>} : memref<1x16x16x4xf32, #tpu.memory_space<vmem>>, vector<1x16x16x4xf32>,
    return
  }
  func.func @transform_0(%arg0: i32) -> (i32, i32, i32, i32) {
    %c0_i32 = arith.constant 0 : i32
    %c0_i32_0 = arith.constant 0 : i32
    %c0_i32_1 = arith.constant 0 : i32
    %c0_i32_2 = arith.constant 0 : i32
    return %arg0, %c0_i32, %c0_i32_0, %c0_i32_1 : i32, i32, i32, i32
  }
  func.func @transform_1(%arg0: i32) -> (i32, i32) {
    %c0_i32 = arith.constant 0 : i32
    %c0_i32_0 = arith.constant 0 : i32
    %c0_i32_1 = arith.constant 0 : i32
    return %c0_i32, %c0_i32_0 : i32, i32
  }
  func.func @transform_2(%arg0: i32) -> (i32, i32) {
    %c0_i32 = arith.constant 0 : i32
    %c0_i32_0 = arith.constant 0 : i32
    %c0_i32_1 = arith.constant 0 : i32
    return %c0_i32, %c0_i32_0 : i32, i32
  }
  func.func @transform_3(%arg0: i32) -> (i32, i32) {
    %c0_i32 = arith.constant 0 : i32
    %c0_i32_0 = arith.constant 0 : i32
    %c0_i32_1 = arith.constant 0 : i32
    return %c0_i32, %c0_i32_0 : i32, i32
  }
  func.func @transform_4(%arg0: i32) -> (i32, i32) {
    %c0_i32 = arith.constant 0 : i32
    %c0_i32_0 = arith.constant 0 : i32
    %c0_i32_1 = arith.constant 0 : i32
    return %c0_i32, %c0_i32_0 : i32, i32
  }
  func.func @transform_5(%arg0: i32) -> (i32, i32) {
    %c0_i32 = arith.constant 0 : i32
    %c0_i32_0 = arith.constant 0 : i32
    %c0_i32_1 = arith.constant 0 : i32
    return %c0_i32, %c0_i32_0 : i32, i32
  }
  func.func @transform_6(%arg0: i32) -> (i32, i32) {
    %c0_i32 = arith.constant 0 : i32
    %c0_i32_0 = arith.constant 0 : i32
    %c0_i32_1 = arith.constant 0 : i32
    return %c0_i32, %c0_i32_0 : i32, i32
  }
  func.func @transform_7(%arg0: i32) -> (i32, i32) {
    %c0_i32 = arith.constant 0 : i32
    %c0_i32_0 = arith.constant 0 : i32
    %c0_i32_1 = arith.constant 0 : i32
    return %c0_i32, %c0_i32_0 : i32, i32
  }
  func.func @transform_8(%arg0: i32) -> (i32, i32, i32, i32) {
    %c0_i32 = arith.constant 0 : i32
    %c0_i32_0 = arith.constant 0 : i32
    %c0_i32_1 = arith.constant 0 : i32
    %c0_i32_2 = arith.constant 0 : i32
    return %arg0, %c0_i32, %c0_i32_0, %c0_i32_1 : i32, i32, i32, i32
  }
}

</mosaic_0001>

<llo_original>
// kernel: residual_block_pallas.1
$region0: #{residual_block_pallas.1}
  #allocation0 [shape = 'u32[]', space=smem, size = 0x4, offset = 0x4, fixed_abs, tag = 'smem constant byte address 0x4 - core index']
  #allocation1 [shape = 'u32[144,128]{1,0:T(1,128)}', space=vmem, size = 0x12000, scoped, tag = 'internal scratch']
  #allocation2 [shape = 'f32[18,18,4]{2,1,0:T(8,128)}', space=vmem, size = 0x36000, scoped, tag = 'scratch operand']
  %s0 = inlined_call_operand.vmem [shape: f32[2,18,18,4], index: 0, kind: input, shape index: {}]
  %s1 = inlined_call_operand.vmem [shape: f32[1,4], index: 1, kind: input, shape index: {}]
  %s2 = inlined_call_operand.vmem [shape: f32[1,4], index: 2, kind: input, shape index: {}]
  %s3 = inlined_call_operand.vmem [shape: f32[36,4], index: 3, kind: input, shape index: {}]
  %s4 = inlined_call_operand.vmem [shape: f32[1,4], index: 4, kind: input, shape index: {}]
  %s5 = inlined_call_operand.vmem [shape: f32[1,4], index: 5, kind: input, shape index: {}]
  %s6 = inlined_call_operand.vmem [shape: f32[36,4], index: 6, kind: input, shape index: {}]
  %s7 = inlined_call_operand.vmem [shape: f32[1,4], index: 7, kind: input, shape index: {}]
  %s8 = inlined_call_operand.vmem [shape: f32[2,16,16,4], index: 8, kind: output, shape index: {}]
  %s9 = sld [smem:[#allocation0]]
  $region65: #{residual_block_pallas.1} parent=0
    _
  %s11 = ssub.s32 1, %s9
  %s12 = scalar_select 0, %s11, %s9
  loop: start=0, step=1, limit=4
  $region2: #{residual_block_pallas.1} parent=0 // loop_pre_header
    _
  $region3: #{residual_block_pallas.1} parent=0 // loop_header
    %s14 = sphi 0, %s18
    %p15 = scmp.ge.s32.totalorder %s14, 4
    %s24 = sphi 0, %s26
    %s27 = sphi 0, %s24
    %s28 = sphi 0, %s27
    %s44 = sphi 0, %s28
    %s48 = sphi 0, %s48
    %s50 = sphi 0, %s48
    %s51 = sphi 0, %s50
    %s65 = sphi 0, %s51
    %s69 = sphi 0, %s69
    %s71 = sphi 0, %s69
    %s72 = sphi 0, %s71
    %s86 = sphi 0, %s72
    %s90 = sphi 0, %s90
    %s92 = sphi 0, %s90
    %s93 = sphi 0, %s92
    %s107 = sphi 0, %s93
    %s111 = sphi 0, %s111
    %s113 = sphi 0, %s111
    %s114 = sphi 0, %s113
    %s128 = sphi 0, %s114
    %s132 = sphi 0, %s132
    %s134 = sphi 0, %s132
    %s135 = sphi 0, %s134
    %s149 = sphi 0, %s135
    %s153 = sphi 0, %s153
    %s155 = sphi 0, %s153
    %s156 = sphi 0, %s155
    %s170 = sphi 0, %s156
    %s174 = sphi 0, %s174
    %s176 = sphi 0, %s174
    %s177 = sphi 0, %s176
    %s191 = sphi 0, %s177
    %s197 = sphi 0, %s199
    %s200 = sphi 0, %s197
    %s201 = sphi 0, %s200
    %s217 = sphi 0, %s201
  $region4: #{residual_block_pallas.1} parent=0 // loop_header_branch
    %17 = sbr.rel (%p15) target = $region8
  $region5: #{residual_block_pallas.1} parent=0 // loop_body
    %s19 = ssub.s32 %s14, 1
    %s20 = ssub.s32 %s14, 2
    %s21 = sadd.s32 %s14, 1
    %s22 = ssub.s32 %s14, %s21
    %p23 = scmp.eq.s32.totalorder %s22, 0
    %s25 = sadd.s32 %s24, 1
    %s26 = scalar_select %p23, %s24, %s25
    %p29 = pneg %p23
    %p30 = scmp.eq.s32.totalorder %s14, 1
    %p31 = por %p29, %p30
    %p32 = scmp.ne.s32.totalorder %s24, %s27
    %p33 = scmp.eq.s32.totalorder %s14, 0
    %p34 = por %p32, %p33
    %p35 = scmp.ne.s32.totalorder %s24, %s27
    %p36 = scmp.eq.s32.totalorder %s19, 1
    %p37 = por %p35, %p36
    %p38 = scmp.ne.s32.totalorder %s27, %s28
    %p39 = scmp.eq.s32.totalorder %s19, 0
    %p40 = por %p38, %p39
    %p41 = scmp.ne.s32.totalorder %s27, %s28
    %p42 = scmp.eq.s32.totalorder %s20, 1
    %p43 = por %p41, %p42
    %p45 = scmp.ne.s32.totalorder %s28, %s44
    %p46 = scmp.eq.s32.totalorder %s20, 0
    %p47 = por %p45, %p46
    %s49 = sadd.s32 %s48, 1
    %p52 = scmp.eq.s32.totalorder %s14, 1
    %p53 = scmp.ne.s32.totalorder %s48, %s50
    %p54 = scmp.eq.s32.totalorder %s14, 0
    %p55 = por %p53, %p54
    %p56 = scmp.ne.s32.totalorder %s48, %s50
    %p57 = scmp.eq.s32.totalorder %s19, 1
    %p58 = por %p56, %p57
    %p59 = scmp.ne.s32.totalorder %s50, %s51
    %p60 = scmp.eq.s32.totalorder %s19, 0
    %p61 = por %p59, %p60
    %p62 = scmp.ne.s32.totalorder %s50, %s51
    %p63 = scmp.eq.s32.totalorder %s20, 1
    %p64 = por %p62, %p63
    %p66 = scmp.ne.s32.totalorder %s51, %s65
    %p67 = scmp.eq.s32.totalorder %s20, 0
    %p68 = por %p66, %p67
    %s70 = sadd.s32 %s69, 1
    %p73 = scmp.eq.s32.totalorder %s14, 1
    %p74 = scmp.ne.s32.totalorder %s69, %s71
    %p75 = scmp.eq.s32.totalorder %s14, 0
    %p76 = por %p74, %p75
    %p77 = scmp.ne.s32.totalorder %s69, %s71
    %p78 = scmp.eq.s32.totalorder %s19, 1
    %p79 = por %p77, %p78
    %p80 = scmp.ne.s32.totalorder %s71, %s72
    %p81 = scmp.eq.s32.totalorder %s19, 0
    %p82 = por %p80, %p81
    %p83 = scmp.ne.s32.totalorder %s71, %s72
    %p84 = scmp.eq.s32.totalorder %s20, 1
    %p85 = por %p83, %p84
    %p87 = scmp.ne.s32.totalorder %s72, %s86
    %p88 = scmp.eq.s32.totalorder %s20, 0
    %p89 = por %p87, %p88
    %s91 = sadd.s32 %s90, 1
    %p94 = scmp.eq.s32.totalorder %s14, 1
    %p95 = scmp.ne.s32.totalorder %s90, %s92
    %p96 = scmp.eq.s32.totalorder %s14, 0
    %p97 = por %p95, %p96
    %p98 = scmp.ne.s32.totalorder %s90, %s92
    %p99 = scmp.eq.s32.totalorder %s19, 1
    %p100 = por %p98, %p99
    %p101 = scmp.ne.s32.totalorder %s92, %s93
    %p102 = scmp.eq.s32.totalorder %s19, 0
    %p103 = por %p101, %p102
    %p104 = scmp.ne.s32.totalorder %s92, %s93
    %p105 = scmp.eq.s32.totalorder %s20, 1
    %p106 = por %p104, %p105
    %p108 = scmp.ne.s32.totalorder %s93, %s107
    %p109 = scmp.eq.s32.totalorder %s20, 0
    %p110 = por %p108, %p109
    %s112 = sadd.s32 %s111, 1
    %p115 = scmp.eq.s32.totalorder %s14, 1
    %p116 = scmp.ne.s32.totalorder %s111, %s113
    %p117 = scmp.eq.s32.totalorder %s14, 0
    %p118 = por %p116, %p117
    %p119 = scmp.ne.s32.totalorder %s111, %s113
    %p120 = scmp.eq.s32.totalorder %s19, 1
    %p121 = por %p119, %p120
    %p122 = scmp.ne.s32.totalorder %s113, %s114
    %p123 = scmp.eq.s32.totalorder %s19, 0
    %p124 = por %p122, %p123
    %p125 = scmp.ne.s32.totalorder %s113, %s114
    %p126 = scmp.eq.s32.totalorder %s20, 1
    %p127 = por %p125, %p126
    %p129 = scmp.ne.s32.totalorder %s114, %s128
    %p130 = scmp.eq.s32.totalorder %s20, 0
    %p131 = por %p129, %p130
    %s133 = sadd.s32 %s132, 1
    %p136 = scmp.eq.s32.totalorder %s14, 1
    %p137 = scmp.ne.s32.totalorder %s132, %s134
    %p138 = scmp.eq.s32.totalorder %s14, 0
    %p139 = por %p137, %p138
    %p140 = scmp.ne.s32.totalorder %s132, %s134
    %p141 = scmp.eq.s32.totalorder %s19, 1
    %p142 = por %p140, %p141
    %p143 = scmp.ne.s32.totalorder %s134, %s135
    %p144 = scmp.eq.s32.totalorder %s19, 0
    %p145 = por %p143, %p144
    %p146 = scmp.ne.s32.totalorder %s134, %s135
    %p147 = scmp.eq.s32.totalorder %s20, 1
    %p148 = por %p146, %p147
    %p150 = scmp.ne.s32.totalorder %s135, %s149
    %p151 = scmp.eq.s32.totalorder %s20, 0
    %p152 = por %p150, %p151
    %s154 = sadd.s32 %s153, 1
    %p157 = scmp.eq.s32.totalorder %s14, 1
    %p158 = scmp.ne.s32.totalorder %s153, %s155
    %p159 = scmp.eq.s32.totalorder %s14, 0
    %p160 = por %p158, %p159
    %p161 = scmp.ne.s32.totalorder %s153, %s155
    %p162 = scmp.eq.s32.totalorder %s19, 1
    %p163 = por %p161, %p162
    %p164 = scmp.ne.s32.totalorder %s155, %s156
    %p165 = scmp.eq.s32.totalorder %s19, 0
    %p166 = por %p164, %p165
    %p167 = scmp.ne.s32.totalorder %s155, %s156
    %p168 = scmp.eq.s32.totalorder %s20, 1
    %p169 = por %p167, %p168
    %p171 = scmp.ne.s32.totalorder %s156, %s170
    %p172 = scmp.eq.s32.totalorder %s20, 0
    %p173 = por %p171, %p172
    %s175 = sadd.s32 %s174, 1
    %p178 = scmp.eq.s32.totalorder %s14, 1
    %p179 = scmp.ne.s32.totalorder %s174, %s176
    %p180 = scmp.eq.s32.totalorder %s14, 0
    %p181 = por %p179, %p180
    %p182 = scmp.ne.s32.totalorder %s174, %s176
    %p183 = scmp.eq.s32.totalorder %s19, 1
    %p184 = por %p182, %p183
    %p185 = scmp.ne.s32.totalorder %s176, %s177
    %p186 = scmp.eq.s32.totalorder %s19, 0
    %p187 = por %p185, %p186
    %p188 = scmp.ne.s32.totalorder %s176, %s177
    %p189 = scmp.eq.s32.totalorder %s20, 1
    %p190 = por %p188, %p189
    %p192 = scmp.ne.s32.totalorder %s177, %s191
    %p193 = scmp.eq.s32.totalorder %s20, 0
    %p194 = por %p192, %p193
    %s195 = ssub.s32 %s14, %s21
    %p196 = scmp.eq.s32.totalorder %s195, 0
    %s198 = sadd.s32 %s197, 1
    %s199 = scalar_select %p196, %s197, %s198
    %p202 = pneg %p196
    %p203 = scmp.eq.s32.totalorder %s14, 1
    %p204 = por %p202, %p203
    %p205 = scmp.ne.s32.totalorder %s197, %s200
    %p206 = scmp.eq.s32.totalorder %s14, 0
    %p207 = por %p205, %p206
    %p208 = scmp.ne.s32.totalorder %s197, %s200
    %p209 = scmp.eq.s32.totalorder %s19, 1
    %p210 = por %p208, %p209
    %p211 = scmp.ne.s32.totalorder %s200, %s201
    %p212 = scmp.eq.s32.totalorder %s19, 0
    %p213 = por %p211, %p212
    %p214 = scmp.ne.s32.totalorder %s200, %s201
    %p215 = scmp.eq.s32.totalorder %s20, 1
    %p216 = por %p214, %p215
    %p218 = scmp.ne.s32.totalorder %s201, %s217
    %p219 = scmp.eq.s32.totalorder %s20, 0
    %p220 = por %p218, %p219
    %p221 = scmp.le.s32.totalorder 1, %s14
    %p222 = scmp.lt.s32.totalorder %s14, 3
    %p223 = pnand %p221, %p222
    %p224 = pneg %p223
    // Predicated region
    $region9: #{residual_block_pallas.1} parent=5 // pred_check
      _
    $region10: #{residual_block_pallas.1} parent=5 // pred_check_branch
      %226 = sbr.rel (%p223) target = $region12
    $region11: #{residual_block_pallas.1} parent=5 // pred_region
      %s227 = ssub.s32 %s14, 1
      // Predicated region
      $region13: #{residual_block_pallas.1} parent=11 // pred_check
        %p228 = pneg %p61
      $region14: #{residual_block_pallas.1} parent=11 // pred_check_branch
        %230 = sbr.rel (%p228) target = $region16
      $region15: #{residual_block_pallas.1} parent=11 // pred_region
        _
      $region16: #{residual_block_pallas.1} parent=11 // pred_fallthru
        _
      // Predicated region
      $region17: #{residual_block_pallas.1} parent=11 // pred_check
        %p231 = pneg %p82
      $region18: #{residual_block_pallas.1} parent=11 // pred_check_branch
        %233 = sbr.rel (%p231) target = $region20
      $region19: #{residual_block_pallas.1} parent=11 // pred_region
        _
      $region20: #{residual_block_pallas.1} parent=11 // pred_fallthru
        _
      // Predicated region
      $region21: #{residual_block_pallas.1} parent=11 // pred_check
        %p234 = pneg %p103
      $region22: #{residual_block_pallas.1} parent=11 // pred_check_branch
        %236 = sbr.rel (%p234) target = $region24
      $region23: #{residual_block_pallas.1} parent=11 // pred_region
        _
      $region24: #{residual_block_pallas.1} parent=11 // pred_fallthru
        _
      // Predicated region
      $region25: #{residual_block_pallas.1} parent=11 // pred_check
        %p237 = pneg %p124
      $region26: #{residual_block_pallas.1} parent=11 // pred_check_branch
        %239 = sbr.rel (%p237) target = $region28
      $region27: #{residual_block_pallas.1} parent=11 // pred_region
        _
      $region28: #{residual_block_pallas.1} parent=11 // pred_fallthru
        _
      // Predicated region
      $region29: #{residual_block_pallas.1} parent=11 // pred_check
        %p240 = pneg %p145
      $region30: #{residual_block_pallas.1} parent=11 // pred_check_branch
        %242 = sbr.rel (%p240) target = $region32
      $region31: #{residual_block_pallas.1} parent=11 // pred_region
        _
      $region32: #{residual_block_pallas.1} parent=11 // pred_fallthru
        _
      // Predicated region
      $region33: #{residual_block_pallas.1} parent=11 // pred_check
        %p243 = pneg %p166
      $region34: #{residual_block_pallas.1} parent=11 // pred_check_branch
        %245 = sbr.rel (%p243) target = $region36
      $region35: #{residual_block_pallas.1} parent=11 // pred_region
        _
      $region36: #{residual_block_pallas.1} parent=11 // pred_fallthru
        _
      // Predicated region
      $region37: #{residual_block_pallas.1} parent=11 // pred_check
        %p246 = pneg %p187
      $region38: #{residual_block_pallas.1} parent=11 // pred_check_branch
        %248 = sbr.rel (%p246) target = $region40
      $region39: #{residual_block_pallas.1} parent=11 // pred_region
        _
      $region40: #{residual_block_pallas.1} parent=11 // pred_fallthru
        _
    $region12: #{residual_block_pallas.1} parent=5 // pred_fallthru
      _
    %p249 = scmp.lt.s32.totalorder %s14, 2
    // Predicated region
    $region41: #{residual_block_pallas.1} parent=5 // pred_check
      %p250 = pneg %p249
    $region42: #{residual_block_pallas.1} parent=5 // pred_check_branch
      %252 = sbr.rel (%p250) target = $region44
    $region43: #{residual_block_pallas.1} parent=5 // pred_region
      // Predicated region
      $region45: #{residual_block_pallas.1} parent=43 // pred_check
        %p253 = pneg %p34
      $region46: #{residual_block_pallas.1} parent=43 // pred_check_branch
        %255 = sbr.rel (%p253) target = $region48
      $region47: #{residual_block_pallas.1} parent=43 // pred_region
        %p256 = scmp.lt.s32.totalorder %s14, 1
        %s257 = scalar_select %p256, %s14, 1
        %s258 = smul.addr %s257, 54
        %s259 = smul.addr %s258, 8
        %s260 = scalar_lea.vmem %s0, %s259
      $region48: #{residual_block_pallas.1} parent=43 // pred_fallthru
        _
    $region44: #{residual_block_pallas.1} parent=5 // pred_fallthru
      _
    %p261 = scmp.le.s32.totalorder 1, %s14
    %p262 = scmp.lt.s32.totalorder %s14, 3
    %p263 = pnand %p261, %p262
    %p264 = pneg %p263
    // Predicated region
    $region49: #{residual_block_pallas.1} parent=5 // pred_check
      _
    $region50: #{residual_block_pallas.1} parent=5 // pred_check_branch
      %266 = sbr.rel (%p263) target = $region52
    $region51: #{residual_block_pallas.1} parent=5 // pred_region
      %s267 = ssub.s32 %s14, 1
      %p268 = scmp.lt.s32.totalorder %s19, 1
      %s269 = scalar_select %p268, %s19, 1
      %s270 = smul.addr %s269, 54
      %s271 = smul.addr %s270, 8
      %s272 = scalar_lea.vmem %s0, %s271
      %p273 = pneg %p40
      %p274 = pneg %p37
      %p275 = pneg %p61
      %p276 = pneg %p58
      %p277 = pneg %p82
      %p278 = pneg %p79
      %p279 = pneg %p103
      %p280 = pneg %p100
      %p281 = pneg %p124
      %p282 = pneg %p121
      %p283 = pneg %p145
      %p284 = pneg %p142
      %p285 = pneg %p166
      %p286 = pneg %p163
      %p287 = pneg %p187
      %p288 = pneg %p184
      %p289 = pneg %p213
      %p290 = pneg %p210
      %p291 = scmp.lt.s32.totalorder %s19, 1
      %s292 = scalar_select %p291, %s19, 1
      %s293 = smul.addr %s292, 32
      %s294 = smul.addr %s293, 8
      %s295 = scalar_lea.vmem %s8, %s294
      %p296 = scmp.lt.s32.totalorder %s19, 1
      %s297 = scalar_select %p296, %s19, 1
      %s298 = smul.addr %s297, 54
      %s299 = smul.addr %s298, 8
      %s300 = scalar_lea.vmem %s0, %s299
      %p301 = scmp.lt.s32.totalorder %s19, 1
      %s302 = scalar_select %p301, %s19, 1
      %s303 = smul.addr %s302, 32
      %s304 = smul.addr %s303, 8
      %s305 = scalar_lea.vmem %s8, %s304
      %v306 = vld [vmem:[%s300] sm:$0xff]
      %v307 = vld [vmem:[%s300 + $0x8] sm:$0xff]
      %v308 = vld [vmem:[%s300 + $0x10] sm:$0x3]
      %v309 = vld [vmem:[%s300 + $0x18] sm:$0xff]
      %v310 = vld [vmem:[%s300 + $0x20] sm:$0xff]
      %v311 = vld [vmem:[%s300 + $0x28] sm:$0x3]
      %v312 = vld [vmem:[%s300 + $0x30] sm:$0xff]
      %v313 = vld [vmem:[%s300 + $0x38] sm:$0xff]
      %v314 = vld [vmem:[%s300 + $0x40] sm:$0x3]
      %v315 = vld [vmem:[%s300 + $0x48] sm:$0xff]
      %v316 = vld [vmem:[%s300 + $0x50] sm:$0xff]
      %v317 = vld [vmem:[%s300 + $0x58] sm:$0x3]
      %v318 = vld [vmem:[%s300 + $0x60] sm:$0xff]
      %v319 = vld [vmem:[%s300 + $0x68] sm:$0xff]
      %v320 = vld [vmem:[%s300 + $0x70] sm:$0x3]
      %v321 = vld [vmem:[%s300 + $0x78] sm:$0xff]
      %v322 = vld [vmem:[%s300 + $0x80] sm:$0xff]
      %v323 = vld [vmem:[%s300 + $0x88] sm:$0x3]
      %v324 = vld [vmem:[%s300 + $0x90] sm:$0xff]
      %v325 = vld [vmem:[%s300 + $0x98] sm:$0xff]
      %v326 = vld [vmem:[%s300 + $0xa0] sm:$0x3]
      %v327 = vld [vmem:[%s300 + $0xa8] sm:$0xff]
      %v328 = vld [vmem:[%s300 + $0xb0] sm:$0xff]
      %v329 = vld [vmem:[%s300 + $0xb8] sm:$0x3]
      %v330 = vld [vmem:[%s300 + $0xc0] sm:$0xff]
      %v331 = vld [vmem:[%s300 + $0xc8] sm:$0xff]
      %v332 = vld [vmem:[%s300 + $0xd0] sm:$0x3]
      %v333 = vld [vmem:[%s300 + $0xd8] sm:$0xff]
      %v334 = vld [vmem:[%s300 + $0xe0] sm:$0xff]
      %v335 = vld [vmem:[%s300 + $0xe8] sm:$0x3]
      %v336 = vld [vmem:[%s300 + $0xf0] sm:$0xff]
      %v337 = vld [vmem:[%s300 + $0xf8] sm:$0xff]
      %v338 = vld [vmem:[%s300 + $0x100] sm:$0x3]
      %v339 = vld [vmem:[%s300 + $0x108] sm:$0xff]
      %v340 = vld [vmem:[%s300 + $0x110] sm:$0xff]
      %v341 = vld [vmem:[%s300 + $0x118] sm:$0x3]
      %v342 = vld [vmem:[%s300 + $0x120] sm:$0xff]
      %v343 = vld [vmem:[%s300 + $0x128] sm:$0xff]
      %v344 = vld [vmem:[%s300 + $0x130] sm:$0x3]
      %v345 = vld [vmem:[%s300 + $0x138] sm:$0xff]
      %v346 = vld [vmem:[%s300 + $0x140] sm:$0xff]
      %v347 = vld [vmem:[%s300 + $0x148] sm:$0x3]
      %v348 = vld [vmem:[%s300 + $0x150] sm:$0xff]
      %v349 = vld [vmem:[%s300 + $0x158] sm:$0xff]
      %v350 = vld [vmem:[%s300 + $0x160] sm:$0x3]
      %v351 = vld [vmem:[%s300 + $0x168] sm:$0xff]
      %v352 = vld [vmem:[%s300 + $0x170] sm:$0xff]
      %v353 = vld [vmem:[%s300 + $0x178] sm:$0x3]
      %v354 = vld [vmem:[%s300 + $0x180] sm:$0xff]
      %v355 = vld [vmem:[%s300 + $0x188] sm:$0xff]
      %v356 = vld [vmem:[%s300 + $0x190] sm:$0x3]
      %v357 = vld [vmem:[%s300 + $0x198] sm:$0xff]
      %v358 = vld [vmem:[%s300 + $0x1a0] sm:$0xff]
      %v359 = vld [vmem:[%s300 + $0x1a8] sm:$0x3]
      %v360 = vld [vmem:[%s1] sm:$0x1]
      %v362 = vlaneseq
      %v363 = vshrl.u32 %v362, 7
      %v364 = vsub.s32 0, %v363
      %v365 = vrot.slane %v360, %v364
      %v367 = vmul.f32 %v306, %v365
      %v368 = vmul.f32 %v307, %v365
      %v369 = vmul.f32 %v308, %v365
      %v370 = vmul.f32 %v309, %v365
      %v371 = vmul.f32 %v310, %v365
      %v372 = vmul.f32 %v311, %v365
      %v373 = vmul.f32 %v312, %v365
      %v374 = vmul.f32 %v313, %v365
      %v375 = vmul.f32 %v314, %v365
      %v376 = vmul.f32 %v315, %v365
      %v377 = vmul.f32 %v316, %v365
      %v378 = vmul.f32 %v317, %v365
      %v379 = vmul.f32 %v318, %v365
      %v380 = vmul.f32 %v319, %v365
      %v381 = vmul.f32 %v320, %v365
      %v382 = vmul.f32 %v321, %v365
      %v383 = vmul.f32 %v322, %v365
      %v384 = vmul.f32 %v323, %v365
      %v385 = vmul.f32 %v324, %v365
      %v386 = vmul.f32 %v325, %v365
      %v387 = vmul.f32 %v326, %v365
      %v388 = vmul.f32 %v327, %v365
      %v389 = vmul.f32 %v328, %v365
      %v390 = vmul.f32 %v329, %v365
      %v391 = vmul.f32 %v330, %v365
      %v392 = vmul.f32 %v331, %v365
      %v393 = vmul.f32 %v332, %v365
      %v394 = vmul.f32 %v333, %v365
      %v395 = vmul.f32 %v334, %v365
      %v396 = vmul.f32 %v335, %v365
      %v397 = vmul.f32 %v336, %v365
      %v398 = vmul.f32 %v337, %v365
      %v399 = vmul.f32 %v338, %v365
      %v400 = vmul.f32 %v339, %v365
      %v401 = vmul.f32 %v340, %v365
      %v402 = vmul.f32 %v341, %v365
      %v403 = vmul.f32 %v342, %v365
      %v404 = vmul.f32 %v343, %v365
      %v405 = vmul.f32 %v344, %v365
      %v406 = vmul.f32 %v345, %v365
      %v407 = vmul.f32 %v346, %v365
      %v408 = vmul.f32 %v347, %v365
      %v409 = vmul.f32 %v348, %v365
      %v410 = vmul.f32 %v349, %v365
      %v411 = vmul.f32 %v350, %v365
      %v412 = vmul.f32 %v351, %v365
      %v413 = vmul.f32 %v352, %v365
      %v414 = vmul.f32 %v353, %v365
      %v415 = vmul.f32 %v354, %v365
      %v416 = vmul.f32 %v355, %v365
      %v417 = vmul.f32 %v356, %v365
      %v418 = vmul.f32 %v357, %v365
      %v419 = vmul.f32 %v358, %v365
      %v420 = vmul.f32 %v359, %v365
      %v421 = vld [vmem:[%s2] sm:$0x1]
      %v423 = vlaneseq
      %v424 = vshrl.u32 %v423, 7
      %v425 = vsub.s32 0, %v424
      %v426 = vrot.slane %v421, %v425
      %v428 = vadd.f32 %v367, %v426
      %v429 = vadd.f32 %v368, %v426
      %v430 = vadd.f32 %v369, %v426
      %v431 = vadd.f32 %v370, %v426
      %v432 = vadd.f32 %v371, %v426
      %v433 = vadd.f32 %v372, %v426
      %v434 = vadd.f32 %v373, %v426
      %v435 = vadd.f32 %v374, %v426
      %v436 = vadd.f32 %v375, %v426
      %v437 = vadd.f32 %v376, %v426
      %v438 = vadd.f32 %v377, %v426
      %v439 = vadd.f32 %v378, %v426
      %v440 = vadd.f32 %v379, %v426
      %v441 = vadd.f32 %v380, %v426
      %v442 = vadd.f32 %v381, %v426
      %v443 = vadd.f32 %v382, %v426
      %v444 = vadd.f32 %v383, %v426
      %v445 = vadd.f32 %v384, %v426
      %v446 = vadd.f32 %v385, %v426
      %v447 = vadd.f32 %v386, %v426
      %v448 = vadd.f32 %v387, %v426
      %v449 = vadd.f32 %v388, %v426
      %v450 = vadd.f32 %v389, %v426
      %v451 = vadd.f32 %v390, %v426
      %v452 = vadd.f32 %v391, %v426
      %v453 = vadd.f32 %v392, %v426
      %v454 = vadd.f32 %v393, %v426
      %v455 = vadd.f32 %v394, %v426
      %v456 = vadd.f32 %v395, %v426
      %v457 = vadd.f32 %v396, %v426
      %v458 = vadd.f32 %v397, %v426
      %v459 = vadd.f32 %v398, %v426
      %v460 = vadd.f32 %v399, %v426
      %v461 = vadd.f32 %v400, %v426
      %v462 = vadd.f32 %v401, %v426
      %v463 = vadd.f32 %v402, %v426
      %v464 = vadd.f32 %v403, %v426
      %v465 = vadd.f32 %v404, %v426
      %v466 = vadd.f32 %v405, %v426
      %v467 = vadd.f32 %v406, %v426
      %v468 = vadd.f32 %v407, %v426
      %v469 = vadd.f32 %v408, %v426
      %v470 = vadd.f32 %v409, %v426
      %v471 = vadd.f32 %v410, %v426
      %v472 = vadd.f32 %v411, %v426
      %v473 = vadd.f32 %v412, %v426
      %v474 = vadd.f32 %v413, %v426
      %v475 = vadd.f32 %v414, %v426
      %v476 = vadd.f32 %v415, %v426
      %v477 = vadd.f32 %v416, %v426
      %v478 = vadd.f32 %v417, %v426
      %v479 = vadd.f32 %v418, %v426
      %v480 = vadd.f32 %v419, %v426
      %v481 = vadd.f32 %v420, %v426
      %v482 = vmax.f32 %v428, 0.0
      %v483 = vmax.f32 %v429, 0.0
      %v484 = vmax.f32 %v430, 0.0
      %v485 = vmax.f32 %v431, 0.0
      %v486 = vmax.f32 %v432, 0.0
      %v487 = vmax.f32 %v433, 0.0
      %v488 = vmax.f32 %v434, 0.0
      %v489 = vmax.f32 %v435, 0.0
      %v490 = vmax.f32 %v436, 0.0
      %v491 = vmax.f32 %v437, 0.0
      %v492 = vmax.f32 %v438, 0.0
      %v493 = vmax.f32 %v439, 0.0
      %v494 = vmax.f32 %v440, 0.0
      %v495 = vmax.f32 %v441, 0.0
      %v496 = vmax.f32 %v442, 0.0
      %v497 = vmax.f32 %v443, 0.0
      %v498 = vmax.f32 %v444, 0.0
      %v499 = vmax.f32 %v445, 0.0
      %v500 = vmax.f32 %v446, 0.0
      %v501 = vmax.f32 %v447, 0.0
      %v502 = vmax.f32 %v448, 0.0
      %v503 = vmax.f32 %v449, 0.0
      %v504 = vmax.f32 %v450, 0.0
      %v505 = vmax.f32 %v451, 0.0
      %v506 = vmax.f32 %v452, 0.0
      %v507 = vmax.f32 %v453, 0.0
      %v508 = vmax.f32 %v454, 0.0
      %v509 = vmax.f32 %v455, 0.0
      %v510 = vmax.f32 %v456, 0.0
      %v511 = vmax.f32 %v457, 0.0
      %v512 = vmax.f32 %v458, 0.0
      %v513 = vmax.f32 %v459, 0.0
      %v514 = vmax.f32 %v460, 0.0
      %v515 = vmax.f32 %v461, 0.0
      %v516 = vmax.f32 %v462, 0.0
      %v517 = vmax.f32 %v463, 0.0
      %v518 = vmax.f32 %v464, 0.0
      %v519 = vmax.f32 %v465, 0.0
      %v520 = vmax.f32 %v466, 0.0
      %v521 = vmax.f32 %v467, 0.0
      %v522 = vmax.f32 %v468, 0.0
      %v523 = vmax.f32 %v469, 0.0
      %v524 = vmax.f32 %v470, 0.0
      %v525 = vmax.f32 %v471, 0.0
      %v526 = vmax.f32 %v472, 0.0
      %v527 = vmax.f32 %v473, 0.0
      %v528 = vmax.f32 %v474, 0.0
      %v529 = vmax.f32 %v475, 0.0
      %v530 = vmax.f32 %v476, 0.0
      %v531 = vmax.f32 %v477, 0.0
      %v532 = vmax.f32 %v478, 0.0
      %v533 = vmax.f32 %v479, 0.0
      %v534 = vmax.f32 %v480, 0.0
      %v535 = vmax.f32 %v481, 0.0
      %vm584 = vcmask 1046528
      %v585 = vrot.slane %v482, 1
      %v586 = vrot.slane %v483, 1
      %v587 = vsel %vm584, %v585, %v586
      %v588 = vrot.slane %v484, 1
      %v589 = vsel %vm584, %v586, %v588
      %v590 = vrot.slane %v485, 1
      %v591 = vrot.slane %v486, 1
      %v592 = vsel %vm584, %v590, %v591
      %v593 = vrot.slane %v487, 1
      %v594 = vsel %vm584, %v591, %v593
      %v595 = vrot.slane %v488, 1
      %v596 = vrot.slane %v489, 1
      %v597 = vsel %vm584, %v595, %v596
      %v598 = vrot.slane %v490, 1
      %v599 = vsel %vm584, %v596, %v598
      %v600 = vrot.slane %v491, 1
      %v601 = vrot.slane %v492, 1
      %v602 = vsel %vm584, %v600, %v601
      %v603 = vrot.slane %v493, 1
      %v604 = vsel %vm584, %v601, %v603
      %v605 = vrot.slane %v494, 1
      %v606 = vrot.slane %v495, 1
      %v607 = vsel %vm584, %v605, %v606
      %v608 = vrot.slane %v496, 1
      %v609 = vsel %vm584, %v606, %v608
      %v610 = vrot.slane %v497, 1
      %v611 = vrot.slane %v498, 1
      %v612 = vsel %vm584, %v610, %v611
      %v613 = vrot.slane %v499, 1
      %v614 = vsel %vm584, %v611, %v613
      %v615 = vrot.slane %v500, 1
      %v616 = vrot.slane %v501, 1
      %v617 = vsel %vm584, %v615, %v616
      %v618 = vrot.slane %v502, 1
      %v619 = vsel %vm584, %v616, %v618
      %v620 = vrot.slane %v503, 1
      %v621 = vrot.slane %v504, 1
      %v622 = vsel %vm584, %v620, %v621
      %v623 = vrot.slane %v505, 1
      %v624 = vsel %vm584, %v621, %v623
      %v625 = vrot.slane %v506, 1
      %v626 = vrot.slane %v507, 1
      %v627 = vsel %vm584, %v625, %v626
      %v628 = vrot.slane %v508, 1
      %v629 = vsel %vm584, %v626, %v628
      %v630 = vrot.slane %v509, 1
      %v631 = vrot.slane %v510, 1
      %v632 = vsel %vm584, %v630, %v631
      %v633 = vrot.slane %v511, 1
      %v634 = vsel %vm584, %v631, %v633
      %v635 = vrot.slane %v512, 1
      %v636 = vrot.slane %v513, 1
      %v637 = vsel %vm584, %v635, %v636
      %v638 = vrot.slane %v514, 1
      %v639 = vsel %vm584, %v636, %v638
      %v640 = vrot.slane %v515, 1
      %v641 = vrot.slane %v516, 1
      %v642 = vsel %vm584, %v640, %v641
      %v643 = vrot.slane %v517, 1
      %v644 = vsel %vm584, %v641, %v643
      %v645 = vrot.slane %v518, 1
      %v646 = vrot.slane %v519, 1
      %v647 = vsel %vm584, %v645, %v646
      %v648 = vrot.slane %v520, 1
      %v649 = vsel %vm584, %v646, %v648
      %v650 = vrot.slane %v521, 1
      %v651 = vrot.slane %v522, 1
      %v652 = vsel %vm584, %v650, %v651
      %v653 = vrot.slane %v523, 1
      %v654 = vsel %vm584, %v651, %v653
      %v655 = vrot.slane %v524, 1
      %v656 = vrot.slane %v525, 1
      %v657 = vsel %vm584, %v655, %v656
      %v658 = vrot.slane %v526, 1
      %v659 = vsel %vm584, %v656, %v658
      %v660 = vrot.slane %v527, 1
      %v661 = vrot.slane %v528, 1
      %v662 = vsel %vm584, %v660, %v661
      %v663 = vrot.slane %v529, 1
      %v664 = vsel %vm584, %v661, %v663
      %665 = vrot.lane.b32.xlu0 %v587, 4
      %v666 = vpop.permute.xlu0 %665
      %667 = vrot.lane.b32.xlu0 %v589, 4
      %v668 = vpop.permute.xlu0 %667
      %669 = vrot.lane.b32.xlu0 %v592, 4
      %v670 = vpop.permute.xlu0 %669
      %671 = vrot.lane.b32.xlu0 %v594, 4
      %v672 = vpop.permute.xlu0 %671
      %673 = vrot.lane.b32.xlu0 %v597, 4
      %v674 = vpop.permute.xlu0 %673
      %675 = vrot.lane.b32.xlu0 %v599, 4
      %v676 = vpop.permute.xlu0 %675
      %677 = vrot.lane.b32.xlu0 %v602, 4
      %v678 = vpop.permute.xlu0 %677
      %679 = vrot.lane.b32.xlu0 %v604, 4
      %v680 = vpop.permute.xlu0 %679
      %681 = vrot.lane.b32.xlu0 %v607, 4
      %v682 = vpop.permute.xlu0 %681
      %683 = vrot.lane.b32.xlu0 %v609, 4
      %v684 = vpop.permute.xlu0 %683
      %685 = vrot.lane.b32.xlu0 %v612, 4
      %v686 = vpop.permute.xlu0 %685
      %687 = vrot.lane.b32.xlu0 %v614, 4
      %v688 = vpop.permute.xlu0 %687
      %689 = vrot.lane.b32.xlu0 %v617, 4
      %v690 = vpop.permute.xlu0 %689
      %691 = vrot.lane.b32.xlu0 %v619, 4
      %v692 = vpop.permute.xlu0 %691
      %693 = vrot.lane.b32.xlu0 %v622, 4
      %v694 = vpop.permute.xlu0 %693
      %695 = vrot.lane.b32.xlu0 %v624, 4
      %v696 = vpop.permute.xlu0 %695
      %697 = vrot.lane.b32.xlu0 %v627, 4
      %v698 = vpop.permute.xlu0 %697
      %699 = vrot.lane.b32.xlu0 %v629, 4
      %v700 = vpop.permute.xlu0 %699
      %701 = vrot.lane.b32.xlu0 %v632, 4
      %v702 = vpop.permute.xlu0 %701
      %703 = vrot.lane.b32.xlu0 %v634, 4
      %v704 = vpop.permute.xlu0 %703
      %705 = vrot.lane.b32.xlu0 %v637, 4
      %v706 = vpop.permute.xlu0 %705
      %707 = vrot.lane.b32.xlu0 %v639, 4
      %v708 = vpop.permute.xlu0 %707
      %709 = vrot.lane.b32.xlu0 %v642, 4
      %v710 = vpop.permute.xlu0 %709
      %711 = vrot.lane.b32.xlu0 %v644, 4
      %v712 = vpop.permute.xlu0 %711
      %713 = vrot.lane.b32.xlu0 %v647, 4
      %v714 = vpop.permute.xlu0 %713
      %715 = vrot.lane.b32.xlu0 %v649, 4
      %v716 = vpop.permute.xlu0 %715
      %717 = vrot.lane.b32.xlu0 %v652, 4
      %v718 = vpop.permute.xlu0 %717
      %719 = vrot.lane.b32.xlu0 %v654, 4
      %v720 = vpop.permute.xlu0 %719
      %721 = vrot.lane.b32.xlu0 %v657, 4
      %v722 = vpop.permute.xlu0 %721
      %723 = vrot.lane.b32.xlu0 %v659, 4
      %v724 = vpop.permute.xlu0 %723
      %725 = vrot.lane.b32.xlu0 %v662, 4
      %v726 = vpop.permute.xlu0 %725
      %727 = vrot.lane.b32.xlu0 %v664, 4
      %v728 = vpop.permute.xlu0 %727
      %vm761 = vcmask 1045504
      %v762 = vrot.slane %v482, 2
      %v763 = vrot.slane %v483, 2
      %v764 = vsel %vm761, %v762, %v763
      %v765 = vrot.slane %v484, 2
      %v766 = vsel %vm761, %v763, %v765
      %v767 = vrot.slane %v485, 2
      %v768 = vrot.slane %v486, 2
      %v769 = vsel %vm761, %v767, %v768
      %v770 = vrot.slane %v487, 2
      %v771 = vsel %vm761, %v768, %v770
      %v772 = vrot.slane %v488, 2
      %v773 = vrot.slane %v489, 2
      %v774 = vsel %vm761, %v772, %v773
      %v775 = vrot.slane %v490, 2
      %v776 = vsel %vm761, %v773, %v775
      %v777 = vrot.slane %v491, 2
      %v778 = vrot.slane %v492, 2
      %v779 = vsel %vm761, %v777, %v778
      %v780 = vrot.slane %v493, 2
      %v781 = vsel %vm761, %v778, %v780
      %v782 = vrot.slane %v494, 2
      %v783 = vrot.slane %v495, 2
      %v784 = vsel %vm761, %v782, %v783
      %v785 = vrot.slane %v496, 2
      %v786 = vsel %vm761, %v783, %v785
      %v787 = vrot.slane %v497, 2
      %v788 = vrot.slane %v498, 2
      %v789 = vsel %vm761, %v787, %v788
      %v790 = vrot.slane %v499, 2
      %v791 = vsel %vm761, %v788, %v790
      %v792 = vrot.slane %v500, 2
      %v793 = vrot.slane %v501, 2
      %v794 = vsel %vm761, %v792, %v793
      %v795 = vrot.slane %v502, 2
      %v796 = vsel %vm761, %v793, %v795
      %v797 = vrot.slane %v503, 2
      %v798 = vrot.slane %v504, 2
      %v799 = vsel %vm761, %v797, %v798
      %v800 = vrot.slane %v505, 2
      %v801 = vsel %vm761, %v798, %v800
      %v802 = vrot.slane %v506, 2
      %v803 = vrot.slane %v507, 2
      %v804 = vsel %vm761, %v802, %v803
      %v805 = vrot.slane %v508, 2
      %v806 = vsel %vm761, %v803, %v805
      %v807 = vrot.slane %v509, 2
      %v808 = vrot.slane %v510, 2
      %v809 = vsel %vm761, %v807, %v808
      %v810 = vrot.slane %v511, 2
      %v811 = vsel %vm761, %v808, %v810
      %v812 = vrot.slane %v512, 2
      %v813 = vrot.slane %v513, 2
      %v814 = vsel %vm761, %v812, %v813
      %v815 = vrot.slane %v514, 2
      %v816 = vsel %vm761, %v813, %v815
      %v817 = vrot.slane %v515, 2
      %v818 = vrot.slane %v516, 2
      %v819 = vsel %vm761, %v817, %v818
      %v820 = vrot.slane %v517, 2
      %v821 = vsel %vm761, %v818, %v820
      %v822 = vrot.slane %v518, 2
      %v823 = vrot.slane %v519, 2
      %v824 = vsel %vm761, %v822, %v823
      %v825 = vrot.slane %v520, 2
      %v826 = vsel %vm761, %v823, %v825
      %v827 = vrot.slane %v521, 2
      %v828 = vrot.slane %v522, 2
      %v829 = vsel %vm761, %v827, %v828
      %v830 = vrot.slane %v523, 2
      %v831 = vsel %vm761, %v828, %v830
      %v832 = vrot.slane %v524, 2
      %v833 = vrot.slane %v525, 2
      %v834 = vsel %vm761, %v832, %v833
      %v835 = vrot.slane %v526, 2
      %v836 = vsel %vm761, %v833, %v835
      %v837 = vrot.slane %v527, 2
      %v838 = vrot.slane %v528, 2
      %v839 = vsel %vm761, %v837, %v838
      %v840 = vrot.slane %v529, 2
      %v841 = vsel %vm761, %v838, %v840
      %842 = vrot.lane.b32.xlu0 %v764, 8
      %v843 = vpop.permute.xlu0 %842
      %844 = vrot.lane.b32.xlu0 %v766, 8
      %v845 = vpop.permute.xlu0 %844
      %846 = vrot.lane.b32.xlu0 %v769, 8
      %v847 = vpop.permute.xlu0 %846
      %848 = vrot.lane.b32.xlu0 %v771, 8
      %v849 = vpop.permute.xlu0 %848
      %850 = vrot.lane.b32.xlu0 %v774, 8
      %v851 = vpop.permute.xlu0 %850
      %852 = vrot.lane.b32.xlu0 %v776, 8
      %v853 = vpop.permute.xlu0 %852
      %854 = vrot.lane.b32.xlu0 %v779, 8
      %v855 = vpop.permute.xlu0 %854
      %856 = vrot.lane.b32.xlu0 %v781, 8
      %v857 = vpop.permute.xlu0 %856
      %858 = vrot.lane.b32.xlu0 %v784, 8
      %v859 = vpop.permute.xlu0 %858
      %860 = vrot.lane.b32.xlu0 %v786, 8
      %v861 = vpop.permute.xlu0 %860
      %862 = vrot.lane.b32.xlu0 %v789, 8
      %v863 = vpop.permute.xlu0 %862
      %864 = vrot.lane.b32.xlu0 %v791, 8
      %v865 = vpop.permute.xlu0 %864
      %866 = vrot.lane.b32.xlu0 %v794, 8
      %v867 = vpop.permute.xlu0 %866
      %868 = vrot.lane.b32.xlu0 %v796, 8
      %v869 = vpop.permute.xlu0 %868
      %870 = vrot.lane.b32.xlu0 %v799, 8
      %v871 = vpop.permute.xlu0 %870
      %872 = vrot.lane.b32.xlu0 %v801, 8
      %v873 = vpop.permute.xlu0 %872
      %874 = vrot.lane.b32.xlu0 %v804, 8
      %v875 = vpop.permute.xlu0 %874
      %876 = vrot.lane.b32.xlu0 %v806, 8
      %v877 = vpop.permute.xlu0 %876
      %878 = vrot.lane.b32.xlu0 %v809, 8
      %v879 = vpop.permute.xlu0 %878
      %880 = vrot.lane.b32.xlu0 %v811, 8
      %v881 = vpop.permute.xlu0 %880
      %882 = vrot.lane.b32.xlu0 %v814, 8
      %v883 = vpop.permute.xlu0 %882
      %884 = vrot.lane.b32.xlu0 %v816, 8
      %v885 = vpop.permute.xlu0 %884
      %886 = vrot.lane.b32.xlu0 %v819, 8
      %v887 = vpop.permute.xlu0 %886
      %888 = vrot.lane.b32.xlu0 %v821, 8
      %v889 = vpop.permute.xlu0 %888
      %890 = vrot.lane.b32.xlu0 %v824, 8
      %v891 = vpop.permute.xlu0 %890
      %892 = vrot.lane.b32.xlu0 %v826, 8
      %v893 = vpop.permute.xlu0 %892
      %894 = vrot.lane.b32.xlu0 %v829, 8
      %v895 = vpop.permute.xlu0 %894
      %896 = vrot.lane.b32.xlu0 %v831, 8
      %v897 = vpop.permute.xlu0 %896
      %898 = vrot.lane.b32.xlu0 %v834, 8
      %v899 = vpop.permute.xlu0 %898
      %900 = vrot.lane.b32.xlu0 %v836, 8
      %v901 = vpop.permute.xlu0 %900
      %902 = vrot.lane.b32.xlu0 %v839, 8
      %v903 = vpop.permute.xlu0 %902
      %904 = vrot.lane.b32.xlu0 %v841, 8
      %v905 = vpop.permute.xlu0 %904
      %940 = vrot.lane.b32.xlu0 %v485, 12
      %v941 = vpop.permute.xlu0 %940
      %942 = vrot.lane.b32.xlu0 %v486, 12
      %v943 = vpop.permute.xlu0 %942
      %944 = vrot.lane.b32.xlu0 %v488, 12
      %v945 = vpop.permute.xlu0 %944
      %946 = vrot.lane.b32.xlu0 %v489, 12
      %v947 = vpop.permute.xlu0 %946
      %948 = vrot.lane.b32.xlu0 %v491, 12
      %v949 = vpop.permute.xlu0 %948
      %950 = vrot.lane.b32.xlu0 %v492, 12
      %v951 = vpop.permute.xlu0 %950
      %952 = vrot.lane.b32.xlu0 %v494, 12
      %v953 = vpop.permute.xlu0 %952
      %954 = vrot.lane.b32.xlu0 %v495, 12
      %v955 = vpop.permute.xlu0 %954
      %956 = vrot.lane.b32.xlu0 %v497, 12
      %v957 = vpop.permute.xlu0 %956
      %958 = vrot.lane.b32.xlu0 %v498, 12
      %v959 = vpop.permute.xlu0 %958
      %960 = vrot.lane.b32.xlu0 %v500, 12
      %v961 = vpop.permute.xlu0 %960
      %962 = vrot.lane.b32.xlu0 %v501, 12
      %v963 = vpop.permute.xlu0 %962
      %964 = vrot.lane.b32.xlu0 %v503, 12
      %v965 = vpop.permute.xlu0 %964
      %966 = vrot.lane.b32.xlu0 %v504, 12
      %v967 = vpop.permute.xlu0 %966
      %968 = vrot.lane.b32.xlu0 %v506, 12
      %v969 = vpop.permute.xlu0 %968
      %970 = vrot.lane.b32.xlu0 %v507, 12
      %v971 = vpop.permute.xlu0 %970
      %972 = vrot.lane.b32.xlu0 %v509, 12
      %v973 = vpop.permute.xlu0 %972
      %974 = vrot.lane.b32.xlu0 %v510, 12
      %v975 = vpop.permute.xlu0 %974
      %976 = vrot.lane.b32.xlu0 %v512, 12
      %v977 = vpop.permute.xlu0 %976
      %978 = vrot.lane.b32.xlu0 %v513, 12
      %v979 = vpop.permute.xlu0 %978
      %980 = vrot.lane.b32.xlu0 %v515, 12
      %v981 = vpop.permute.xlu0 %980
      %982 = vrot.lane.b32.xlu0 %v516, 12
      %v983 = vpop.permute.xlu0 %982
      %984 = vrot.lane.b32.xlu0 %v518, 12
      %v985 = vpop.permute.xlu0 %984
      %986 = vrot.lane.b32.xlu0 %v519, 12
      %v987 = vpop.permute.xlu0 %986
      %988 = vrot.lane.b32.xlu0 %v521, 12
      %v989 = vpop.permute.xlu0 %988
      %990 = vrot.lane.b32.xlu0 %v522, 12
      %v991 = vpop.permute.xlu0 %990
      %992 = vrot.lane.b32.xlu0 %v524, 12
      %v993 = vpop.permute.xlu0 %992
      %994 = vrot.lane.b32.xlu0 %v525, 12
      %v995 = vpop.permute.xlu0 %994
      %996 = vrot.lane.b32.xlu0 %v527, 12
      %v997 = vpop.permute.xlu0 %996
      %998 = vrot.lane.b32.xlu0 %v528, 12
      %v999 = vpop.permute.xlu0 %998
      %1000 = vrot.lane.b32.xlu0 %v530, 12
      %v1001 = vpop.permute.xlu0 %1000
      %1002 = vrot.lane.b32.xlu0 %v531, 12
      %v1003 = vpop.permute.xlu0 %1002
      %v1037 = vrot.slane %v530, 1
      %v1038 = vrot.slane %v531, 1
      %v1039 = vsel %vm584, %v1037, %v1038
      %v1040 = vrot.slane %v532, 1
      %v1041 = vsel %vm584, %v1038, %v1040
      %1042 = vrot.lane.b32.xlu0 %v592, 16
      %v1043 = vpop.permute.xlu0 %1042
      %1044 = vrot.lane.b32.xlu0 %v594, 16
      %v1045 = vpop.permute.xlu0 %1044
      %1046 = vrot.lane.b32.xlu0 %v597, 16
      %v1047 = vpop.permute.xlu0 %1046
      %1048 = vrot.lane.b32.xlu0 %v599, 16
      %v1049 = vpop.permute.xlu0 %1048
      %1050 = vrot.lane.b32.xlu0 %v602, 16
      %v1051 = vpop.permute.xlu0 %1050
      %1052 = vrot.lane.b32.xlu0 %v604, 16
      %v1053 = vpop.permute.xlu0 %1052
      %1054 = vrot.lane.b32.xlu0 %v607, 16
      %v1055 = vpop.permute.xlu0 %1054
      %1056 = vrot.lane.b32.xlu0 %v609, 16
      %v1057 = vpop.permute.xlu0 %1056
      %1058 = vrot.lane.b32.xlu0 %v612, 16
      %v1059 = vpop.permute.xlu0 %1058
      %1060 = vrot.lane.b32.xlu0 %v614, 16
      %v1061 = vpop.permute.xlu0 %1060
      %1062 = vrot.lane.b32.xlu0 %v617, 16
      %v1063 = vpop.permute.xlu0 %1062
      %1064 = vrot.lane.b32.xlu0 %v619, 16
      %v1065 = vpop.permute.xlu0 %1064
      %1066 = vrot.lane.b32.xlu0 %v622, 16
      %v1067 = vpop.permute.xlu0 %1066
      %1068 = vrot.lane.b32.xlu0 %v624, 16
      %v1069 = vpop.permute.xlu0 %1068
      %1070 = vrot.lane.b32.xlu0 %v627, 16
      %v1071 = vpop.permute.xlu0 %1070
      %1072 = vrot.lane.b32.xlu0 %v629, 16
      %v1073 = vpop.permute.xlu0 %1072
      %1074 = vrot.lane.b32.xlu0 %v632, 16
      %v1075 = vpop.permute.xlu0 %1074
      %1076 = vrot.lane.b32.xlu0 %v634, 16
      %v1077 = vpop.permute.xlu0 %1076
      %1078 = vrot.lane.b32.xlu0 %v637, 16
      %v1079 = vpop.permute.xlu0 %1078
      %1080 = vrot.lane.b32.xlu0 %v639, 16
      %v1081 = vpop.permute.xlu0 %1080
      %1082 = vrot.lane.b32.xlu0 %v642, 16
      %v1083 = vpop.permute.xlu0 %1082
      %1084 = vrot.lane.b32.xlu0 %v644, 16
      %v1085 = vpop.permute.xlu0 %1084
      %1086 = vrot.lane.b32.xlu0 %v647, 16
      %v1087 = vpop.permute.xlu0 %1086
      %1088 = vrot.lane.b32.xlu0 %v649, 16
      %v1089 = vpop.permute.xlu0 %1088
      %1090 = vrot.lane.b32.xlu0 %v652, 16
      %v1091 = vpop.permute.xlu0 %1090
      %1092 = vrot.lane.b32.xlu0 %v654, 16
      %v1093 = vpop.permute.xlu0 %1092
      %1094 = vrot.lane.b32.xlu0 %v657, 16
      %v1095 = vpop.permute.xlu0 %1094
      %1096 = vrot.lane.b32.xlu0 %v659, 16
      %v1097 = vpop.permute.xlu0 %1096
      %1098 = vrot.lane.b32.xlu0 %v662, 16
      %v1099 = vpop.permute.xlu0 %1098
      %1100 = vrot.lane.b32.xlu0 %v664, 16
      %v1101 = vpop.permute.xlu0 %1100
      %1102 = vrot.lane.b32.xlu0 %v1039, 16
      %v1103 = vpop.permute.xlu0 %1102
      %1104 = vrot.lane.b32.xlu0 %v1041, 16
      %v1105 = vpop.permute.xlu0 %1104
      %v1138 = vrot.slane %v530, 2
      %v1139 = vrot.slane %v531, 2
      %v1140 = vsel %vm761, %v1138, %v1139
      %v1141 = vrot.slane %v532, 2
      %v1142 = vsel %vm761, %v1139, %v1141
      %1143 = vrot.lane.b32.xlu0 %v769, 20
      %v1144 = vpop.permute.xlu0 %1143
      %1145 = vrot.lane.b32.xlu0 %v771, 20
      %v1146 = vpop.permute.xlu0 %1145
      %1147 = vrot.lane.b32.xlu0 %v774, 20
      %v1148 = vpop.permute.xlu0 %1147
      %1149 = vrot.lane.b32.xlu0 %v776, 20
      %v1150 = vpop.permute.xlu0 %1149
      %1151 = vrot.lane.b32.xlu0 %v779, 20
      %v1152 = vpop.permute.xlu0 %1151
      %1153 = vrot.lane.b32.xlu0 %v781, 20
      %v1154 = vpop.permute.xlu0 %1153
      %1155 = vrot.lane.b32.xlu0 %v784, 20
      %v1156 = vpop.permute.xlu0 %1155
      %1157 = vrot.lane.b32.xlu0 %v786, 20
      %v1158 = vpop.permute.xlu0 %1157
      %1159 = vrot.lane.b32.xlu0 %v789, 20
      %v1160 = vpop.permute.xlu0 %1159
      %1161 = vrot.lane.b32.xlu0 %v791, 20
      %v1162 = vpop.permute.xlu0 %1161
      %1163 = vrot.lane.b32.xlu0 %v794, 20
      %v1164 = vpop.permute.xlu0 %1163
      %1165 = vrot.lane.b32.xlu0 %v796, 20
      %v1166 = vpop.permute.xlu0 %1165
      %1167 = vrot.lane.b32.xlu0 %v799, 20
      %v1168 = vpop.permute.xlu0 %1167
      %1169 = vrot.lane.b32.xlu0 %v801, 20
      %v1170 = vpop.permute.xlu0 %1169
      %1171 = vrot.lane.b32.xlu0 %v804, 20
      %v1172 = vpop.permute.xlu0 %1171
      %1173 = vrot.lane.b32.xlu0 %v806, 20
      %v1174 = vpop.permute.xlu0 %1173
      %1175 = vrot.lane.b32.xlu0 %v809, 20
      %v1176 = vpop.permute.xlu0 %1175
      %1177 = vrot.lane.b32.xlu0 %v811, 20
      %v1178 = vpop.permute.xlu0 %1177
      %1179 = vrot.lane.b32.xlu0 %v814, 20
      %v1180 = vpop.permute.xlu0 %1179
      %1181 = vrot.lane.b32.xlu0 %v816, 20
      %v1182 = vpop.permute.xlu0 %1181
      %1183 = vrot.lane.b32.xlu0 %v819, 20
      %v1184 = vpop.permute.xlu0 %1183
      %1185 = vrot.lane.b32.xlu0 %v821, 20
      %v1186 = vpop.permute.xlu0 %1185
      %1187 = vrot.lane.b32.xlu0 %v824, 20
      %v1188 = vpop.permute.xlu0 %1187
      %1189 = vrot.lane.b32.xlu0 %v826, 20
      %v1190 = vpop.permute.xlu0 %1189
      %1191 = vrot.lane.b32.xlu0 %v829, 20
      %v1192 = vpop.permute.xlu0 %1191
      %1193 = vrot.lane.b32.xlu0 %v831, 20
      %v1194 = vpop.permute.xlu0 %1193
      %1195 = vrot.lane.b32.xlu0 %v834, 20
      %v1196 = vpop.permute.xlu0 %1195
      %1197 = vrot.lane.b32.xlu0 %v836, 20
      %v1198 = vpop.permute.xlu0 %1197
      %1199 = vrot.lane.b32.xlu0 %v839, 20
      %v1200 = vpop.permute.xlu0 %1199
      %1201 = vrot.lane.b32.xlu0 %v841, 20
      %v1202 = vpop.permute.xlu0 %1201
      %1203 = vrot.lane.b32.xlu0 %v1140, 20
      %v1204 = vpop.permute.xlu0 %1203
      %1205 = vrot.lane.b32.xlu0 %v1142, 20
      %v1206 = vpop.permute.xlu0 %1205
      %1241 = vrot.lane.b32.xlu0 %v488, 24
      %v1242 = vpop.permute.xlu0 %1241
      %1243 = vrot.lane.b32.xlu0 %v489, 24
      %v1244 = vpop.permute.xlu0 %1243
      %1245 = vrot.lane.b32.xlu0 %v491, 24
      %v1246 = vpop.permute.xlu0 %1245
      %1247 = vrot.lane.b32.xlu0 %v492, 24
      %v1248 = vpop.permute.xlu0 %1247
      %1249 = vrot.lane.b32.xlu0 %v494, 24
      %v1250 = vpop.permute.xlu0 %1249
      %1251 = vrot.lane.b32.xlu0 %v495, 24
      %v1252 = vpop.permute.xlu0 %1251
      %1253 = vrot.lane.b32.xlu0 %v497, 24
      %v1254 = vpop.permute.xlu0 %1253
      %1255 = vrot.lane.b32.xlu0 %v498, 24
      %v1256 = vpop.permute.xlu0 %1255
      %1257 = vrot.lane.b32.xlu0 %v500, 24
      %v1258 = vpop.permute.xlu0 %1257
      %1259 = vrot.lane.b32.xlu0 %v501, 24
      %v1260 = vpop.permute.xlu0 %1259
      %1261 = vrot.lane.b32.xlu0 %v503, 24
      %v1262 = vpop.permute.xlu0 %1261
      %1263 = vrot.lane.b32.xlu0 %v504, 24
      %v1264 = vpop.permute.xlu0 %1263
      %1265 = vrot.lane.b32.xlu0 %v506, 24
      %v1266 = vpop.permute.xlu0 %1265
      %1267 = vrot.lane.b32.xlu0 %v507, 24
      %v1268 = vpop.permute.xlu0 %1267
      %1269 = vrot.lane.b32.xlu0 %v509, 24
      %v1270 = vpop.permute.xlu0 %1269
      %1271 = vrot.lane.b32.xlu0 %v510, 24
      %v1272 = vpop.permute.xlu0 %1271
      %1273 = vrot.lane.b32.xlu0 %v512, 24
      %v1274 = vpop.permute.xlu0 %1273
      %1275 = vrot.lane.b32.xlu0 %v513, 24
      %v1276 = vpop.permute.xlu0 %1275
      %1277 = vrot.lane.b32.xlu0 %v515, 24
      %v1278 = vpop.permute.xlu0 %1277
      %1279 = vrot.lane.b32.xlu0 %v516, 24
      %v1280 = vpop.permute.xlu0 %1279
      %1281 = vrot.lane.b32.xlu0 %v518, 24
      %v1282 = vpop.permute.xlu0 %1281
      %1283 = vrot.lane.b32.xlu0 %v519, 24
      %v1284 = vpop.permute.xlu0 %1283
      %1285 = vrot.lane.b32.xlu0 %v521, 24
      %v1286 = vpop.permute.xlu0 %1285
      %1287 = vrot.lane.b32.xlu0 %v522, 24
      %v1288 = vpop.permute.xlu0 %1287
      %1289 = vrot.lane.b32.xlu0 %v524, 24
      %v1290 = vpop.permute.xlu0 %1289
      %1291 = vrot.lane.b32.xlu0 %v525, 24
      %v1292 = vpop.permute.xlu0 %1291
      %1293 = vrot.lane.b32.xlu0 %v527, 24
      %v1294 = vpop.permute.xlu0 %1293
      %1295 = vrot.lane.b32.xlu0 %v528, 24
      %v1296 = vpop.permute.xlu0 %1295
      %1297 = vrot.lane.b32.xlu0 %v530, 24
      %v1298 = vpop.permute.xlu0 %1297
      %1299 = vrot.lane.b32.xlu0 %v531, 24
      %v1300 = vpop.permute.xlu0 %1299
      %1301 = vrot.lane.b32.xlu0 %v533, 24
      %v1302 = vpop.permute.xlu0 %1301
      %1303 = vrot.lane.b32.xlu0 %v534, 24
      %v1304 = vpop.permute.xlu0 %1303
      %v1338 = vrot.slane %v533, 1
      %v1339 = vrot.slane %v534, 1
      %v1340 = vsel %vm584, %v1338, %v1339
      %v1341 = vrot.slane %v535, 1
      %v1342 = vsel %vm584, %v1339, %v1341
      %1343 = vrot.lane.b32.xlu0 %v597, 28
      %v1344 = vpop.permute.xlu0 %1343
      %1345 = vrot.lane.b32.xlu0 %v599, 28
      %v1346 = vpop.permute.xlu0 %1345
      %1347 = vrot.lane.b32.xlu0 %v602, 28
      %v1348 = vpop.permute.xlu0 %1347
      %1349 = vrot.lane.b32.xlu0 %v604, 28
      %v1350 = vpop.permute.xlu0 %1349
      %1351 = vrot.lane.b32.xlu0 %v607, 28
      %v1352 = vpop.permute.xlu0 %1351
      %1353 = vrot.lane.b32.xlu0 %v609, 28
      %v1354 = vpop.permute.xlu0 %1353
      %1355 = vrot.lane.b32.xlu0 %v612, 28
      %v1356 = vpop.permute.xlu0 %1355
      %1357 = vrot.lane.b32.xlu0 %v614, 28
      %v1358 = vpop.permute.xlu0 %1357
      %1359 = vrot.lane.b32.xlu0 %v617, 28
      %v1360 = vpop.permute.xlu0 %1359
      %1361 = vrot.lane.b32.xlu0 %v619, 28
      %v1362 = vpop.permute.xlu0 %1361
      %1363 = vrot.lane.b32.xlu0 %v622, 28
      %v1364 = vpop.permute.xlu0 %1363
      %1365 = vrot.lane.b32.xlu0 %v624, 28
      %v1366 = vpop.permute.xlu0 %1365
      %1367 = vrot.lane.b32.xlu0 %v627, 28
      %v1368 = vpop.permute.xlu0 %1367
      %1369 = vrot.lane.b32.xlu0 %v629, 28
      %v1370 = vpop.permute.xlu0 %1369
      %1371 = vrot.lane.b32.xlu0 %v632, 28
      %v1372 = vpop.permute.xlu0 %1371
      %1373 = vrot.lane.b32.xlu0 %v634, 28
      %v1374 = vpop.permute.xlu0 %1373
      %1375 = vrot.lane.b32.xlu0 %v637, 28
      %v1376 = vpop.permute.xlu0 %1375
      %1377 = vrot.lane.b32.xlu0 %v639, 28
      %v1378 = vpop.permute.xlu0 %1377
      %1379 = vrot.lane.b32.xlu0 %v642, 28
      %v1380 = vpop.permute.xlu0 %1379
      %1381 = vrot.lane.b32.xlu0 %v644, 28
      %v1382 = vpop.permute.xlu0 %1381
      %1383 = vrot.lane.b32.xlu0 %v647, 28
      %v1384 = vpop.permute.xlu0 %1383
      %1385 = vrot.lane.b32.xlu0 %v649, 28
      %v1386 = vpop.permute.xlu0 %1385
      %1387 = vrot.lane.b32.xlu0 %v652, 28
      %v1388 = vpop.permute.xlu0 %1387
      %1389 = vrot.lane.b32.xlu0 %v654, 28
      %v1390 = vpop.permute.xlu0 %1389
      %1391 = vrot.lane.b32.xlu0 %v657, 28
      %v1392 = vpop.permute.xlu0 %1391
      %1393 = vrot.lane.b32.xlu0 %v659, 28
      %v1394 = vpop.permute.xlu0 %1393
      %1395 = vrot.lane.b32.xlu0 %v662, 28
      %v1396 = vpop.permute.xlu0 %1395
      %1397 = vrot.lane.b32.xlu0 %v664, 28
      %v1398 = vpop.permute.xlu0 %1397
      %1399 = vrot.lane.b32.xlu0 %v1039, 28
      %v1400 = vpop.permute.xlu0 %1399
      %1401 = vrot.lane.b32.xlu0 %v1041, 28
      %v1402 = vpop.permute.xlu0 %1401
      %1403 = vrot.lane.b32.xlu0 %v1340, 28
      %v1404 = vpop.permute.xlu0 %1403
      %1405 = vrot.lane.b32.xlu0 %v1342, 28
      %v1406 = vpop.permute.xlu0 %1405
      %v1439 = vrot.slane %v533, 2
      %v1440 = vrot.slane %v534, 2
      %v1441 = vsel %vm761, %v1439, %v1440
      %v1442 = vrot.slane %v535, 2
      %v1443 = vsel %vm761, %v1440, %v1442
      %1444 = vrot.lane.b32.xlu0 %v774, 32
      %v1445 = vpop.permute.xlu0 %1444
      %1446 = vrot.lane.b32.xlu0 %v776, 32
      %v1447 = vpop.permute.xlu0 %1446
      %1448 = vrot.lane.b32.xlu0 %v779, 32
      %v1449 = vpop.permute.xlu0 %1448
      %1450 = vrot.lane.b32.xlu0 %v781, 32
      %v1451 = vpop.permute.xlu0 %1450
      %1452 = vrot.lane.b32.xlu0 %v784, 32
      %v1453 = vpop.permute.xlu0 %1452
      %1454 = vrot.lane.b32.xlu0 %v786, 32
      %v1455 = vpop.permute.xlu0 %1454
      %1456 = vrot.lane.b32.xlu0 %v789, 32
      %v1457 = vpop.permute.xlu0 %1456
      %1458 = vrot.lane.b32.xlu0 %v791, 32
      %v1459 = vpop.permute.xlu0 %1458
      %1460 = vrot.lane.b32.xlu0 %v794, 32
      %v1461 = vpop.permute.xlu0 %1460
      %1462 = vrot.lane.b32.xlu0 %v796, 32
      %v1463 = vpop.permute.xlu0 %1462
      %1464 = vrot.lane.b32.xlu0 %v799, 32
      %v1465 = vpop.permute.xlu0 %1464
      %1466 = vrot.lane.b32.xlu0 %v801, 32
      %v1467 = vpop.permute.xlu0 %1466
      %1468 = vrot.lane.b32.xlu0 %v804, 32
      %v1469 = vpop.permute.xlu0 %1468
      %1470 = vrot.lane.b32.xlu0 %v806, 32
      %v1471 = vpop.permute.xlu0 %1470
      %1472 = vrot.lane.b32.xlu0 %v809, 32
      %v1473 = vpop.permute.xlu0 %1472
      %1474 = vrot.lane.b32.xlu0 %v811, 32
      %v1475 = vpop.permute.xlu0 %1474
      %1476 = vrot.lane.b32.xlu0 %v814, 32
      %v1477 = vpop.permute.xlu0 %1476
      %1478 = vrot.lane.b32.xlu0 %v816, 32
      %v1479 = vpop.permute.xlu0 %1478
      %1480 = vrot.lane.b32.xlu0 %v819, 32
      %v1481 = vpop.permute.xlu0 %1480
      %1482 = vrot.lane.b32.xlu0 %v821, 32
      %v1483 = vpop.permute.xlu0 %1482
      %1484 = vrot.lane.b32.xlu0 %v824, 32
      %v1485 = vpop.permute.xlu0 %1484
      %1486 = vrot.lane.b32.xlu0 %v826, 32
      %v1487 = vpop.permute.xlu0 %1486
      %1488 = vrot.lane.b32.xlu0 %v829, 32
      %v1489 = vpop.permute.xlu0 %1488
      %1490 = vrot.lane.b32.xlu0 %v831, 32
      %v1491 = vpop.permute.xlu0 %1490
      %1492 = vrot.lane.b32.xlu0 %v834, 32
      %v1493 = vpop.permute.xlu0 %1492
      %1494 = vrot.lane.b32.xlu0 %v836, 32
      %v1495 = vpop.permute.xlu0 %1494
      %1496 = vrot.lane.b32.xlu0 %v839, 32
      %v1497 = vpop.permute.xlu0 %1496
      %1498 = vrot.lane.b32.xlu0 %v841, 32
      %v1499 = vpop.permute.xlu0 %1498
      %1500 = vrot.lane.b32.xlu0 %v1140, 32
      %v1501 = vpop.permute.xlu0 %1500
      %1502 = vrot.lane.b32.xlu0 %v1142, 32
      %v1503 = vpop.permute.xlu0 %1502
      %1504 = vrot.lane.b32.xlu0 %v1441, 32
      %v1505 = vpop.permute.xlu0 %1504
      %1506 = vrot.lane.b32.xlu0 %v1443, 32
      %v1507 = vpop.permute.xlu0 %1506
      %vm1540 = vcmask 31744
      %v1541 = vsel %vm1540, %v482, %v666
      %v1542 = vsel %vm1540, %v483, %v668
      %v1543 = vsel %vm1540, %v485, %v670
      %v1544 = vsel %vm1540, %v486, %v672
      %v1545 = vsel %vm1540, %v488, %v674
      %v1546 = vsel %vm1540, %v489, %v676
      %v1547 = vsel %vm1540, %v491, %v678
      %v1548 = vsel %vm1540, %v492, %v680
      %v1549 = vsel %vm1540, %v494, %v682
      %v1550 = vsel %vm1540, %v495, %v684
      %v1551 = vsel %vm1540, %v497, %v686
      %v1552 = vsel %vm1540, %v498, %v688
      %v1553 = vsel %vm1540, %v500, %v690
      %v1554 = vsel %vm1540, %v501, %v692
      %v1555 = vsel %vm1540, %v503, %v694
      %v1556 = vsel %vm1540, %v504, %v696
      %v1557 = vsel %vm1540, %v506, %v698
      %v1558 = vsel %vm1540, %v507, %v700
      %v1559 = vsel %vm1540, %v509, %v702
      %v1560 = vsel %vm1540, %v510, %v704
      %v1561 = vsel %vm1540, %v512, %v706
      %v1562 = vsel %vm1540, %v513, %v708
      %v1563 = vsel %vm1540, %v515, %v710
      %v1564 = vsel %vm1540, %v516, %v712
      %v1565 = vsel %vm1540, %v518, %v714
      %v1566 = vsel %vm1540, %v519, %v716
      %v1567 = vsel %vm1540, %v521, %v718
      %v1568 = vsel %vm1540, %v522, %v720
      %v1569 = vsel %vm1540, %v524, %v722
      %v1570 = vsel %vm1540, %v525, %v724
      %v1571 = vsel %vm1540, %v527, %v726
      %v1572 = vsel %vm1540, %v528, %v728
      %vm1573 = vcmask 64512
      %v1574 = vsel %vm1573, %v1541, %v843
      %v1575 = vsel %vm1573, %v1542, %v845
      %v1576 = vsel %vm1573, %v1543, %v847
      %v1577 = vsel %vm1573, %v1544, %v849
      %v1578 = vsel %vm1573, %v1545, %v851
      %v1579 = vsel %vm1573, %v1546, %v853
      %v1580 = vsel %vm1573, %v1547, %v855
      %v1581 = vsel %vm1573, %v1548, %v857
      %v1582 = vsel %vm1573, %v1549, %v859
      %v1583 = vsel %vm1573, %v1550, %v861
      %v1584 = vsel %vm1573, %v1551, %v863
      %v1585 = vsel %vm1573, %v1552, %v865
      %v1586 = vsel %vm1573, %v1553, %v867
      %v1587 = vsel %vm1573, %v1554, %v869
      %v1588 = vsel %vm1573, %v1555, %v871
      %v1589 = vsel %vm1573, %v1556, %v873
      %v1590 = vsel %vm1573, %v1557, %v875
      %v1591 = vsel %vm1573, %v1558, %v877
      %v1592 = vsel %vm1573, %v1559, %v879
      %v1593 = vsel %vm1573, %v1560, %v881
      %v1594 = vsel %vm1573, %v1561, %v883
      %v1595 = vsel %vm1573, %v1562, %v885
      %v1596 = vsel %vm1573, %v1563, %v887
      %v1597 = vsel %vm1573, %v1564, %v889
      %v1598 = vsel %vm1573, %v1565, %v891
      %v1599 = vsel %vm1573, %v1566, %v893
      %v1600 = vsel %vm1573, %v1567, %v895
      %v1601 = vsel %vm1573, %v1568, %v897
      %v1602 = vsel %vm1573, %v1569, %v899
      %v1603 = vsel %vm1573, %v1570, %v901
      %v1604 = vsel %vm1573, %v1571, %v903
      %v1605 = vsel %vm1573, %v1572, %v905
      %vm1606 = vcmask 97280
      %v1607 = vsel %vm1606, %v1574, %v941
      %v1608 = vsel %vm1606, %v1575, %v943
      %v1609 = vsel %vm1606, %v1576, %v945
      %v1610 = vsel %vm1606, %v1577, %v947
      %v1611 = vsel %vm1606, %v1578, %v949
      %v1612 = vsel %vm1606, %v1579, %v951
      %v1613 = vsel %vm1606, %v1580, %v953
      %v1614 = vsel %vm1606, %v1581, %v955
      %v1615 = vsel %vm1606, %v1582, %v957
      %v1616 = vsel %vm1606, %v1583, %v959
      %v1617 = vsel %vm1606, %v1584, %v961
      %v1618 = vsel %vm1606, %v1585, %v963
      %v1619 = vsel %vm1606, %v1586, %v965
      %v1620 = vsel %vm1606, %v1587, %v967
      %v1621 = vsel %vm1606, %v1588, %v969
      %v1622 = vsel %vm1606, %v1589, %v971
      %v1623 = vsel %vm1606, %v1590, %v973
      %v1624 = vsel %vm1606, %v1591, %v975
      %v1625 = vsel %vm1606, %v1592, %v977
      %v1626 = vsel %vm1606, %v1593, %v979
      %v1627 = vsel %vm1606, %v1594, %v981
      %v1628 = vsel %vm1606, %v1595, %v983
      %v1629 = vsel %vm1606, %v1596, %v985
      %v1630 = vsel %vm1606, %v1597, %v987
      %v1631 = vsel %vm1606, %v1598, %v989
      %v1632 = vsel %vm1606, %v1599, %v991
      %v1633 = vsel %vm1606, %v1600, %v993
      %v1634 = vsel %vm1606, %v1601, %v995
      %v1635 = vsel %vm1606, %v1602, %v997
      %v1636 = vsel %vm1606, %v1603, %v999
      %v1637 = vsel %vm1606, %v1604, %v1001
      %v1638 = vsel %vm1606, %v1605, %v1003
      %vm1639 = vcmask 130048
      %v1640 = vsel %vm1639, %v1607, %v1043
      %v1641 = vsel %vm1639, %v1608, %v1045
      %v1642 = vsel %vm1639, %v1609, %v1047
      %v1643 = vsel %vm1639, %v1610, %v1049
      %v1644 = vsel %vm1639, %v1611, %v1051
      %v1645 = vsel %vm1639, %v1612, %v1053
      %v1646 = vsel %vm1639, %v1613, %v1055
      %v1647 = vsel %vm1639, %v1614, %v1057
      %v1648 = vsel %vm1639, %v1615, %v1059
      %v1649 = vsel %vm1639, %v1616, %v1061
      %v1650 = vsel %vm1639, %v1617, %v1063
      %v1651 = vsel %vm1639, %v1618, %v1065
      %v1652 = vsel %vm1639, %v1619, %v1067
      %v1653 = vsel %vm1639, %v1620, %v1069
      %v1654 = vsel %vm1639, %v1621, %v1071
      %v1655 = vsel %vm1639, %v1622, %v1073
      %v1656 = vsel %vm1639, %v1623, %v1075
      %v1657 = vsel %vm1639, %v1624, %v1077
      %v1658 = vsel %vm1639, %v1625, %v1079
      %v1659 = vsel %vm1639, %v1626, %v1081
      %v1660 = vsel %vm1639, %v1627, %v1083
      %v1661 = vsel %vm1639, %v1628, %v1085
      %v1662 = vsel %vm1639, %v1629, %v1087
      %v1663 = vsel %vm1639, %v1630, %v1089
      %v1664 = vsel %vm1639, %v1631, %v1091
      %v1665 = vsel %vm1639, %v1632, %v1093
      %v1666 = vsel %vm1639, %v1633, %v1095
      %v1667 = vsel %vm1639, %v1634, %v1097
      %v1668 = vsel %vm1639, %v1635, %v1099
      %v1669 = vsel %vm1639, %v1636, %v1101
      %v1670 = vsel %vm1639, %v1637, %v1103
      %v1671 = vsel %vm1639, %v1638, %v1105
      %vm1672 = vcmask 162816
      %v1673 = vsel %vm1672, %v1640, %v1144
      %v1674 = vsel %vm1672, %v1641, %v1146
      %v1675 = vsel %vm1672, %v1642, %v1148
      %v1676 = vsel %vm1672, %v1643, %v1150
      %v1677 = vsel %vm1672, %v1644, %v1152
      %v1678 = vsel %vm1672, %v1645, %v1154
      %v1679 = vsel %vm1672, %v1646, %v1156
      %v1680 = vsel %vm1672, %v1647, %v1158
      %v1681 = vsel %vm1672, %v1648, %v1160
      %v1682 = vsel %vm1672, %v1649, %v1162
      %v1683 = vsel %vm1672, %v1650, %v1164
      %v1684 = vsel %vm1672, %v1651, %v1166
      %v1685 = vsel %vm1672, %v1652, %v1168
      %v1686 = vsel %vm1672, %v1653, %v1170
      %v1687 = vsel %vm1672, %v1654, %v1172
      %v1688 = vsel %vm1672, %v1655, %v1174
      %v1689 = vsel %vm1672, %v1656, %v1176
      %v1690 = vsel %vm1672, %v1657, %v1178
      %v1691 = vsel %vm1672, %v1658, %v1180
      %v1692 = vsel %vm1672, %v1659, %v1182
      %v1693 = vsel %vm1672, %v1660, %v1184
      %v1694 = vsel %vm1672, %v1661, %v1186
      %v1695 = vsel %vm1672, %v1662, %v1188
      %v1696 = vsel %vm1672, %v1663, %v1190
      %v1697 = vsel %vm1672, %v1664, %v1192
      %v1698 = vsel %vm1672, %v1665, %v1194
      %v1699 = vsel %vm1672, %v1666, %v1196
      %v1700 = vsel %vm1672, %v1667, %v1198
      %v1701 = vsel %vm1672, %v1668, %v1200
      %v1702 = vsel %vm1672, %v1669, %v1202
      %v1703 = vsel %vm1672, %v1670, %v1204
      %v1704 = vsel %vm1672, %v1671, %v1206
      %vm1705 = vcmask 195584
      %v1706 = vsel %vm1705, %v1673, %v1242
      %v1707 = vsel %vm1705, %v1674, %v1244
      %v1708 = vsel %vm1705, %v1675, %v1246
      %v1709 = vsel %vm1705, %v1676, %v1248
      %v1710 = vsel %vm1705, %v1677, %v1250
      %v1711 = vsel %vm1705, %v1678, %v1252
      %v1712 = vsel %vm1705, %v1679, %v1254
      %v1713 = vsel %vm1705, %v1680, %v1256
      %v1714 = vsel %vm1705, %v1681, %v1258
      %v1715 = vsel %vm1705, %v1682, %v1260
      %v1716 = vsel %vm1705, %v1683, %v1262
      %v1717 = vsel %vm1705, %v1684, %v1264
      %v1718 = vsel %vm1705, %v1685, %v1266
      %v1719 = vsel %vm1705, %v1686, %v1268
      %v1720 = vsel %vm1705, %v1687, %v1270
      %v1721 = vsel %vm1705, %v1688, %v1272
      %v1722 = vsel %vm1705, %v1689, %v1274
      %v1723 = vsel %vm1705, %v1690, %v1276
      %v1724 = vsel %vm1705, %v1691, %v1278
      %v1725 = vsel %vm1705, %v1692, %v1280
      %v1726 = vsel %vm1705, %v1693, %v1282
      %v1727 = vsel %vm1705, %v1694, %v1284
      %v1728 = vsel %vm1705, %v1695, %v1286
      %v1729 = vsel %vm1705, %v1696, %v1288
      %v1730 = vsel %vm1705, %v1697, %v1290
      %v1731 = vsel %vm1705, %v1698, %v1292
      %v1732 = vsel %vm1705, %v1699, %v1294
      %v1733 = vsel %vm1705, %v1700, %v1296
      %v1734 = vsel %vm1705, %v1701, %v1298
      %v1735 = vsel %vm1705, %v1702, %v1300
      %v1736 = vsel %vm1705, %v1703, %v1302
      %v1737 = vsel %vm1705, %v1704, %v1304
      %vm1738 = vcmask 228352
      %v1739 = vsel %vm1738, %v1706, %v1344
      %v1740 = vsel %vm1738, %v1707, %v1346
      %v1741 = vsel %vm1738, %v1708, %v1348
      %v1742 = vsel %vm1738, %v1709, %v1350
      %v1743 = vsel %vm1738, %v1710, %v1352
      %v1744 = vsel %vm1738, %v1711, %v1354
      %v1745 = vsel %vm1738, %v1712, %v1356
      %v1746 = vsel %vm1738, %v1713, %v1358
      %v1747 = vsel %vm1738, %v1714, %v1360
      %v1748 = vsel %vm1738, %v1715, %v1362
      %v1749 = vsel %vm1738, %v1716, %v1364
      %v1750 = vsel %vm1738, %v1717, %v1366
      %v1751 = vsel %vm1738, %v1718, %v1368
      %v1752 = vsel %vm1738, %v1719, %v1370
      %v1753 = vsel %vm1738, %v1720, %v1372
      %v1754 = vsel %vm1738, %v1721, %v1374
      %v1755 = vsel %vm1738, %v1722, %v1376
      %v1756 = vsel %vm1738, %v1723, %v1378
      %v1757 = vsel %vm1738, %v1724, %v1380
      %v1758 = vsel %vm1738, %v1725, %v1382
      %v1759 = vsel %vm1738, %v1726, %v1384
      %v1760 = vsel %vm1738, %v1727, %v1386
      %v1761 = vsel %vm1738, %v1728, %v1388
      %v1762 = vsel %vm1738, %v1729, %v1390
      %v1763 = vsel %vm1738, %v1730, %v1392
      %v1764 = vsel %vm1738, %v1731, %v1394
      %v1765 = vsel %vm1738, %v1732, %v1396
      %v1766 = vsel %vm1738, %v1733, %v1398
      %v1767 = vsel %vm1738, %v1734, %v1400
      %v1768 = vsel %vm1738, %v1735, %v1402
      %v1769 = vsel %vm1738, %v1736, %v1404
      %v1770 = vsel %vm1738, %v1737, %v1406
      %vm1771 = vcmask 261120
      %v1772 = vsel %vm1771, %v1739, %v1445
      %v1773 = vsel %vm1771, %v1740, %v1447
      %v1774 = vsel %vm1771, %v1741, %v1449
      %v1775 = vsel %vm1771, %v1742, %v1451
      %v1776 = vsel %vm1771, %v1743, %v1453
      %v1777 = vsel %vm1771, %v1744, %v1455
      %v1778 = vsel %vm1771, %v1745, %v1457
      %v1779 = vsel %vm1771, %v1746, %v1459
      %v1780 = vsel %vm1771, %v1747, %v1461
      %v1781 = vsel %vm1771, %v1748, %v1463
      %v1782 = vsel %vm1771, %v1749, %v1465
      %v1783 = vsel %vm1771, %v1750, %v1467
      %v1784 = vsel %vm1771, %v1751, %v1469
      %v1785 = vsel %vm1771, %v1752, %v1471
      %v1786 = vsel %vm1771, %v1753, %v1473
      %v1787 = vsel %vm1771, %v1754, %v1475
      %v1788 = vsel %vm1771, %v1755, %v1477
      %v1789 = vsel %vm1771, %v1756, %v1479
      %v1790 = vsel %vm1771, %v1757, %v1481
      %v1791 = vsel %vm1771, %v1758, %v1483
      %v1792 = vsel %vm1771, %v1759, %v1485
      %v1793 = vsel %vm1771, %v1760, %v1487
      %v1794 = vsel %vm1771, %v1761, %v1489
      %v1795 = vsel %vm1771, %v1762, %v1491
      %v1796 = vsel %vm1771, %v1763, %v1493
      %v1797 = vsel %vm1771, %v1764, %v1495
      %v1798 = vsel %vm1771, %v1765, %v1497
      %v1799 = vsel %vm1771, %v1766, %v1499
      %v1800 = vsel %vm1771, %v1767, %v1501
      %v1801 = vsel %vm1771, %v1768, %v1503
      %v1802 = vsel %vm1771, %v1769, %v1505
      %v1803 = vsel %vm1771, %v1770, %v1507
      %v1804 = vld [vmem:[%s3] sm:$0xff]
      %v1805 = vld [vmem:[%s3 + $0x8] sm:$0xff]
      %v1806 = vld [vmem:[%s3 + $0x10] sm:$0xff]
      %v1807 = vld [vmem:[%s3 + $0x18] sm:$0xff]
      %v1808 = vld [vmem:[%s3 + $0x20] sm:$0xf]
      %vm1809 = vcmask 293888
      %v1811 = vsel %vm1809, %v1772, 0
      %v1814 = vsel %vm1809, %v1773, 0
      %v1817 = vsel %vm1809, %v1774, 0
      %v1820 = vsel %vm1809, %v1775, 0
      %v1823 = vsel %vm1809, %v1776, 0
      %v1826 = vsel %vm1809, %v1777, 0
      %v1829 = vsel %vm1809, %v1778, 0
      %v1832 = vsel %vm1809, %v1779, 0
      %v1835 = vsel %vm1809, %v1780, 0
      %v1838 = vsel %vm1809, %v1781, 0
      %v1841 = vsel %vm1809, %v1782, 0
      %v1844 = vsel %vm1809, %v1783, 0
      %v1847 = vsel %vm1809, %v1784, 0
      %v1850 = vsel %vm1809, %v1785, 0
      %v1853 = vsel %vm1809, %v1786, 0
      %v1856 = vsel %vm1809, %v1787, 0
      %v1859 = vsel %vm1809, %v1788, 0
      %v1862 = vsel %vm1809, %v1789, 0
      %v1865 = vsel %vm1809, %v1790, 0
      %v1868 = vsel %vm1809, %v1791, 0
      %v1871 = vsel %vm1809, %v1792, 0
      %v1874 = vsel %vm1809, %v1793, 0
      %v1877 = vsel %vm1809, %v1794, 0
      %v1880 = vsel %vm1809, %v1795, 0
      %v1883 = vsel %vm1809, %v1796, 0
      %v1886 = vsel %vm1809, %v1797, 0
      %v1889 = vsel %vm1809, %v1798, 0
      %v1892 = vsel %vm1809, %v1799, 0
      %v1895 = vsel %vm1809, %v1800, 0
      %v1898 = vsel %vm1809, %v1801, 0
      %v1901 = vsel %vm1809, %v1802, 0
      %v1904 = vsel %vm1809, %v1803, 0
      %vm1906 = vcmask 1043456
      %v1908 = vsel %vm1906, %v1808, 0
      %1910 = vmatprep.subr.mxu0 0.0
      %1911 = vmatpush1.msra.mxu0 0.0
      %1912 = vmatprep.subr.mxu0 0.0
      %1913 = vmatpush1.msra.mxu0 0.0
      %1914 = vmatprep.subr.mxu0 0.0
      %1915 = vmatpush1.msra.mxu0 0.0
      %1916 = vmatprep.subr.mxu0 0.0
      %1917 = vmatpush1.msra.mxu0 0.0
      %1918 = vmatprep.subr.mxu0 0.0
      %1919 = vmatpush1.msra.mxu0 0.0
      %1920 = vmatprep.subr.mxu0 0.0
      %1921 = vmatpush1.msra.mxu0 0.0
      %1922 = vmatprep.subr.mxu0 0.0
      %1923 = vmatpush1.msra.mxu0 0.0
      %1924 = vmatprep.subr.mxu0 0.0
      %1925 = vmatpush1.msra.mxu0 0.0
      %1926 = vmatprep.subr.mxu0 0.0
      %1927 = vmatpush1.msra.mxu0 0.0
      %1928 = vmatprep.subr.mxu0 0.0
      %1929 = vmatpush1.msra.mxu0 0.0
      %1930 = vmatprep.subr.mxu0 0.0
      %1931 = vmatpush1.msra.mxu0 0.0
      %1932 = vmatprep.subr.mxu0 0.0
      %1933 = vmatpush1.msra.mxu0 %v1908
      %1934 = vmatprep.subr.mxu0 0.0
      %1935 = vmatpush1.msra.mxu0 %v1807
      %1936 = vmatprep.subr.mxu0 0.0
      %1937 = vmatpush1.msra.mxu0 %v1806
      %1938 = vmatprep.subr.mxu0 0.0
      %1939 = vmatpush1.msra.mxu0 %v1805
      %1940 = vmatprep.subr.mxu0 0.0
      %1941 = vmatpush1.msra.mxu0 %v1804
      %1942 = vmatprep.subr.mxu0 0.0
      %1943 = vmatpush2.msra.mxu0 0.0
      %1944 = vmatprep.subr.mxu0 0.0
      %1945 = vmatpush2.msra.mxu0 0.0
      %1946 = vmatprep.subr.mxu0 0.0
      %1947 = vmatpush2.msra.mxu0 0.0
      %1948 = vmatprep.subr.mxu0 0.0
      %1949 = vmatpush2.msra.mxu0 0.0
      %1950 = vmatprep.subr.mxu0 0.0
      %1951 = vmatpush2.msra.mxu0 0.0
      %1952 = vmatprep.subr.mxu0 0.0
      %1953 = vmatpush2.msra.mxu0 0.0
      %1954 = vmatprep.subr.mxu0 0.0
      %1955 = vmatpush2.msra.mxu0 0.0
      %1956 = vmatprep.subr.mxu0 0.0
      %1957 = vmatpush2.msra.mxu0 0.0
      %1958 = vmatprep.subr.mxu0 0.0
      %1959 = vmatpush2.msra.mxu0 0.0
      %1960 = vmatprep.subr.mxu0 0.0
      %1961 = vmatpush2.msra.mxu0 0.0
      %1962 = vmatprep.subr.mxu0 0.0
      %1963 = vmatpush2.msra.mxu0 0.0
      %1964 = vmatprep.subr.mxu0 0.0
      %1965 = vmatpush2.msra.mxu0 0.0
      %1966 = vmatprep.subr.mxu0 0.0
      %1967 = vmatpush2.msra.mxu0 0.0
      %1968 = vmatprep.subr.mxu0 0.0
      %1969 = vmatpush2.msra.mxu0 0.0
      %1970 = vmatprep.subr.mxu0 0.0
      %1971 = vmatpush2.msra.mxu0 0.0
      %1972 = vmatprep.subr.mxu0 0.0
      %1973 = vmatpush2.msra.mxu0 0.0
      %1974 = vmatprep.mubr.f32.mxu0 0.0
      %1975 = vmatmul.mubr.f32.gmra.mxu0 %v1811
      %v1976 = vpop.f32.mrf.mxu0
      %v1977 = vadd.f32 0.0, %v1976
      %v1978 = vpop.f32.mrf.mxu0
      %1979 = vmatprep.mubr.f32.mxu0 0.0
      %1980 = vmatmul.mubr.f32.gmra.mxu0 %v1814
      %v1981 = vpop.f32.mrf.mxu0
      %v1982 = vadd.f32 0.0, %v1981
      %v1983 = vpop.f32.mrf.mxu0
      %1984 = vmatprep.mubr.f32.mxu0 0.0
      %1985 = vmatmul.mubr.f32.gmra.mxu0 %v1817
      %v1986 = vpop.f32.mrf.mxu0
      %v1987 = vadd.f32 0.0, %v1986
      %v1988 = vpop.f32.mrf.mxu0
      %1989 = vmatprep.mubr.f32.mxu0 0.0
      %1990 = vmatmul.mubr.f32.gmra.mxu0 %v1820
      %v1991 = vpop.f32.mrf.mxu0
      %v1992 = vadd.f32 0.0, %v1991
      %v1993 = vpop.f32.mrf.mxu0
      %1994 = vmatprep.mubr.f32.mxu0 0.0
      %1995 = vmatmul.mubr.f32.gmra.mxu0 %v1823
      %v1996 = vpop.f32.mrf.mxu0
      %v1997 = vadd.f32 0.0, %v1996
      %v1998 = vpop.f32.mrf.mxu0
      %1999 = vmatprep.mubr.f32.mxu0 0.0
      %2000 = vmatmul.mubr.f32.gmra.mxu0 %v1826
      %v2001 = vpop.f32.mrf.mxu0
      %v2002 = vadd.f32 0.0, %v2001
      %v2003 = vpop.f32.mrf.mxu0
      %2004 = vmatprep.mubr.f32.mxu0 0.0
      %2005 = vmatmul.mubr.f32.gmra.mxu0 %v1829
      %v2006 = vpop.f32.mrf.mxu0
      %v2007 = vadd.f32 0.0, %v2006
      %v2008 = vpop.f32.mrf.mxu0
      %2009 = vmatprep.mubr.f32.mxu0 0.0
      %2010 = vmatmul.mubr.f32.gmra.mxu0 %v1832
      %v2011 = vpop.f32.mrf.mxu0
      %v2012 = vadd.f32 0.0, %v2011
      %v2013 = vpop.f32.mrf.mxu0
      %2014 = vmatprep.mubr.f32.mxu0 0.0
      %2015 = vmatmul.mubr.f32.gmra.mxu0 %v1835
      %v2016 = vpop.f32.mrf.mxu0
      %v2017 = vadd.f32 0.0, %v2016
      %v2018 = vpop.f32.mrf.mxu0
      %2019 = vmatprep.mubr.f32.mxu0 0.0
      %2020 = vmatmul.mubr.f32.gmra.mxu0 %v1838
      %v2021 = vpop.f32.mrf.mxu0
      %v2022 = vadd.f32 0.0, %v2021
      %v2023 = vpop.f32.mrf.mxu0
      %2024 = vmatprep.mubr.f32.mxu0 0.0
      %2025 = vmatmul.mubr.f32.gmra.mxu0 %v1841
      %v2026 = vpop.f32.mrf.mxu0
      %v2027 = vadd.f32 0.0, %v2026
      %v2028 = vpop.f32.mrf.mxu0
      %2029 = vmatprep.mubr.f32.mxu0 0.0
      %2030 = vmatmul.mubr.f32.gmra.mxu0 %v1844
      %v2031 = vpop.f32.mrf.mxu0
      %v2032 = vadd.f32 0.0, %v2031
      %v2033 = vpop.f32.mrf.mxu0
      %2034 = vmatprep.mubr.f32.mxu0 0.0
      %2035 = vmatmul.mubr.f32.gmra.mxu0 %v1847
      %v2036 = vpop.f32.mrf.mxu0
      %v2037 = vadd.f32 0.0, %v2036
      %v2038 = vpop.f32.mrf.mxu0
      %2039 = vmatprep.mubr.f32.mxu0 0.0
      %2040 = vmatmul.mubr.f32.gmra.mxu0 %v1850
      %v2041 = vpop.f32.mrf.mxu0
      %v2042 = vadd.f32 0.0, %v2041
      %v2043 = vpop.f32.mrf.mxu0
      %2044 = vmatprep.mubr.f32.mxu0 0.0
      %2045 = vmatmul.mubr.f32.gmra.mxu0 %v1853
      %v2046 = vpop.f32.mrf.mxu0
      %v2047 = vadd.f32 0.0, %v2046
      %v2048 = vpop.f32.mrf.mxu0
      %2049 = vmatprep.mubr.f32.mxu0 0.0
      %2050 = vmatmul.mubr.f32.gmra.mxu0 %v1856
      %v2051 = vpop.f32.mrf.mxu0
      %v2052 = vadd.f32 0.0, %v2051
      %v2053 = vpop.f32.mrf.mxu0
      %2054 = vmatprep.mubr.f32.mxu0 0.0
      %2055 = vmatmul.mubr.f32.gmra.mxu0 %v1859
      %v2056 = vpop.f32.mrf.mxu0
      %v2057 = vadd.f32 0.0, %v2056
      %v2058 = vpop.f32.mrf.mxu0
      %2059 = vmatprep.mubr.f32.mxu0 0.0
      %2060 = vmatmul.mubr.f32.gmra.mxu0 %v1862
      %v2061 = vpop.f32.mrf.mxu0
      %v2062 = vadd.f32 0.0, %v2061
      %v2063 = vpop.f32.mrf.mxu0
      %2064 = vmatprep.mubr.f32.mxu0 0.0
      %2065 = vmatmul.mubr.f32.gmra.mxu0 %v1865
      %v2066 = vpop.f32.mrf.mxu0
      %v2067 = vadd.f32 0.0, %v2066
      %v2068 = vpop.f32.mrf.mxu0
      %2069 = vmatprep.mubr.f32.mxu0 0.0
      %2070 = vmatmul.mubr.f32.gmra.mxu0 %v1868
      %v2071 = vpop.f32.mrf.mxu0
      %v2072 = vadd.f32 0.0, %v2071
      %v2073 = vpop.f32.mrf.mxu0
      %2074 = vmatprep.mubr.f32.mxu0 0.0
      %2075 = vmatmul.mubr.f32.gmra.mxu0 %v1871
      %v2076 = vpop.f32.mrf.mxu0
      %v2077 = vadd.f32 0.0, %v2076
      %v2078 = vpop.f32.mrf.mxu0
      %2079 = vmatprep.mubr.f32.mxu0 0.0
      %2080 = vmatmul.mubr.f32.gmra.mxu0 %v1874
      %v2081 = vpop.f32.mrf.mxu0
      %v2082 = vadd.f32 0.0, %v2081
      %v2083 = vpop.f32.mrf.mxu0
      %2084 = vmatprep.mubr.f32.mxu0 0.0
      %2085 = vmatmul.mubr.f32.gmra.mxu0 %v1877
      %v2086 = vpop.f32.mrf.mxu0
      %v2087 = vadd.f32 0.0, %v2086
      %v2088 = vpop.f32.mrf.mxu0
      %2089 = vmatprep.mubr.f32.mxu0 0.0
      %2090 = vmatmul.mubr.f32.gmra.mxu0 %v1880
      %v2091 = vpop.f32.mrf.mxu0
      %v2092 = vadd.f32 0.0, %v2091
      %v2093 = vpop.f32.mrf.mxu0
      %2094 = vmatprep.mubr.f32.mxu0 0.0
      %2095 = vmatmul.mubr.f32.gmra.mxu0 %v1883
      %v2096 = vpop.f32.mrf.mxu0
      %v2097 = vadd.f32 0.0, %v2096
      %v2098 = vpop.f32.mrf.mxu0
      %2099 = vmatprep.mubr.f32.mxu0 0.0
      %2100 = vmatmul.mubr.f32.gmra.mxu0 %v1886
      %v2101 = vpop.f32.mrf.mxu0
      %v2102 = vadd.f32 0.0, %v2101
      %v2103 = vpop.f32.mrf.mxu0
      %2104 = vmatprep.mubr.f32.mxu0 0.0
      %2105 = vmatmul.mubr.f32.gmra.mxu0 %v1889
      %v2106 = vpop.f32.mrf.mxu0
      %v2107 = vadd.f32 0.0, %v2106
      %v2108 = vpop.f32.mrf.mxu0
      %2109 = vmatprep.mubr.f32.mxu0 0.0
      %2110 = vmatmul.mubr.f32.gmra.mxu0 %v1892
      %v2111 = vpop.f32.mrf.mxu0
      %v2112 = vadd.f32 0.0, %v2111
      %v2113 = vpop.f32.mrf.mxu0
      %2114 = vmatprep.mubr.f32.mxu0 0.0
      %2115 = vmatmul.mubr.f32.gmra.mxu0 %v1895
      %v2116 = vpop.f32.mrf.mxu0
      %v2117 = vadd.f32 0.0, %v2116
      %v2118 = vpop.f32.mrf.mxu0
      %2119 = vmatprep.mubr.f32.mxu0 0.0
      %2120 = vmatmul.mubr.f32.gmra.mxu0 %v1898
      %v2121 = vpop.f32.mrf.mxu0
      %v2122 = vadd.f32 0.0, %v2121
      %v2123 = vpop.f32.mrf.mxu0
      %2124 = vmatprep.mubr.f32.mxu0 0.0
      %2125 = vmatmul.mubr.f32.gmra.mxu0 %v1901
      %v2126 = vpop.f32.mrf.mxu0
      %v2127 = vadd.f32 0.0, %v2126
      %v2128 = vpop.f32.mrf.mxu0
      %2129 = vmatprep.mubr.f32.mxu0 0.0
      %2130 = vmatmul.mubr.f32.gmra.mxu0 %v1904
      %v2131 = vpop.f32.mrf.mxu0
      %v2132 = vadd.f32 0.0, %v2131
      %v2133 = vpop.f32.mrf.mxu0
      %2134 = vdwg.mxu0
      %v2135 = vld [vmem:[%s4] sm:$0x1]
      %v2137 = vlaneseq
      %v2138 = vshrl.u32 %v2137, 7
      %v2139 = vsub.s32 0, %v2138
      %v2140 = vrot.slane %v2135, %v2139
      %v2142 = vmul.f32 %v1977, %v2140
      %v2143 = vmul.f32 %v1982, %v2140
      %v2144 = vmul.f32 %v1987, %v2140
      %v2145 = vmul.f32 %v1992, %v2140
      %v2146 = vmul.f32 %v1997, %v2140
      %v2147 = vmul.f32 %v2002, %v2140
      %v2148 = vmul.f32 %v2007, %v2140
      %v2149 = vmul.f32 %v2012, %v2140
      %v2150 = vmul.f32 %v2017, %v2140
      %v2151 = vmul.f32 %v2022, %v2140
      %v2152 = vmul.f32 %v2027, %v2140
      %v2153 = vmul.f32 %v2032, %v2140
      %v2154 = vmul.f32 %v2037, %v2140
      %v2155 = vmul.f32 %v2042, %v2140
      %v2156 = vmul.f32 %v2047, %v2140
      %v2157 = vmul.f32 %v2052, %v2140
      %v2158 = vmul.f32 %v2057, %v2140
      %v2159 = vmul.f32 %v2062, %v2140
      %v2160 = vmul.f32 %v2067, %v2140
      %v2161 = vmul.f32 %v2072, %v2140
      %v2162 = vmul.f32 %v2077, %v2140
      %v2163 = vmul.f32 %v2082, %v2140
      %v2164 = vmul.f32 %v2087, %v2140
      %v2165 = vmul.f32 %v2092, %v2140
      %v2166 = vmul.f32 %v2097, %v2140
      %v2167 = vmul.f32 %v2102, %v2140
      %v2168 = vmul.f32 %v2107, %v2140
      %v2169 = vmul.f32 %v2112, %v2140
      %v2170 = vmul.f32 %v2117, %v2140
      %v2171 = vmul.f32 %v2122, %v2140
      %v2172 = vmul.f32 %v2127, %v2140
      %v2173 = vmul.f32 %v2132, %v2140
      %v2174 = vld [vmem:[%s5] sm:$0x1]
      %v2176 = vlaneseq
      %v2177 = vshrl.u32 %v2176, 7
      %v2178 = vsub.s32 0, %v2177
      %v2179 = vrot.slane %v2174, %v2178
      %v2181 = vadd.f32 %v2142, %v2179
      %v2182 = vadd.f32 %v2143, %v2179
      %v2183 = vadd.f32 %v2144, %v2179
      %v2184 = vadd.f32 %v2145, %v2179
      %v2185 = vadd.f32 %v2146, %v2179
      %v2186 = vadd.f32 %v2147, %v2179
      %v2187 = vadd.f32 %v2148, %v2179
      %v2188 = vadd.f32 %v2149, %v2179
      %v2189 = vadd.f32 %v2150, %v2179
      %v2190 = vadd.f32 %v2151, %v2179
      %v2191 = vadd.f32 %v2152, %v2179
      %v2192 = vadd.f32 %v2153, %v2179
      %v2193 = vadd.f32 %v2154, %v2179
      %v2194 = vadd.f32 %v2155, %v2179
      %v2195 = vadd.f32 %v2156, %v2179
      %v2196 = vadd.f32 %v2157, %v2179
      %v2197 = vadd.f32 %v2158, %v2179
      %v2198 = vadd.f32 %v2159, %v2179
      %v2199 = vadd.f32 %v2160, %v2179
      %v2200 = vadd.f32 %v2161, %v2179
      %v2201 = vadd.f32 %v2162, %v2179
      %v2202 = vadd.f32 %v2163, %v2179
      %v2203 = vadd.f32 %v2164, %v2179
      %v2204 = vadd.f32 %v2165, %v2179
      %v2205 = vadd.f32 %v2166, %v2179
      %v2206 = vadd.f32 %v2167, %v2179
      %v2207 = vadd.f32 %v2168, %v2179
      %v2208 = vadd.f32 %v2169, %v2179
      %v2209 = vadd.f32 %v2170, %v2179
      %v2210 = vadd.f32 %v2171, %v2179
      %v2211 = vadd.f32 %v2172, %v2179
      %v2212 = vadd.f32 %v2173, %v2179
      %v2213 = vmax.f32 %v2181, 0.0
      %v2214 = vmax.f32 %v2182, 0.0
      %v2215 = vmax.f32 %v2183, 0.0
      %v2216 = vmax.f32 %v2184, 0.0
      %v2217 = vmax.f32 %v2185, 0.0
      %v2218 = vmax.f32 %v2186, 0.0
      %v2219 = vmax.f32 %v2187, 0.0
      %v2220 = vmax.f32 %v2188, 0.0
      %v2221 = vmax.f32 %v2189, 0.0
      %v2222 = vmax.f32 %v2190, 0.0
      %v2223 = vmax.f32 %v2191, 0.0
      %v2224 = vmax.f32 %v2192, 0.0
      %v2225 = vmax.f32 %v2193, 0.0
      %v2226 = vmax.f32 %v2194, 0.0
      %v2227 = vmax.f32 %v2195, 0.0
      %v2228 = vmax.f32 %v2196, 0.0
      %v2229 = vmax.f32 %v2197, 0.0
      %v2230 = vmax.f32 %v2198, 0.0
      %v2231 = vmax.f32 %v2199, 0.0
      %v2232 = vmax.f32 %v2200, 0.0
      %v2233 = vmax.f32 %v2201, 0.0
      %v2234 = vmax.f32 %v2202, 0.0
      %v2235 = vmax.f32 %v2203, 0.0
      %v2236 = vmax.f32 %v2204, 0.0
      %v2237 = vmax.f32 %v2205, 0.0
      %v2238 = vmax.f32 %v2206, 0.0
      %v2239 = vmax.f32 %v2207, 0.0
      %v2240 = vmax.f32 %v2208, 0.0
      %v2241 = vmax.f32 %v2209, 0.0
      %v2242 = vmax.f32 %v2210, 0.0
      %v2243 = vmax.f32 %v2211, 0.0
      %v2244 = vmax.f32 %v2212, 0.0
      %s2245 = scalar_lea.vmem [#allocation2], 24
      %2246 = vst.msk [vmem:[%s2245 + $0x1] sm:$0xff] %vm1540, %v2213
      %2247 = vst.msk [vmem:[%s2245 + $0x9] sm:$0xff] %vm1540, %v2214
      %2248 = vst.msk [vmem:[%s2245 + $0x19] sm:$0xff] %vm1540, %v2215
      %2249 = vst.msk [vmem:[%s2245 + $0x21] sm:$0xff] %vm1540, %v2216
      %2250 = vst.msk [vmem:[%s2245 + $0x31] sm:$0xff] %vm1540, %v2217
      %2251 = vst.msk [vmem:[%s2245 + $0x39] sm:$0xff] %vm1540, %v2218
      %2252 = vst.msk [vmem:[%s2245 + $0x49] sm:$0xff] %vm1540, %v2219
      %2253 = vst.msk [vmem:[%s2245 + $0x51] sm:$0xff] %vm1540, %v2220
      %2254 = vst.msk [vmem:[%s2245 + $0x61] sm:$0xff] %vm1540, %v2221
      %2255 = vst.msk [vmem:[%s2245 + $0x69] sm:$0xff] %vm1540, %v2222
      %2256 = vst.msk [vmem:[%s2245 + $0x79] sm:$0xff] %vm1540, %v2223
      %2257 = vst.msk [vmem:[%s2245 + $0x81] sm:$0xff] %vm1540, %v2224
      %2258 = vst.msk [vmem:[%s2245 + $0x91] sm:$0xff] %vm1540, %v2225
      %2259 = vst.msk [vmem:[%s2245 + $0x99] sm:$0xff] %vm1540, %v2226
      %2260 = vst.msk [vmem:[%s2245 + $0xa9] sm:$0xff] %vm1540, %v2227
      %2261 = vst.msk [vmem:[%s2245 + $0xb1] sm:$0xff] %vm1540, %v2228
      %2262 = vst.msk [vmem:[%s2245 + $0xc1] sm:$0xff] %vm1540, %v2229
      %2263 = vst.msk [vmem:[%s2245 + $0xc9] sm:$0xff] %vm1540, %v2230
      %2264 = vst.msk [vmem:[%s2245 + $0xd9] sm:$0xff] %vm1540, %v2231
      %2265 = vst.msk [vmem:[%s2245 + $0xe1] sm:$0xff] %vm1540, %v2232
      %2266 = vst.msk [vmem:[%s2245 + $0xf1] sm:$0xff] %vm1540, %v2233
      %2267 = vst.msk [vmem:[%s2245 + $0xf9] sm:$0xff] %vm1540, %v2234
      %2268 = vst.msk [vmem:[%s2245 + $0x109] sm:$0xff] %vm1540, %v2235
      %2269 = vst.msk [vmem:[%s2245 + $0x111] sm:$0xff] %vm1540, %v2236
      %2270 = vst.msk [vmem:[%s2245 + $0x121] sm:$0xff] %vm1540, %v2237
      %2271 = vst.msk [vmem:[%s2245 + $0x129] sm:$0xff] %vm1540, %v2238
      %2272 = vst.msk [vmem:[%s2245 + $0x139] sm:$0xff] %vm1540, %v2239
      %2273 = vst.msk [vmem:[%s2245 + $0x141] sm:$0xff] %vm1540, %v2240
      %2274 = vst.msk [vmem:[%s2245 + $0x151] sm:$0xff] %vm1540, %v2241
      %2275 = vst.msk [vmem:[%s2245 + $0x159] sm:$0xff] %vm1540, %v2242
      %2276 = vst.msk [vmem:[%s2245 + $0x169] sm:$0xff] %vm1540, %v2243
      %2277 = vst.msk [vmem:[%s2245 + $0x171] sm:$0xff] %vm1540, %v2244
      %2278 = vst.msk [vmem:[#allocation2 + $0x1] sm:$0xff] %vm1540, %v2213
      %2279 = vst.msk [vmem:[#allocation2 + $0x9] sm:$0xff] %vm1540, %v2214
      %s2280 = scalar_lea.vmem [#allocation2], 408
      %2281 = vst.msk [vmem:[%s2280 + $0x1] sm:$0xff] %vm1540, %v2243
      %2282 = vst.msk [vmem:[%s2280 + $0x9] sm:$0xff] %vm1540, %v2244
      %v2283 = vld [vmem:[#allocation2 + $0x1] sm:$0x1]
      %v2284 = vld [vmem:[#allocation2 + $0x19] sm:$0x1]
      %v2285 = vld [vmem:[#allocation2 + $0x31] sm:$0x1]
      %v2286 = vld [vmem:[#allocation2 + $0x49] sm:$0x1]
      %v2287 = vld [vmem:[#allocation2 + $0x61] sm:$0x1]
      %v2288 = vld [vmem:[#allocation2 + $0x79] sm:$0x1]
      %v2289 = vld [vmem:[#allocation2 + $0x91] sm:$0x1]
      %v2290 = vld [vmem:[#allocation2 + $0xa9] sm:$0x1]
      %v2291 = vld [vmem:[#allocation2 + $0xc1] sm:$0x1]
      %v2292 = vld [vmem:[#allocation2 + $0xd9] sm:$0x1]
      %v2293 = vld [vmem:[#allocation2 + $0xf1] sm:$0x1]
      %v2294 = vld [vmem:[#allocation2 + $0x109] sm:$0x1]
      %v2295 = vld [vmem:[#allocation2 + $0x121] sm:$0x1]
      %v2296 = vld [vmem:[#allocation2 + $0x139] sm:$0x1]
      %v2297 = vld [vmem:[#allocation2 + $0x151] sm:$0x1]
      %v2298 = vld [vmem:[#allocation2 + $0x169] sm:$0x1]
      %v2299 = vld [vmem:[#allocation2 + $0x181] sm:$0x1]
      %v2300 = vld [vmem:[#allocation2 + $0x199] sm:$0x1]
      %vm2301 = vcmask 24576
      %2302 = vst.msk [vmem:[#allocation2] sm:$0x1] %vm2301, %v2283
      %2303 = vst.msk [vmem:[#allocation2 + $0x18] sm:$0x1] %vm2301, %v2284
      %2304 = vst.msk [vmem:[#allocation2 + $0x30] sm:$0x1] %vm2301, %v2285
      %2305 = vst.msk [vmem:[#allocation2 + $0x48] sm:$0x1] %vm2301, %v2286
      %2306 = vst.msk [vmem:[#allocation2 + $0x60] sm:$0x1] %vm2301, %v2287
      %2307 = vst.msk [vmem:[#allocation2 + $0x78] sm:$0x1] %vm2301, %v2288
      %2308 = vst.msk [vmem:[#allocation2 + $0x90] sm:$0x1] %vm2301, %v2289
      %2309 = vst.msk [vmem:[#allocation2 + $0xa8] sm:$0x1] %vm2301, %v2290
      %2310 = vst.msk [vmem:[#allocation2 + $0xc0] sm:$0x1] %vm2301, %v2291
      %2311 = vst.msk [vmem:[#allocation2 + $0xd8] sm:$0x1] %vm2301, %v2292
      %2312 = vst.msk [vmem:[#allocation2 + $0xf0] sm:$0x1] %vm2301, %v2293
      %2313 = vst.msk [vmem:[#allocation2 + $0x108] sm:$0x1] %vm2301, %v2294
      %2314 = vst.msk [vmem:[#allocation2 + $0x120] sm:$0x1] %vm2301, %v2295
      %2315 = vst.msk [vmem:[#allocation2 + $0x138] sm:$0x1] %vm2301, %v2296
      %2316 = vst.msk [vmem:[#allocation2 + $0x150] sm:$0x1] %vm2301, %v2297
      %2317 = vst.msk [vmem:[#allocation2 + $0x168] sm:$0x1] %vm2301, %v2298
      %2318 = vst.msk [vmem:[#allocation2 + $0x180] sm:$0x1] %vm2301, %v2299
      %2319 = vst.msk [vmem:[#allocation2 + $0x198] sm:$0x1] %vm2301, %v2300
      %v2320 = vld [vmem:[#allocation2 + $0x10] sm:$0x1]
      %v2321 = vld [vmem:[#allocation2 + $0x28] sm:$0x1]
      %v2322 = vld [vmem:[#allocation2 + $0x40] sm:$0x1]
      %v2323 = vld [vmem:[#allocation2 + $0x58] sm:$0x1]
      %v2324 = vld [vmem:[#allocation2 + $0x70] sm:$0x1]
      %v2325 = vld [vmem:[#allocation2 + $0x88] sm:$0x1]
      %v2326 = vld [vmem:[#allocation2 + $0xa0] sm:$0x1]
      %v2327 = vld [vmem:[#allocation2 + $0xb8] sm:$0x1]
      %v2328 = vld [vmem:[#allocation2 + $0xd0] sm:$0x1]
      %v2329 = vld [vmem:[#allocation2 + $0xe8] sm:$0x1]
      %v2330 = vld [vmem:[#allocation2 + $0x100] sm:$0x1]
      %v2331 = vld [vmem:[#allocation2 + $0x118] sm:$0x1]
      %v2332 = vld [vmem:[#allocation2 + $0x130] sm:$0x1]
      %v2333 = vld [vmem:[#allocation2 + $0x148] sm:$0x1]
      %v2334 = vld [vmem:[#allocation2 + $0x160] sm:$0x1]
      %v2335 = vld [vmem:[#allocation2 + $0x178] sm:$0x1]
      %v2336 = vld [vmem:[#allocation2 + $0x190] sm:$0x1]
      %v2337 = vld [vmem:[#allocation2 + $0x1a8] sm:$0x1]
      %2338 = vst.msk [vmem:[#allocation2 + $0x11] sm:$0x1] %vm2301, %v2320
      %2339 = vst.msk [vmem:[#allocation2 + $0x29] sm:$0x1] %vm2301, %v2321
      %2340 = vst.msk [vmem:[#allocation2 + $0x41] sm:$0x1] %vm2301, %v2322
      %2341 = vst.msk [vmem:[#allocation2 + $0x59] sm:$0x1] %vm2301, %v2323
      %2342 = vst.msk [vmem:[#allocation2 + $0x71] sm:$0x1] %vm2301, %v2324
      %2343 = vst.msk [vmem:[#allocation2 + $0x89] sm:$0x1] %vm2301, %v2325
      %2344 = vst.msk [vmem:[#allocation2 + $0xa1] sm:$0x1] %vm2301, %v2326
      %2345 = vst.msk [vmem:[#allocation2 + $0xb9] sm:$0x1] %vm2301, %v2327
      %2346 = vst.msk [vmem:[#allocation2 + $0xd1] sm:$0x1] %vm2301, %v2328
      %2347 = vst.msk [vmem:[#allocation2 + $0xe9] sm:$0x1] %vm2301, %v2329
      %2348 = vst.msk [vmem:[#allocation2 + $0x101] sm:$0x1] %vm2301, %v2330
      %2349 = vst.msk [vmem:[#allocation2 + $0x119] sm:$0x1] %vm2301, %v2331
      %2350 = vst.msk [vmem:[#allocation2 + $0x131] sm:$0x1] %vm2301, %v2332
      %2351 = vst.msk [vmem:[#allocation2 + $0x149] sm:$0x1] %vm2301, %v2333
      %2352 = vst.msk [vmem:[#allocation2 + $0x161] sm:$0x1] %vm2301, %v2334
      %2353 = vst.msk [vmem:[#allocation2 + $0x179] sm:$0x1] %vm2301, %v2335
      %2354 = vst.msk [vmem:[#allocation2 + $0x191] sm:$0x1] %vm2301, %v2336
      %2355 = vst.msk [vmem:[#allocation2 + $0x1a9] sm:$0x1] %vm2301, %v2337
      %v2356 = vld [vmem:[#allocation2] sm:$0xff]
      %v2357 = vld [vmem:[#allocation2 + $0x8] sm:$0xff]
      %v2358 = vld [vmem:[#allocation2 + $0x10] sm:$0x3]
      %v2359 = vld [vmem:[#allocation2 + $0x18] sm:$0xff]
      %v2360 = vld [vmem:[#allocation2 + $0x20] sm:$0xff]
      %v2361 = vld [vmem:[#allocation2 + $0x28] sm:$0x3]
      %v2362 = vld [vmem:[#allocation2 + $0x30] sm:$0xff]
      %v2363 = vld [vmem:[#allocation2 + $0x38] sm:$0xff]
      %v2364 = vld [vmem:[#allocation2 + $0x40] sm:$0x3]
      %v2365 = vld [vmem:[#allocation2 + $0x48] sm:$0xff]
      %v2366 = vld [vmem:[#allocation2 + $0x50] sm:$0xff]
      %v2367 = vld [vmem:[#allocation2 + $0x58] sm:$0x3]
      %v2368 = vld [vmem:[#allocation2 + $0x60] sm:$0xff]
      %v2369 = vld [vmem:[#allocation2 + $0x68] sm:$0xff]
      %v2370 = vld [vmem:[#allocation2 + $0x70] sm:$0x3]
      %v2371 = vld [vmem:[#allocation2 + $0x78] sm:$0xff]
      %v2372 = vld [vmem:[#allocation2 + $0x80] sm:$0xff]
      %v2373 = vld [vmem:[#allocation2 + $0x88] sm:$0x3]
      %v2374 = vld [vmem:[#allocation2 + $0x90] sm:$0xff]
      %v2375 = vld [vmem:[#allocation2 + $0x98] sm:$0xff]
      %v2376 = vld [vmem:[#allocation2 + $0xa0] sm:$0x3]
      %v2377 = vld [vmem:[#allocation2 + $0xa8] sm:$0xff]
      %v2378 = vld [vmem:[#allocation2 + $0xb0] sm:$0xff]
      %v2379 = vld [vmem:[#allocation2 + $0xb8] sm:$0x3]
      %v2380 = vld [vmem:[#allocation2 + $0xc0] sm:$0xff]
      %v2381 = vld [vmem:[#allocation2 + $0xc8] sm:$0xff]
      %v2382 = vld [vmem:[#allocation2 + $0xd0] sm:$0x3]
      %v2383 = vld [vmem:[#allocation2 + $0xd8] sm:$0xff]
      %v2384 = vld [vmem:[#allocation2 + $0xe0] sm:$0xff]
      %v2385 = vld [vmem:[#allocation2 + $0xe8] sm:$0x3]
      %v2386 = vld [vmem:[#allocation2 + $0xf0] sm:$0xff]
      %v2387 = vld [vmem:[#allocation2 + $0xf8] sm:$0xff]
      %v2388 = vld [vmem:[#allocation2 + $0x100] sm:$0x3]
      %v2389 = vld [vmem:[#allocation2 + $0x108] sm:$0xff]
      %v2390 = vld [vmem:[#allocation2 + $0x110] sm:$0xff]
      %v2391 = vld [vmem:[#allocation2 + $0x118] sm:$0x3]
      %v2392 = vld [vmem:[#allocation2 + $0x120] sm:$0xff]
      %v2393 = vld [vmem:[#allocation2 + $0x128] sm:$0xff]
      %v2394 = vld [vmem:[#allocation2 + $0x130] sm:$0x3]
      %v2395 = vld [vmem:[#allocation2 + $0x138] sm:$0xff]
      %v2396 = vld [vmem:[#allocation2 + $0x140] sm:$0xff]
      %v2397 = vld [vmem:[#allocation2 + $0x148] sm:$0x3]
      %v2398 = vld [vmem:[#allocation2 + $0x150] sm:$0xff]
      %v2399 = vld [vmem:[#allocation2 + $0x158] sm:$0xff]
      %v2400 = vld [vmem:[#allocation2 + $0x160] sm:$0x3]
      %v2401 = vld [vmem:[#allocation2 + $0x168] sm:$0xff]
      %v2402 = vld [vmem:[#allocation2 + $0x170] sm:$0xff]
      %v2403 = vld [vmem:[#allocation2 + $0x178] sm:$0x3]
      %v2404 = vld [vmem:[#allocation2 + $0x180] sm:$0xff]
      %v2405 = vld [vmem:[#allocation2 + $0x188] sm:$0xff]
      %v2406 = vld [vmem:[#allocation2 + $0x190] sm:$0x3]
      %v2407 = vld [vmem:[#allocation2 + $0x198] sm:$0xff]
      %v2408 = vld [vmem:[#allocation2 + $0x1a0] sm:$0xff]
      %v2409 = vld [vmem:[#allocation2 + $0x1a8] sm:$0x3]
      %v2458 = vrot.slane %v2356, 1
      %v2459 = vrot.slane %v2357, 1
      %v2460 = vsel %vm584, %v2458, %v2459
      %v2461 = vrot.slane %v2358, 1
      %v2462 = vsel %vm584, %v2459, %v2461
      %v2463 = vrot.slane %v2359, 1
      %v2464 = vrot.slane %v2360, 1
      %v2465 = vsel %vm584, %v2463, %v2464
      %v2466 = vrot.slane %v2361, 1
      %v2467 = vsel %vm584, %v2464, %v2466
      %v2468 = vrot.slane %v2362, 1
      %v2469 = vrot.slane %v2363, 1
      %v2470 = vsel %vm584, %v2468, %v2469
      %v2471 = vrot.slane %v2364, 1
      %v2472 = vsel %vm584, %v2469, %v2471
      %v2473 = vrot.slane %v2365, 1
      %v2474 = vrot.slane %v2366, 1
      %v2475 = vsel %vm584, %v2473, %v2474
      %v2476 = vrot.slane %v2367, 1
      %v2477 = vsel %vm584, %v2474, %v2476
      %v2478 = vrot.slane %v2368, 1
      %v2479 = vrot.slane %v2369, 1
      %v2480 = vsel %vm584, %v2478, %v2479
      %v2481 = vrot.slane %v2370, 1
      %v2482 = vsel %vm584, %v2479, %v2481
      %v2483 = vrot.slane %v2371, 1
      %v2484 = vrot.slane %v2372, 1
      %v2485 = vsel %vm584, %v2483, %v2484
      %v2486 = vrot.slane %v2373, 1
      %v2487 = vsel %vm584, %v2484, %v2486
      %v2488 = vrot.slane %v2374, 1
      %v2489 = vrot.slane %v2375, 1
      %v2490 = vsel %vm584, %v2488, %v2489
      %v2491 = vrot.slane %v2376, 1
      %v2492 = vsel %vm584, %v2489, %v2491
      %v2493 = vrot.slane %v2377, 1
      %v2494 = vrot.slane %v2378, 1
      %v2495 = vsel %vm584, %v2493, %v2494
      %v2496 = vrot.slane %v2379, 1
      %v2497 = vsel %vm584, %v2494, %v2496
      %v2498 = vrot.slane %v2380, 1
      %v2499 = vrot.slane %v2381, 1
      %v2500 = vsel %vm584, %v2498, %v2499
      %v2501 = vrot.slane %v2382, 1
      %v2502 = vsel %vm584, %v2499, %v2501
      %v2503 = vrot.slane %v2383, 1
      %v2504 = vrot.slane %v2384, 1
      %v2505 = vsel %vm584, %v2503, %v2504
      %v2506 = vrot.slane %v2385, 1
      %v2507 = vsel %vm584, %v2504, %v2506
      %v2508 = vrot.slane %v2386, 1
      %v2509 = vrot.slane %v2387, 1
      %v2510 = vsel %vm584, %v2508, %v2509
      %v2511 = vrot.slane %v2388, 1
      %v2512 = vsel %vm584, %v2509, %v2511
      %v2513 = vrot.slane %v2389, 1
      %v2514 = vrot.slane %v2390, 1
      %v2515 = vsel %vm584, %v2513, %v2514
      %v2516 = vrot.slane %v2391, 1
      %v2517 = vsel %vm584, %v2514, %v2516
      %v2518 = vrot.slane %v2392, 1
      %v2519 = vrot.slane %v2393, 1
      %v2520 = vsel %vm584, %v2518, %v2519
      %v2521 = vrot.slane %v2394, 1
      %v2522 = vsel %vm584, %v2519, %v2521
      %v2523 = vrot.slane %v2395, 1
      %v2524 = vrot.slane %v2396, 1
      %v2525 = vsel %vm584, %v2523, %v2524
      %v2526 = vrot.slane %v2397, 1
      %v2527 = vsel %vm584, %v2524, %v2526
      %v2528 = vrot.slane %v2398, 1
      %v2529 = vrot.slane %v2399, 1
      %v2530 = vsel %vm584, %v2528, %v2529
      %v2531 = vrot.slane %v2400, 1
      %v2532 = vsel %vm584, %v2529, %v2531
      %v2533 = vrot.slane %v2401, 1
      %v2534 = vrot.slane %v2402, 1
      %v2535 = vsel %vm584, %v2533, %v2534
      %v2536 = vrot.slane %v2403, 1
      %v2537 = vsel %vm584, %v2534, %v2536
      %2538 = vrot.lane.b32.xlu0 %v2460, 4
      %v2539 = vpop.permute.xlu0 %2538
      %2540 = vrot.lane.b32.xlu0 %v2462, 4
      %v2541 = vpop.permute.xlu0 %2540
      %2542 = vrot.lane.b32.xlu0 %v2465, 4
      %v2543 = vpop.permute.xlu0 %2542
      %2544 = vrot.lane.b32.xlu0 %v2467, 4
      %v2545 = vpop.permute.xlu0 %2544
      %2546 = vrot.lane.b32.xlu0 %v2470, 4
      %v2547 = vpop.permute.xlu0 %2546
      %2548 = vrot.lane.b32.xlu0 %v2472, 4
      %v2549 = vpop.permute.xlu0 %2548
      %2550 = vrot.lane.b32.xlu0 %v2475, 4
      %v2551 = vpop.permute.xlu0 %2550
      %2552 = vrot.lane.b32.xlu0 %v2477, 4
      %v2553 = vpop.permute.xlu0 %2552
      %2554 = vrot.lane.b32.xlu0 %v2480, 4
      %v2555 = vpop.permute.xlu0 %2554
      %2556 = vrot.lane.b32.xlu0 %v2482, 4
      %v2557 = vpop.permute.xlu0 %2556
      %2558 = vrot.lane.b32.xlu0 %v2485, 4
      %v2559 = vpop.permute.xlu0 %2558
      %2560 = vrot.lane.b32.xlu0 %v2487, 4
      %v2561 = vpop.permute.xlu0 %2560
      %2562 = vrot.lane.b32.xlu0 %v2490, 4
      %v2563 = vpop.permute.xlu0 %2562
      %2564 = vrot.lane.b32.xlu0 %v2492, 4
      %v2565 = vpop.permute.xlu0 %2564
      %2566 = vrot.lane.b32.xlu0 %v2495, 4
      %v2567 = vpop.permute.xlu0 %2566
      %2568 = vrot.lane.b32.xlu0 %v2497, 4
      %v2569 = vpop.permute.xlu0 %2568
      %2570 = vrot.lane.b32.xlu0 %v2500, 4
      %v2571 = vpop.permute.xlu0 %2570
      %2572 = vrot.lane.b32.xlu0 %v2502, 4
      %v2573 = vpop.permute.xlu0 %2572
      %2574 = vrot.lane.b32.xlu0 %v2505, 4
      %v2575 = vpop.permute.xlu0 %2574
      %2576 = vrot.lane.b32.xlu0 %v2507, 4
      %v2577 = vpop.permute.xlu0 %2576
      %2578 = vrot.lane.b32.xlu0 %v2510, 4
      %v2579 = vpop.permute.xlu0 %2578
      %2580 = vrot.lane.b32.xlu0 %v2512, 4
      %v2581 = vpop.permute.xlu0 %2580
      %2582 = vrot.lane.b32.xlu0 %v2515, 4
      %v2583 = vpop.permute.xlu0 %2582
      %2584 = vrot.lane.b32.xlu0 %v2517, 4
      %v2585 = vpop.permute.xlu0 %2584
      %2586 = vrot.lane.b32.xlu0 %v2520, 4
      %v2587 = vpop.permute.xlu0 %2586
      %2588 = vrot.lane.b32.xlu0 %v2522, 4
      %v2589 = vpop.permute.xlu0 %2588
      %2590 = vrot.lane.b32.xlu0 %v2525, 4
      %v2591 = vpop.permute.xlu0 %2590
      %2592 = vrot.lane.b32.xlu0 %v2527, 4
      %v2593 = vpop.permute.xlu0 %2592
      %2594 = vrot.lane.b32.xlu0 %v2530, 4
      %v2595 = vpop.permute.xlu0 %2594
      %2596 = vrot.lane.b32.xlu0 %v2532, 4
      %v2597 = vpop.permute.xlu0 %2596
      %2598 = vrot.lane.b32.xlu0 %v2535, 4
      %v2599 = vpop.permute.xlu0 %2598
      %2600 = vrot.lane.b32.xlu0 %v2537, 4
      %v2601 = vpop.permute.xlu0 %2600
      %v2634 = vrot.slane %v2356, 2
      %v2635 = vrot.slane %v2357, 2
      %v2636 = vsel %vm761, %v2634, %v2635
      %v2637 = vrot.slane %v2358, 2
      %v2638 = vsel %vm761, %v2635, %v2637
      %v2639 = vrot.slane %v2359, 2
      %v2640 = vrot.slane %v2360, 2
      %v2641 = vsel %vm761, %v2639, %v2640
      %v2642 = vrot.slane %v2361, 2
      %v2643 = vsel %vm761, %v2640, %v2642
      %v2644 = vrot.slane %v2362, 2
      %v2645 = vrot.slane %v2363, 2
      %v2646 = vsel %vm761, %v2644, %v2645
      %v2647 = vrot.slane %v2364, 2
      %v2648 = vsel %vm761, %v2645, %v2647
      %v2649 = vrot.slane %v2365, 2
      %v2650 = vrot.slane %v2366, 2
      %v2651 = vsel %vm761, %v2649, %v2650
      %v2652 = vrot.slane %v2367, 2
      %v2653 = vsel %vm761, %v2650, %v2652
      %v2654 = vrot.slane %v2368, 2
      %v2655 = vrot.slane %v2369, 2
      %v2656 = vsel %vm761, %v2654, %v2655
      %v2657 = vrot.slane %v2370, 2
      %v2658 = vsel %vm761, %v2655, %v2657
      %v2659 = vrot.slane %v2371, 2
      %v2660 = vrot.slane %v2372, 2
      %v2661 = vsel %vm761, %v2659, %v2660
      %v2662 = vrot.slane %v2373, 2
      %v2663 = vsel %vm761, %v2660, %v2662
      %v2664 = vrot.slane %v2374, 2
      %v2665 = vrot.slane %v2375, 2
      %v2666 = vsel %vm761, %v2664, %v2665
      %v2667 = vrot.slane %v2376, 2
      %v2668 = vsel %vm761, %v2665, %v2667
      %v2669 = vrot.slane %v2377, 2
      %v2670 = vrot.slane %v2378, 2
      %v2671 = vsel %vm761, %v2669, %v2670
      %v2672 = vrot.slane %v2379, 2
      %v2673 = vsel %vm761, %v2670, %v2672
      %v2674 = vrot.slane %v2380, 2
      %v2675 = vrot.slane %v2381, 2
      %v2676 = vsel %vm761, %v2674, %v2675
      %v2677 = vrot.slane %v2382, 2
      %v2678 = vsel %vm761, %v2675, %v2677
      %v2679 = vrot.slane %v2383, 2
      %v2680 = vrot.slane %v2384, 2
      %v2681 = vsel %vm761, %v2679, %v2680
      %v2682 = vrot.slane %v2385, 2
      %v2683 = vsel %vm761, %v2680, %v2682
      %v2684 = vrot.slane %v2386, 2
      %v2685 = vrot.slane %v2387, 2
      %v2686 = vsel %vm761, %v2684, %v2685
      %v2687 = vrot.slane %v2388, 2
      %v2688 = vsel %vm761, %v2685, %v2687
      %v2689 = vrot.slane %v2389, 2
      %v2690 = vrot.slane %v2390, 2
      %v2691 = vsel %vm761, %v2689, %v2690
      %v2692 = vrot.slane %v2391, 2
      %v2693 = vsel %vm761, %v2690, %v2692
      %v2694 = vrot.slane %v2392, 2
      %v2695 = vrot.slane %v2393, 2
      %v2696 = vsel %vm761, %v2694, %v2695
      %v2697 = vrot.slane %v2394, 2
      %v2698 = vsel %vm761, %v2695, %v2697
      %v2699 = vrot.slane %v2395, 2
      %v2700 = vrot.slane %v2396, 2
      %v2701 = vsel %vm761, %v2699, %v2700
      %v2702 = vrot.slane %v2397, 2
      %v2703 = vsel %vm761, %v2700, %v2702
      %v2704 = vrot.slane %v2398, 2
      %v2705 = vrot.slane %v2399, 2
      %v2706 = vsel %vm761, %v2704, %v2705
      %v2707 = vrot.slane %v2400, 2
      %v2708 = vsel %vm761, %v2705, %v2707
      %v2709 = vrot.slane %v2401, 2
      %v2710 = vrot.slane %v2402, 2
      %v2711 = vsel %vm761, %v2709, %v2710
      %v2712 = vrot.slane %v2403, 2
      %v2713 = vsel %vm761, %v2710, %v2712
      %2714 = vrot.lane.b32.xlu0 %v2636, 8
      %v2715 = vpop.permute.xlu0 %2714
      %2716 = vrot.lane.b32.xlu0 %v2638, 8
      %v2717 = vpop.permute.xlu0 %2716
      %2718 = vrot.lane.b32.xlu0 %v2641, 8
      %v2719 = vpop.permute.xlu0 %2718
      %2720 = vrot.lane.b32.xlu0 %v2643, 8
      %v2721 = vpop.permute.xlu0 %2720
      %2722 = vrot.lane.b32.xlu0 %v2646, 8
      %v2723 = vpop.permute.xlu0 %2722
      %2724 = vrot.lane.b32.xlu0 %v2648, 8
      %v2725 = vpop.permute.xlu0 %2724
      %2726 = vrot.lane.b32.xlu0 %v2651, 8
      %v2727 = vpop.permute.xlu0 %2726
      %2728 = vrot.lane.b32.xlu0 %v2653, 8
      %v2729 = vpop.permute.xlu0 %2728
      %2730 = vrot.lane.b32.xlu0 %v2656, 8
      %v2731 = vpop.permute.xlu0 %2730
      %2732 = vrot.lane.b32.xlu0 %v2658, 8
      %v2733 = vpop.permute.xlu0 %2732
      %2734 = vrot.lane.b32.xlu0 %v2661, 8
      %v2735 = vpop.permute.xlu0 %2734
      %2736 = vrot.lane.b32.xlu0 %v2663, 8
      %v2737 = vpop.permute.xlu0 %2736
      %2738 = vrot.lane.b32.xlu0 %v2666, 8
      %v2739 = vpop.permute.xlu0 %2738
      %2740 = vrot.lane.b32.xlu0 %v2668, 8
      %v2741 = vpop.permute.xlu0 %2740
      %2742 = vrot.lane.b32.xlu0 %v2671, 8
      %v2743 = vpop.permute.xlu0 %2742
      %2744 = vrot.lane.b32.xlu0 %v2673, 8
      %v2745 = vpop.permute.xlu0 %2744
      %2746 = vrot.lane.b32.xlu0 %v2676, 8
      %v2747 = vpop.permute.xlu0 %2746
      %2748 = vrot.lane.b32.xlu0 %v2678, 8
      %v2749 = vpop.permute.xlu0 %2748
      %2750 = vrot.lane.b32.xlu0 %v2681, 8
      %v2751 = vpop.permute.xlu0 %2750
      %2752 = vrot.lane.b32.xlu0 %v2683, 8
      %v2753 = vpop.permute.xlu0 %2752
      %2754 = vrot.lane.b32.xlu0 %v2686, 8
      %v2755 = vpop.permute.xlu0 %2754
      %2756 = vrot.lane.b32.xlu0 %v2688, 8
      %v2757 = vpop.permute.xlu0 %2756
      %2758 = vrot.lane.b32.xlu0 %v2691, 8
      %v2759 = vpop.permute.xlu0 %2758
      %2760 = vrot.lane.b32.xlu0 %v2693, 8
      %v2761 = vpop.permute.xlu0 %2760
      %2762 = vrot.lane.b32.xlu0 %v2696, 8
      %v2763 = vpop.permute.xlu0 %2762
      %2764 = vrot.lane.b32.xlu0 %v2698, 8
      %v2765 = vpop.permute.xlu0 %2764
      %2766 = vrot.lane.b32.xlu0 %v2701, 8
      %v2767 = vpop.permute.xlu0 %2766
      %2768 = vrot.lane.b32.xlu0 %v2703, 8
      %v2769 = vpop.permute.xlu0 %2768
      %2770 = vrot.lane.b32.xlu0 %v2706, 8
      %v2771 = vpop.permute.xlu0 %2770
      %2772 = vrot.lane.b32.xlu0 %v2708, 8
      %v2773 = vpop.permute.xlu0 %2772
      %2774 = vrot.lane.b32.xlu0 %v2711, 8
      %v2775 = vpop.permute.xlu0 %2774
      %2776 = vrot.lane.b32.xlu0 %v2713, 8
      %v2777 = vpop.permute.xlu0 %2776
      %2812 = vrot.lane.b32.xlu0 %v2359, 12
      %v2813 = vpop.permute.xlu0 %2812
      %2814 = vrot.lane.b32.xlu0 %v2360, 12
      %v2815 = vpop.permute.xlu0 %2814
      %2816 = vrot.lane.b32.xlu0 %v2362, 12
      %v2817 = vpop.permute.xlu0 %2816
      %2818 = vrot.lane.b32.xlu0 %v2363, 12
      %v2819 = vpop.permute.xlu0 %2818
      %2820 = vrot.lane.b32.xlu0 %v2365, 12
      %v2821 = vpop.permute.xlu0 %2820
      %2822 = vrot.lane.b32.xlu0 %v2366, 12
      %v2823 = vpop.permute.xlu0 %2822
      %2824 = vrot.lane.b32.xlu0 %v2368, 12
      %v2825 = vpop.permute.xlu0 %2824
      %2826 = vrot.lane.b32.xlu0 %v2369, 12
      %v2827 = vpop.permute.xlu0 %2826
      %2828 = vrot.lane.b32.xlu0 %v2371, 12
      %v2829 = vpop.permute.xlu0 %2828
      %2830 = vrot.lane.b32.xlu0 %v2372, 12
      %v2831 = vpop.permute.xlu0 %2830
      %2832 = vrot.lane.b32.xlu0 %v2374, 12
      %v2833 = vpop.permute.xlu0 %2832
      %2834 = vrot.lane.b32.xlu0 %v2375, 12
      %v2835 = vpop.permute.xlu0 %2834
      %2836 = vrot.lane.b32.xlu0 %v2377, 12
      %v2837 = vpop.permute.xlu0 %2836
      %2838 = vrot.lane.b32.xlu0 %v2378, 12
      %v2839 = vpop.permute.xlu0 %2838
      %2840 = vrot.lane.b32.xlu0 %v2380, 12
      %v2841 = vpop.permute.xlu0 %2840
      %2842 = vrot.lane.b32.xlu0 %v2381, 12
      %v2843 = vpop.permute.xlu0 %2842
      %2844 = vrot.lane.b32.xlu0 %v2383, 12
      %v2845 = vpop.permute.xlu0 %2844
      %2846 = vrot.lane.b32.xlu0 %v2384, 12
      %v2847 = vpop.permute.xlu0 %2846
      %2848 = vrot.lane.b32.xlu0 %v2386, 12
      %v2849 = vpop.permute.xlu0 %2848
      %2850 = vrot.lane.b32.xlu0 %v2387, 12
      %v2851 = vpop.permute.xlu0 %2850
      %2852 = vrot.lane.b32.xlu0 %v2389, 12
      %v2853 = vpop.permute.xlu0 %2852
      %2854 = vrot.lane.b32.xlu0 %v2390, 12
      %v2855 = vpop.permute.xlu0 %2854
      %2856 = vrot.lane.b32.xlu0 %v2392, 12
      %v2857 = vpop.permute.xlu0 %2856
      %2858 = vrot.lane.b32.xlu0 %v2393, 12
      %v2859 = vpop.permute.xlu0 %2858
      %2860 = vrot.lane.b32.xlu0 %v2395, 12
      %v2861 = vpop.permute.xlu0 %2860
      %2862 = vrot.lane.b32.xlu0 %v2396, 12
      %v2863 = vpop.permute.xlu0 %2862
      %2864 = vrot.lane.b32.xlu0 %v2398, 12
      %v2865 = vpop.permute.xlu0 %2864
      %2866 = vrot.lane.b32.xlu0 %v2399, 12
      %v2867 = vpop.permute.xlu0 %2866
      %2868 = vrot.lane.b32.xlu0 %v2401, 12
      %v2869 = vpop.permute.xlu0 %2868
      %2870 = vrot.lane.b32.xlu0 %v2402, 12
      %v2871 = vpop.permute.xlu0 %2870
      %2872 = vrot.lane.b32.xlu0 %v2404, 12
      %v2873 = vpop.permute.xlu0 %2872
      %2874 = vrot.lane.b32.xlu0 %v2405, 12
      %v2875 = vpop.permute.xlu0 %2874
      %v2909 = vrot.slane %v2404, 1
      %v2910 = vrot.slane %v2405, 1
      %v2911 = vsel %vm584, %v2909, %v2910
      %v2912 = vrot.slane %v2406, 1
      %v2913 = vsel %vm584, %v2910, %v2912
      %2914 = vrot.lane.b32.xlu0 %v2465, 16
      %v2915 = vpop.permute.xlu0 %2914
      %2916 = vrot.lane.b32.xlu0 %v2467, 16
      %v2917 = vpop.permute.xlu0 %2916
      %2918 = vrot.lane.b32.xlu0 %v2470, 16
      %v2919 = vpop.permute.xlu0 %2918
      %2920 = vrot.lane.b32.xlu0 %v2472, 16
      %v2921 = vpop.permute.xlu0 %2920
      %2922 = vrot.lane.b32.xlu0 %v2475, 16
      %v2923 = vpop.permute.xlu0 %2922
      %2924 = vrot.lane.b32.xlu0 %v2477, 16
      %v2925 = vpop.permute.xlu0 %2924
      %2926 = vrot.lane.b32.xlu0 %v2480, 16
      %v2927 = vpop.permute.xlu0 %2926
      %2928 = vrot.lane.b32.xlu0 %v2482, 16
      %v2929 = vpop.permute.xlu0 %2928
      %2930 = vrot.lane.b32.xlu0 %v2485, 16
      %v2931 = vpop.permute.xlu0 %2930
      %2932 = vrot.lane.b32.xlu0 %v2487, 16
      %v2933 = vpop.permute.xlu0 %2932
      %2934 = vrot.lane.b32.xlu0 %v2490, 16
      %v2935 = vpop.permute.xlu0 %2934
      %2936 = vrot.lane.b32.xlu0 %v2492, 16
      %v2937 = vpop.permute.xlu0 %2936
      %2938 = vrot.lane.b32.xlu0 %v2495, 16
      %v2939 = vpop.permute.xlu0 %2938
      %2940 = vrot.lane.b32.xlu0 %v2497, 16
      %v2941 = vpop.permute.xlu0 %2940
      %2942 = vrot.lane.b32.xlu0 %v2500, 16
      %v2943 = vpop.permute.xlu0 %2942
      %2944 = vrot.lane.b32.xlu0 %v2502, 16
      %v2945 = vpop.permute.xlu0 %2944
      %2946 = vrot.lane.b32.xlu0 %v2505, 16
      %v2947 = vpop.permute.xlu0 %2946
      %2948 = vrot.lane.b32.xlu0 %v2507, 16
      %v2949 = vpop.permute.xlu0 %2948
      %2950 = vrot.lane.b32.xlu0 %v2510, 16
      %v2951 = vpop.permute.xlu0 %2950
      %2952 = vrot.lane.b32.xlu0 %v2512, 16
      %v2953 = vpop.permute.xlu0 %2952
      %2954 = vrot.lane.b32.xlu0 %v2515, 16
      %v2955 = vpop.permute.xlu0 %2954
      %2956 = vrot.lane.b32.xlu0 %v2517, 16
      %v2957 = vpop.permute.xlu0 %2956
      %2958 = vrot.lane.b32.xlu0 %v2520, 16
      %v2959 = vpop.permute.xlu0 %2958
      %2960 = vrot.lane.b32.xlu0 %v2522, 16
      %v2961 = vpop.permute.xlu0 %2960
      %2962 = vrot.lane.b32.xlu0 %v2525, 16
      %v2963 = vpop.permute.xlu0 %2962
      %2964 = vrot.lane.b32.xlu0 %v2527, 16
      %v2965 = vpop.permute.xlu0 %2964
      %2966 = vrot.lane.b32.xlu0 %v2530, 16
      %v2967 = vpop.permute.xlu0 %2966
      %2968 = vrot.lane.b32.xlu0 %v2532, 16
      %v2969 = vpop.permute.xlu0 %2968
      %2970 = vrot.lane.b32.xlu0 %v2535, 16
      %v2971 = vpop.permute.xlu0 %2970
      %2972 = vrot.lane.b32.xlu0 %v2537, 16
      %v2973 = vpop.permute.xlu0 %2972
      %2974 = vrot.lane.b32.xlu0 %v2911, 16
      %v2975 = vpop.permute.xlu0 %2974
      %2976 = vrot.lane.b32.xlu0 %v2913, 16
      %v2977 = vpop.permute.xlu0 %2976
      %v3010 = vrot.slane %v2404, 2
      %v3011 = vrot.slane %v2405, 2
      %v3012 = vsel %vm761, %v3010, %v3011
      %v3013 = vrot.slane %v2406, 2
      %v3014 = vsel %vm761, %v3011, %v3013
      %3015 = vrot.lane.b32.xlu0 %v2641, 20
      %v3016 = vpop.permute.xlu0 %3015
      %3017 = vrot.lane.b32.xlu0 %v2643, 20
      %v3018 = vpop.permute.xlu0 %3017
      %3019 = vrot.lane.b32.xlu0 %v2646, 20
      %v3020 = vpop.permute.xlu0 %3019
      %3021 = vrot.lane.b32.xlu0 %v2648, 20
      %v3022 = vpop.permute.xlu0 %3021
      %3023 = vrot.lane.b32.xlu0 %v2651, 20
      %v3024 = vpop.permute.xlu0 %3023
      %3025 = vrot.lane.b32.xlu0 %v2653, 20
      %v3026 = vpop.permute.xlu0 %3025
      %3027 = vrot.lane.b32.xlu0 %v2656, 20
      %v3028 = vpop.permute.xlu0 %3027
      %3029 = vrot.lane.b32.xlu0 %v2658, 20
      %v3030 = vpop.permute.xlu0 %3029
      %3031 = vrot.lane.b32.xlu0 %v2661, 20
      %v3032 = vpop.permute.xlu0 %3031
      %3033 = vrot.lane.b32.xlu0 %v2663, 20
      %v3034 = vpop.permute.xlu0 %3033
      %3035 = vrot.lane.b32.xlu0 %v2666, 20
      %v3036 = vpop.permute.xlu0 %3035
      %3037 = vrot.lane.b32.xlu0 %v2668, 20
      %v3038 = vpop.permute.xlu0 %3037
      %3039 = vrot.lane.b32.xlu0 %v2671, 20
      %v3040 = vpop.permute.xlu0 %3039
      %3041 = vrot.lane.b32.xlu0 %v2673, 20
      %v3042 = vpop.permute.xlu0 %3041
      %3043 = vrot.lane.b32.xlu0 %v2676, 20
      %v3044 = vpop.permute.xlu0 %3043
      %3045 = vrot.lane.b32.xlu0 %v2678, 20
      %v3046 = vpop.permute.xlu0 %3045
      %3047 = vrot.lane.b32.xlu0 %v2681, 20
      %v3048 = vpop.permute.xlu0 %3047
      %3049 = vrot.lane.b32.xlu0 %v2683, 20
      %v3050 = vpop.permute.xlu0 %3049
      %3051 = vrot.lane.b32.xlu0 %v2686, 20
      %v3052 = vpop.permute.xlu0 %3051
      %3053 = vrot.lane.b32.xlu0 %v2688, 20
      %v3054 = vpop.permute.xlu0 %3053
      %3055 = vrot.lane.b32.xlu0 %v2691, 20
      %v3056 = vpop.permute.xlu0 %3055
      %3057 = vrot.lane.b32.xlu0 %v2693, 20
      %v3058 = vpop.permute.xlu0 %3057
      %3059 = vrot.lane.b32.xlu0 %v2696, 20
      %v3060 = vpop.permute.xlu0 %3059
      %3061 = vrot.lane.b32.xlu0 %v2698, 20
      %v3062 = vpop.permute.xlu0 %3061
      %3063 = vrot.lane.b32.xlu0 %v2701, 20
      %v3064 = vpop.permute.xlu0 %3063
      %3065 = vrot.lane.b32.xlu0 %v2703, 20
      %v3066 = vpop.permute.xlu0 %3065
      %3067 = vrot.lane.b32.xlu0 %v2706, 20
      %v3068 = vpop.permute.xlu0 %3067
      %3069 = vrot.lane.b32.xlu0 %v2708, 20
      %v3070 = vpop.permute.xlu0 %3069
      %3071 = vrot.lane.b32.xlu0 %v2711, 20
      %v3072 = vpop.permute.xlu0 %3071
      %3073 = vrot.lane.b32.xlu0 %v2713, 20
      %v3074 = vpop.permute.xlu0 %3073
      %3075 = vrot.lane.b32.xlu0 %v3012, 20
      %v3076 = vpop.permute.xlu0 %3075
      %3077 = vrot.lane.b32.xlu0 %v3014, 20
      %v3078 = vpop.permute.xlu0 %3077
      %3113 = vrot.lane.b32.xlu0 %v2362, 24
      %v3114 = vpop.permute.xlu0 %3113
      %3115 = vrot.lane.b32.xlu0 %v2363, 24
      %v3116 = vpop.permute.xlu0 %3115
      %3117 = vrot.lane.b32.xlu0 %v2365, 24
      %v3118 = vpop.permute.xlu0 %3117
      %3119 = vrot.lane.b32.xlu0 %v2366, 24
      %v3120 = vpop.permute.xlu0 %3119
      %3121 = vrot.lane.b32.xlu0 %v2368, 24
      %v3122 = vpop.permute.xlu0 %3121
      %3123 = vrot.lane.b32.xlu0 %v2369, 24
      %v3124 = vpop.permute.xlu0 %3123
      %3125 = vrot.lane.b32.xlu0 %v2371, 24
      %v3126 = vpop.permute.xlu0 %3125
      %3127 = vrot.lane.b32.xlu0 %v2372, 24
      %v3128 = vpop.permute.xlu0 %3127
      %3129 = vrot.lane.b32.xlu0 %v2374, 24
      %v3130 = vpop.permute.xlu0 %3129
      %3131 = vrot.lane.b32.xlu0 %v2375, 24
      %v3132 = vpop.permute.xlu0 %3131
      %3133 = vrot.lane.b32.xlu0 %v2377, 24
      %v3134 = vpop.permute.xlu0 %3133
      %3135 = vrot.lane.b32.xlu0 %v2378, 24
      %v3136 = vpop.permute.xlu0 %3135
      %3137 = vrot.lane.b32.xlu0 %v2380, 24
      %v3138 = vpop.permute.xlu0 %3137
      %3139 = vrot.lane.b32.xlu0 %v2381, 24
      %v3140 = vpop.permute.xlu0 %3139
      %3141 = vrot.lane.b32.xlu0 %v2383, 24
      %v3142 = vpop.permute.xlu0 %3141
      %3143 = vrot.lane.b32.xlu0 %v2384, 24
      %v3144 = vpop.permute.xlu0 %3143
      %3145 = vrot.lane.b32.xlu0 %v2386, 24
      %v3146 = vpop.permute.xlu0 %3145
      %3147 = vrot.lane.b32.xlu0 %v2387, 24
      %v3148 = vpop.permute.xlu0 %3147
      %3149 = vrot.lane.b32.xlu0 %v2389, 24
      %v3150 = vpop.permute.xlu0 %3149
      %3151 = vrot.lane.b32.xlu0 %v2390, 24
      %v3152 = vpop.permute.xlu0 %3151
      %3153 = vrot.lane.b32.xlu0 %v2392, 24
      %v3154 = vpop.permute.xlu0 %3153
      %3155 = vrot.lane.b32.xlu0 %v2393, 24
      %v3156 = vpop.permute.xlu0 %3155
      %3157 = vrot.lane.b32.xlu0 %v2395, 24
      %v3158 = vpop.permute.xlu0 %3157
      %3159 = vrot.lane.b32.xlu0 %v2396, 24
      %v3160 = vpop.permute.xlu0 %3159
      %3161 = vrot.lane.b32.xlu0 %v2398, 24
      %v3162 = vpop.permute.xlu0 %3161
      %3163 = vrot.lane.b32.xlu0 %v2399, 24
      %v3164 = vpop.permute.xlu0 %3163
      %3165 = vrot.lane.b32.xlu0 %v2401, 24
      %v3166 = vpop.permute.xlu0 %3165
      %3167 = vrot.lane.b32.xlu0 %v2402, 24
      %v3168 = vpop.permute.xlu0 %3167
      %3169 = vrot.lane.b32.xlu0 %v2404, 24
      %v3170 = vpop.permute.xlu0 %3169
      %3171 = vrot.lane.b32.xlu0 %v2405, 24
      %v3172 = vpop.permute.xlu0 %3171
      %3173 = vrot.lane.b32.xlu0 %v2407, 24
      %v3174 = vpop.permute.xlu0 %3173
      %3175 = vrot.lane.b32.xlu0 %v2408, 24
      %v3176 = vpop.permute.xlu0 %3175
      %v3210 = vrot.slane %v2407, 1
      %v3211 = vrot.slane %v2408, 1
      %v3212 = vsel %vm584, %v3210, %v3211
      %v3213 = vrot.slane %v2409, 1
      %v3214 = vsel %vm584, %v3211, %v3213
      %3215 = vrot.lane.b32.xlu0 %v2470, 28
      %v3216 = vpop.permute.xlu0 %3215
      %3217 = vrot.lane.b32.xlu0 %v2472, 28
      %v3218 = vpop.permute.xlu0 %3217
      %3219 = vrot.lane.b32.xlu0 %v2475, 28
      %v3220 = vpop.permute.xlu0 %3219
      %3221 = vrot.lane.b32.xlu0 %v2477, 28
      %v3222 = vpop.permute.xlu0 %3221
      %3223 = vrot.lane.b32.xlu0 %v2480, 28
      %v3224 = vpop.permute.xlu0 %3223
      %3225 = vrot.lane.b32.xlu0 %v2482, 28
      %v3226 = vpop.permute.xlu0 %3225
      %3227 = vrot.lane.b32.xlu0 %v2485, 28
      %v3228 = vpop.permute.xlu0 %3227
      %3229 = vrot.lane.b32.xlu0 %v2487, 28
      %v3230 = vpop.permute.xlu0 %3229
      %3231 = vrot.lane.b32.xlu0 %v2490, 28
      %v3232 = vpop.permute.xlu0 %3231
      %3233 = vrot.lane.b32.xlu0 %v2492, 28
      %v3234 = vpop.permute.xlu0 %3233
      %3235 = vrot.lane.b32.xlu0 %v2495, 28
      %v3236 = vpop.permute.xlu0 %3235
      %3237 = vrot.lane.b32.xlu0 %v2497, 28
      %v3238 = vpop.permute.xlu0 %3237
      %3239 = vrot.lane.b32.xlu0 %v2500, 28
      %v3240 = vpop.permute.xlu0 %3239
      %3241 = vrot.lane.b32.xlu0 %v2502, 28
      %v3242 = vpop.permute.xlu0 %3241
      %3243 = vrot.lane.b32.xlu0 %v2505, 28
      %v3244 = vpop.permute.xlu0 %3243
      %3245 = vrot.lane.b32.xlu0 %v2507, 28
      %v3246 = vpop.permute.xlu0 %3245
      %3247 = vrot.lane.b32.xlu0 %v2510, 28
      %v3248 = vpop.permute.xlu0 %3247
      %3249 = vrot.lane.b32.xlu0 %v2512, 28
      %v3250 = vpop.permute.xlu0 %3249
      %3251 = vrot.lane.b32.xlu0 %v2515, 28
      %v3252 = vpop.permute.xlu0 %3251
      %3253 = vrot.lane.b32.xlu0 %v2517, 28
      %v3254 = vpop.permute.xlu0 %3253
      %3255 = vrot.lane.b32.xlu0 %v2520, 28
      %v3256 = vpop.permute.xlu0 %3255
      %3257 = vrot.lane.b32.xlu0 %v2522, 28
      %v3258 = vpop.permute.xlu0 %3257
      %3259 = vrot.lane.b32.xlu0 %v2525, 28
      %v3260 = vpop.permute.xlu0 %3259
      %3261 = vrot.lane.b32.xlu0 %v2527, 28
      %v3262 = vpop.permute.xlu0 %3261
      %3263 = vrot.lane.b32.xlu0 %v2530, 28
      %v3264 = vpop.permute.xlu0 %3263
      %3265 = vrot.lane.b32.xlu0 %v2532, 28
      %v3266 = vpop.permute.xlu0 %3265
      %3267 = vrot.lane.b32.xlu0 %v2535, 28
      %v3268 = vpop.permute.xlu0 %3267
      %3269 = vrot.lane.b32.xlu0 %v2537, 28
      %v3270 = vpop.permute.xlu0 %3269
      %3271 = vrot.lane.b32.xlu0 %v2911, 28
      %v3272 = vpop.permute.xlu0 %3271
      %3273 = vrot.lane.b32.xlu0 %v2913, 28
      %v3274 = vpop.permute.xlu0 %3273
      %3275 = vrot.lane.b32.xlu0 %v3212, 28
      %v3276 = vpop.permute.xlu0 %3275
      %3277 = vrot.lane.b32.xlu0 %v3214, 28
      %v3278 = vpop.permute.xlu0 %3277
      %v3311 = vrot.slane %v2407, 2
      %v3312 = vrot.slane %v2408, 2
      %v3313 = vsel %vm761, %v3311, %v3312
      %v3314 = vrot.slane %v2409, 2
      %v3315 = vsel %vm761, %v3312, %v3314
      %3316 = vrot.lane.b32.xlu0 %v2646, 32
      %v3317 = vpop.permute.xlu0 %3316
      %3318 = vrot.lane.b32.xlu0 %v2648, 32
      %v3319 = vpop.permute.xlu0 %3318
      %3320 = vrot.lane.b32.xlu0 %v2651, 32
      %v3321 = vpop.permute.xlu0 %3320
      %3322 = vrot.lane.b32.xlu0 %v2653, 32
      %v3323 = vpop.permute.xlu0 %3322
      %3324 = vrot.lane.b32.xlu0 %v2656, 32
      %v3325 = vpop.permute.xlu0 %3324
      %3326 = vrot.lane.b32.xlu0 %v2658, 32
      %v3327 = vpop.permute.xlu0 %3326
      %3328 = vrot.lane.b32.xlu0 %v2661, 32
      %v3329 = vpop.permute.xlu0 %3328
      %3330 = vrot.lane.b32.xlu0 %v2663, 32
      %v3331 = vpop.permute.xlu0 %3330
      %3332 = vrot.lane.b32.xlu0 %v2666, 32
      %v3333 = vpop.permute.xlu0 %3332
      %3334 = vrot.lane.b32.xlu0 %v2668, 32
      %v3335 = vpop.permute.xlu0 %3334
      %3336 = vrot.lane.b32.xlu0 %v2671, 32
      %v3337 = vpop.permute.xlu0 %3336
      %3338 = vrot.lane.b32.xlu0 %v2673, 32
      %v3339 = vpop.permute.xlu0 %3338
      %3340 = vrot.lane.b32.xlu0 %v2676, 32
      %v3341 = vpop.permute.xlu0 %3340
      %3342 = vrot.lane.b32.xlu0 %v2678, 32
      %v3343 = vpop.permute.xlu0 %3342
      %3344 = vrot.lane.b32.xlu0 %v2681, 32
      %v3345 = vpop.permute.xlu0 %3344
      %3346 = vrot.lane.b32.xlu0 %v2683, 32
      %v3347 = vpop.permute.xlu0 %3346
      %3348 = vrot.lane.b32.xlu0 %v2686, 32
      %v3349 = vpop.permute.xlu0 %3348
      %3350 = vrot.lane.b32.xlu0 %v2688, 32
      %v3351 = vpop.permute.xlu0 %3350
      %3352 = vrot.lane.b32.xlu0 %v2691, 32
      %v3353 = vpop.permute.xlu0 %3352
      %3354 = vrot.lane.b32.xlu0 %v2693, 32
      %v3355 = vpop.permute.xlu0 %3354
      %3356 = vrot.lane.b32.xlu0 %v2696, 32
      %v3357 = vpop.permute.xlu0 %3356
      %3358 = vrot.lane.b32.xlu0 %v2698, 32
      %v3359 = vpop.permute.xlu0 %3358
      %3360 = vrot.lane.b32.xlu0 %v2701, 32
      %v3361 = vpop.permute.xlu0 %3360
      %3362 = vrot.lane.b32.xlu0 %v2703, 32
      %v3363 = vpop.permute.xlu0 %3362
      %3364 = vrot.lane.b32.xlu0 %v2706, 32
      %v3365 = vpop.permute.xlu0 %3364
      %3366 = vrot.lane.b32.xlu0 %v2708, 32
      %v3367 = vpop.permute.xlu0 %3366
      %3368 = vrot.lane.b32.xlu0 %v2711, 32
      %v3369 = vpop.permute.xlu0 %3368
      %3370 = vrot.lane.b32.xlu0 %v2713, 32
      %v3371 = vpop.permute.xlu0 %3370
      %3372 = vrot.lane.b32.xlu0 %v3012, 32
      %v3373 = vpop.permute.xlu0 %3372
      %3374 = vrot.lane.b32.xlu0 %v3014, 32
      %v3375 = vpop.permute.xlu0 %3374
      %3376 = vrot.lane.b32.xlu0 %v3313, 32
      %v3377 = vpop.permute.xlu0 %3376
      %3378 = vrot.lane.b32.xlu0 %v3315, 32
      %v3379 = vpop.permute.xlu0 %3378
      %v3412 = vsel %vm1540, %v2356, %v2539
      %v3413 = vsel %vm1540, %v2357, %v2541
      %v3414 = vsel %vm1540, %v2359, %v2543
      %v3415 = vsel %vm1540, %v2360, %v2545
      %v3416 = vsel %vm1540, %v2362, %v2547
      %v3417 = vsel %vm1540, %v2363, %v2549
      %v3418 = vsel %vm1540, %v2365, %v2551
      %v3419 = vsel %vm1540, %v2366, %v2553
      %v3420 = vsel %vm1540, %v2368, %v2555
      %v3421 = vsel %vm1540, %v2369, %v2557
      %v3422 = vsel %vm1540, %v2371, %v2559
      %v3423 = vsel %vm1540, %v2372, %v2561
      %v3424 = vsel %vm1540, %v2374, %v2563
      %v3425 = vsel %vm1540, %v2375, %v2565
      %v3426 = vsel %vm1540, %v2377, %v2567
      %v3427 = vsel %vm1540, %v2378, %v2569
      %v3428 = vsel %vm1540, %v2380, %v2571
      %v3429 = vsel %vm1540, %v2381, %v2573
      %v3430 = vsel %vm1540, %v2383, %v2575
      %v3431 = vsel %vm1540, %v2384, %v2577
      %v3432 = vsel %vm1540, %v2386, %v2579
      %v3433 = vsel %vm1540, %v2387, %v2581
      %v3434 = vsel %vm1540, %v2389, %v2583
      %v3435 = vsel %vm1540, %v2390, %v2585
      %v3436 = vsel %vm1540, %v2392, %v2587
      %v3437 = vsel %vm1540, %v2393, %v2589
      %v3438 = vsel %vm1540, %v2395, %v2591
      %v3439 = vsel %vm1540, %v2396, %v2593
      %v3440 = vsel %vm1540, %v2398, %v2595
      %v3441 = vsel %vm1540, %v2399, %v2597
      %v3442 = vsel %vm1540, %v2401, %v2599
      %v3443 = vsel %vm1540, %v2402, %v2601
      %v3444 = vsel %vm1573, %v3412, %v2715
      %v3445 = vsel %vm1573, %v3413, %v2717
      %v3446 = vsel %vm1573, %v3414, %v2719
      %v3447 = vsel %vm1573, %v3415, %v2721
      %v3448 = vsel %vm1573, %v3416, %v2723
      %v3449 = vsel %vm1573, %v3417, %v2725
      %v3450 = vsel %vm1573, %v3418, %v2727
      %v3451 = vsel %vm1573, %v3419, %v2729
      %v3452 = vsel %vm1573, %v3420, %v2731
      %v3453 = vsel %vm1573, %v3421, %v2733
      %v3454 = vsel %vm1573, %v3422, %v2735
      %v3455 = vsel %vm1573, %v3423, %v2737
      %v3456 = vsel %vm1573, %v3424, %v2739
      %v3457 = vsel %vm1573, %v3425, %v2741
      %v3458 = vsel %vm1573, %v3426, %v2743
      %v3459 = vsel %vm1573, %v3427, %v2745
      %v3460 = vsel %vm1573, %v3428, %v2747
      %v3461 = vsel %vm1573, %v3429, %v2749
      %v3462 = vsel %vm1573, %v3430, %v2751
      %v3463 = vsel %vm1573, %v3431, %v2753
      %v3464 = vsel %vm1573, %v3432, %v2755
      %v3465 = vsel %vm1573, %v3433, %v2757
      %v3466 = vsel %vm1573, %v3434, %v2759
      %v3467 = vsel %vm1573, %v3435, %v2761
      %v3468 = vsel %vm1573, %v3436, %v2763
      %v3469 = vsel %vm1573, %v3437, %v2765
      %v3470 = vsel %vm1573, %v3438, %v2767
      %v3471 = vsel %vm1573, %v3439, %v2769
      %v3472 = vsel %vm1573, %v3440, %v2771
      %v3473 = vsel %vm1573, %v3441, %v2773
      %v3474 = vsel %vm1573, %v3442, %v2775
      %v3475 = vsel %vm1573, %v3443, %v2777
      %v3476 = vsel %vm1606, %v3444, %v2813
      %v3477 = vsel %vm1606, %v3445, %v2815
      %v3478 = vsel %vm1606, %v3446, %v2817
      %v3479 = vsel %vm1606, %v3447, %v2819
      %v3480 = vsel %vm1606, %v3448, %v2821
      %v3481 = vsel %vm1606, %v3449, %v2823
      %v3482 = vsel %vm1606, %v3450, %v2825
      %v3483 = vsel %vm1606, %v3451, %v2827
      %v3484 = vsel %vm1606, %v3452, %v2829
      %v3485 = vsel %vm1606, %v3453, %v2831
      %v3486 = vsel %vm1606, %v3454, %v2833
      %v3487 = vsel %vm1606, %v3455, %v2835
      %v3488 = vsel %vm1606, %v3456, %v2837
      %v3489 = vsel %vm1606, %v3457, %v2839
      %v3490 = vsel %vm1606, %v3458, %v2841
      %v3491 = vsel %vm1606, %v3459, %v2843
      %v3492 = vsel %vm1606, %v3460, %v2845
      %v3493 = vsel %vm1606, %v3461, %v2847
      %v3494 = vsel %vm1606, %v3462, %v2849
      %v3495 = vsel %vm1606, %v3463, %v2851
      %v3496 = vsel %vm1606, %v3464, %v2853
      %v3497 = vsel %vm1606, %v3465, %v2855
      %v3498 = vsel %vm1606, %v3466, %v2857
      %v3499 = vsel %vm1606, %v3467, %v2859
      %v3500 = vsel %vm1606, %v3468, %v2861
      %v3501 = vsel %vm1606, %v3469, %v2863
      %v3502 = vsel %vm1606, %v3470, %v2865
      %v3503 = vsel %vm1606, %v3471, %v2867
      %v3504 = vsel %vm1606, %v3472, %v2869
      %v3505 = vsel %vm1606, %v3473, %v2871
      %v3506 = vsel %vm1606, %v3474, %v2873
      %v3507 = vsel %vm1606, %v3475, %v2875
      %v3508 = vsel %vm1639, %v3476, %v2915
      %v3509 = vsel %vm1639, %v3477, %v2917
      %v3510 = vsel %vm1639, %v3478, %v2919
      %v3511 = vsel %vm1639, %v3479, %v2921
      %v3512 = vsel %vm1639, %v3480, %v2923
      %v3513 = vsel %vm1639, %v3481, %v2925
      %v3514 = vsel %vm1639, %v3482, %v2927
      %v3515 = vsel %vm1639, %v3483, %v2929
      %v3516 = vsel %vm1639, %v3484, %v2931
      %v3517 = vsel %vm1639, %v3485, %v2933
      %v3518 = vsel %vm1639, %v3486, %v2935
      %v3519 = vsel %vm1639, %v3487, %v2937
      %v3520 = vsel %vm1639, %v3488, %v2939
      %v3521 = vsel %vm1639, %v3489, %v2941
      %v3522 = vsel %vm1639, %v3490, %v2943
      %v3523 = vsel %vm1639, %v3491, %v2945
      %v3524 = vsel %vm1639, %v3492, %v2947
      %v3525 = vsel %vm1639, %v3493, %v2949
      %v3526 = vsel %vm1639, %v3494, %v2951
      %v3527 = vsel %vm1639, %v3495, %v2953
      %v3528 = vsel %vm1639, %v3496, %v2955
      %v3529 = vsel %vm1639, %v3497, %v2957
      %v3530 = vsel %vm1639, %v3498, %v2959
      %v3531 = vsel %vm1639, %v3499, %v2961
      %v3532 = vsel %vm1639, %v3500, %v2963
      %v3533 = vsel %vm1639, %v3501, %v2965
      %v3534 = vsel %vm1639, %v3502, %v2967
      %v3535 = vsel %vm1639, %v3503, %v2969
      %v3536 = vsel %vm1639, %v3504, %v2971
      %v3537 = vsel %vm1639, %v3505, %v2973
      %v3538 = vsel %vm1639, %v3506, %v2975
      %v3539 = vsel %vm1639, %v3507, %v2977
      %v3540 = vsel %vm1672, %v3508, %v3016
      %v3541 = vsel %vm1672, %v3509, %v3018
      %v3542 = vsel %vm1672, %v3510, %v3020
      %v3543 = vsel %vm1672, %v3511, %v3022
      %v3544 = vsel %vm1672, %v3512, %v3024
      %v3545 = vsel %vm1672, %v3513, %v3026
      %v3546 = vsel %vm1672, %v3514, %v3028
      %v3547 = vsel %vm1672, %v3515, %v3030
      %v3548 = vsel %vm1672, %v3516, %v3032
      %v3549 = vsel %vm1672, %v3517, %v3034
      %v3550 = vsel %vm1672, %v3518, %v3036
      %v3551 = vsel %vm1672, %v3519, %v3038
      %v3552 = vsel %vm1672, %v3520, %v3040
      %v3553 = vsel %vm1672, %v3521, %v3042
      %v3554 = vsel %vm1672, %v3522, %v3044
      %v3555 = vsel %vm1672, %v3523, %v3046
      %v3556 = vsel %vm1672, %v3524, %v3048
      %v3557 = vsel %vm1672, %v3525, %v3050
      %v3558 = vsel %vm1672, %v3526, %v3052
      %v3559 = vsel %vm1672, %v3527, %v3054
      %v3560 = vsel %vm1672, %v3528, %v3056
      %v3561 = vsel %vm1672, %v3529, %v3058
      %v3562 = vsel %vm1672, %v3530, %v3060
      %v3563 = vsel %vm1672, %v3531, %v3062
      %v3564 = vsel %vm1672, %v3532, %v3064
      %v3565 = vsel %vm1672, %v3533, %v3066
      %v3566 = vsel %vm1672, %v3534, %v3068
      %v3567 = vsel %vm1672, %v3535, %v3070
      %v3568 = vsel %vm1672, %v3536, %v3072
      %v3569 = vsel %vm1672, %v3537, %v3074
      %v3570 = vsel %vm1672, %v3538, %v3076
      %v3571 = vsel %vm1672, %v3539, %v3078
      %v3572 = vsel %vm1705, %v3540, %v3114
      %v3573 = vsel %vm1705, %v3541, %v3116
      %v3574 = vsel %vm1705, %v3542, %v3118
      %v3575 = vsel %vm1705, %v3543, %v3120
      %v3576 = vsel %vm1705, %v3544, %v3122
      %v3577 = vsel %vm1705, %v3545, %v3124
      %v3578 = vsel %vm1705, %v3546, %v3126
      %v3579 = vsel %vm1705, %v3547, %v3128
      %v3580 = vsel %vm1705, %v3548, %v3130
      %v3581 = vsel %vm1705, %v3549, %v3132
      %v3582 = vsel %vm1705, %v3550, %v3134
      %v3583 = vsel %vm1705, %v3551, %v3136
      %v3584 = vsel %vm1705, %v3552, %v3138
      %v3585 = vsel %vm1705, %v3553, %v3140
      %v3586 = vsel %vm1705, %v3554, %v3142
      %v3587 = vsel %vm1705, %v3555, %v3144
      %v3588 = vsel %vm1705, %v3556, %v3146
      %v3589 = vsel %vm1705, %v3557, %v3148
      %v3590 = vsel %vm1705, %v3558, %v3150
      %v3591 = vsel %vm1705, %v3559, %v3152
      %v3592 = vsel %vm1705, %v3560, %v3154
      %v3593 = vsel %vm1705, %v3561, %v3156
      %v3594 = vsel %vm1705, %v3562, %v3158
      %v3595 = vsel %vm1705, %v3563, %v3160
      %v3596 = vsel %vm1705, %v3564, %v3162
      %v3597 = vsel %vm1705, %v3565, %v3164
      %v3598 = vsel %vm1705, %v3566, %v3166
      %v3599 = vsel %vm1705, %v3567, %v3168
      %v3600 = vsel %vm1705, %v3568, %v3170
      %v3601 = vsel %vm1705, %v3569, %v3172
      %v3602 = vsel %vm1705, %v3570, %v3174
      %v3603 = vsel %vm1705, %v3571, %v3176
      %v3604 = vsel %vm1738, %v3572, %v3216
      %v3605 = vsel %vm1738, %v3573, %v3218
      %v3606 = vsel %vm1738, %v3574, %v3220
      %v3607 = vsel %vm1738, %v3575, %v3222
      %v3608 = vsel %vm1738, %v3576, %v3224
      %v3609 = vsel %vm1738, %v3577, %v3226
      %v3610 = vsel %vm1738, %v3578, %v3228
      %v3611 = vsel %vm1738, %v3579, %v3230
      %v3612 = vsel %vm1738, %v3580, %v3232
      %v3613 = vsel %vm1738, %v3581, %v3234
      %v3614 = vsel %vm1738, %v3582, %v3236
      %v3615 = vsel %vm1738, %v3583, %v3238
      %v3616 = vsel %vm1738, %v3584, %v3240
      %v3617 = vsel %vm1738, %v3585, %v3242
      %v3618 = vsel %vm1738, %v3586, %v3244
      %v3619 = vsel %vm1738, %v3587, %v3246
      %v3620 = vsel %vm1738, %v3588, %v3248
      %v3621 = vsel %vm1738, %v3589, %v3250
      %v3622 = vsel %vm1738, %v3590, %v3252
      %v3623 = vsel %vm1738, %v3591, %v3254
      %v3624 = vsel %vm1738, %v3592, %v3256
      %v3625 = vsel %vm1738, %v3593, %v3258
      %v3626 = vsel %vm1738, %v3594, %v3260
      %v3627 = vsel %vm1738, %v3595, %v3262
      %v3628 = vsel %vm1738, %v3596, %v3264
      %v3629 = vsel %vm1738, %v3597, %v3266
      %v3630 = vsel %vm1738, %v3598, %v3268
      %v3631 = vsel %vm1738, %v3599, %v3270
      %v3632 = vsel %vm1738, %v3600, %v3272
      %v3633 = vsel %vm1738, %v3601, %v3274
      %v3634 = vsel %vm1738, %v3602, %v3276
      %v3635 = vsel %vm1738, %v3603, %v3278
      %v3636 = vsel %vm1771, %v3604, %v3317
      %v3637 = vsel %vm1771, %v3605, %v3319
      %v3638 = vsel %vm1771, %v3606, %v3321
      %v3639 = vsel %vm1771, %v3607, %v3323
      %v3640 = vsel %vm1771, %v3608, %v3325
      %v3641 = vsel %vm1771, %v3609, %v3327
      %v3642 = vsel %vm1771, %v3610, %v3329
      %v3643 = vsel %vm1771, %v3611, %v3331
      %v3644 = vsel %vm1771, %v3612, %v3333
      %v3645 = vsel %vm1771, %v3613, %v3335
      %v3646 = vsel %vm1771, %v3614, %v3337
      %v3647 = vsel %vm1771, %v3615, %v3339
      %v3648 = vsel %vm1771, %v3616, %v3341
      %v3649 = vsel %vm1771, %v3617, %v3343
      %v3650 = vsel %vm1771, %v3618, %v3345
      %v3651 = vsel %vm1771, %v3619, %v3347
      %v3652 = vsel %vm1771, %v3620, %v3349
      %v3653 = vsel %vm1771, %v3621, %v3351
      %v3654 = vsel %vm1771, %v3622, %v3353
      %v3655 = vsel %vm1771, %v3623, %v3355
      %v3656 = vsel %vm1771, %v3624, %v3357
      %v3657 = vsel %vm1771, %v3625, %v3359
      %v3658 = vsel %vm1771, %v3626, %v3361
      %v3659 = vsel %vm1771, %v3627, %v3363
      %v3660 = vsel %vm1771, %v3628, %v3365
      %v3661 = vsel %vm1771, %v3629, %v3367
      %v3662 = vsel %vm1771, %v3630, %v3369
      %v3663 = vsel %vm1771, %v3631, %v3371
      %v3664 = vsel %vm1771, %v3632, %v3373
      %v3665 = vsel %vm1771, %v3633, %v3375
      %v3666 = vsel %vm1771, %v3634, %v3377
      %v3667 = vsel %vm1771, %v3635, %v3379
      %v3668 = vld [vmem:[%s6] sm:$0xff]
      %v3669 = vld [vmem:[%s6 + $0x8] sm:$0xff]
      %v3670 = vld [vmem:[%s6 + $0x10] sm:$0xff]
      %v3671 = vld [vmem:[%s6 + $0x18] sm:$0xff]
      %v3672 = vld [vmem:[%s6 + $0x20] sm:$0xf]
      %v3673 = vld [vmem:[%s7] sm:$0x1]
      %v3675 = vlaneseq
      %v3676 = vshrl.u32 %v3675, 7
      %v3677 = vsub.s32 0, %v3676
      %v3678 = vrot.slane %v3673, %v3677
      %v3681 = vsel %vm1809, %v3636, 0
      %v3684 = vsel %vm1809, %v3637, 0
      %v3687 = vsel %vm1809, %v3638, 0
      %v3690 = vsel %vm1809, %v3639, 0
      %v3693 = vsel %vm1809, %v3640, 0
      %v3696 = vsel %vm1809, %v3641, 0
      %v3699 = vsel %vm1809, %v3642, 0
      %v3702 = vsel %vm1809, %v3643, 0
      %v3705 = vsel %vm1809, %v3644, 0
      %v3708 = vsel %vm1809, %v3645, 0
      %v3711 = vsel %vm1809, %v3646, 0
      %v3714 = vsel %vm1809, %v3647, 0
      %v3717 = vsel %vm1809, %v3648, 0
      %v3720 = vsel %vm1809, %v3649, 0
      %v3723 = vsel %vm1809, %v3650, 0
      %v3726 = vsel %vm1809, %v3651, 0
      %v3729 = vsel %vm1809, %v3652, 0
      %v3732 = vsel %vm1809, %v3653, 0
      %v3735 = vsel %vm1809, %v3654, 0
      %v3738 = vsel %vm1809, %v3655, 0
      %v3741 = vsel %vm1809, %v3656, 0
      %v3744 = vsel %vm1809, %v3657, 0
      %v3747 = vsel %vm1809, %v3658, 0
      %v3750 = vsel %vm1809, %v3659, 0
      %v3753 = vsel %vm1809, %v3660, 0
      %v3756 = vsel %vm1809, %v3661, 0
      %v3759 = vsel %vm1809, %v3662, 0
      %v3762 = vsel %vm1809, %v3663, 0
      %v3765 = vsel %vm1809, %v3664, 0
      %v3768 = vsel %vm1809, %v3665, 0
      %v3771 = vsel %vm1809, %v3666, 0
      %v3774 = vsel %vm1809, %v3667, 0
      %v3777 = vsel %vm1906, %v3672, 0
      %3779 = vmatprep.subr.mxu0 0.0
      %3780 = vmatpush1.msra.mxu0 0.0
      %3781 = vmatprep.subr.mxu0 0.0
      %3782 = vmatpush1.msra.mxu0 0.0
      %3783 = vmatprep.subr.mxu0 0.0
      %3784 = vmatpush1.msra.mxu0 0.0
      %3785 = vmatprep.subr.mxu0 0.0
      %3786 = vmatpush1.msra.mxu0 0.0
      %3787 = vmatprep.subr.mxu0 0.0
      %3788 = vmatpush1.msra.mxu0 0.0
      %3789 = vmatprep.subr.mxu0 0.0
      %3790 = vmatpush1.msra.mxu0 0.0
      %3791 = vmatprep.subr.mxu0 0.0
      %3792 = vmatpush1.msra.mxu0 0.0
      %3793 = vmatprep.subr.mxu0 0.0
      %3794 = vmatpush1.msra.mxu0 0.0
      %3795 = vmatprep.subr.mxu0 0.0
      %3796 = vmatpush1.msra.mxu0 0.0
      %3797 = vmatprep.subr.mxu0 0.0
      %3798 = vmatpush1.msra.mxu0 0.0
      %3799 = vmatprep.subr.mxu0 0.0
      %3800 = vmatpush1.msra.mxu0 0.0
      %3801 = vmatprep.subr.mxu0 0.0
      %3802 = vmatpush1.msra.mxu0 %v3777
      %3803 = vmatprep.subr.mxu0 0.0
      %3804 = vmatpush1.msra.mxu0 %v3671
      %3805 = vmatprep.subr.mxu0 0.0
      %3806 = vmatpush1.msra.mxu0 %v3670
      %3807 = vmatprep.subr.mxu0 0.0
      %3808 = vmatpush1.msra.mxu0 %v3669
      %3809 = vmatprep.subr.mxu0 0.0
      %3810 = vmatpush1.msra.mxu0 %v3668
      %3811 = vmatprep.subr.mxu0 0.0
      %3812 = vmatpush2.msra.mxu0 0.0
      %3813 = vmatprep.subr.mxu0 0.0
      %3814 = vmatpush2.msra.mxu0 0.0
      %3815 = vmatprep.subr.mxu0 0.0
      %3816 = vmatpush2.msra.mxu0 0.0
      %3817 = vmatprep.subr.mxu0 0.0
      %3818 = vmatpush2.msra.mxu0 0.0
      %3819 = vmatprep.subr.mxu0 0.0
      %3820 = vmatpush2.msra.mxu0 0.0
      %3821 = vmatprep.subr.mxu0 0.0
      %3822 = vmatpush2.msra.mxu0 0.0
      %3823 = vmatprep.subr.mxu0 0.0
      %3824 = vmatpush2.msra.mxu0 0.0
      %3825 = vmatprep.subr.mxu0 0.0
      %3826 = vmatpush2.msra.mxu0 0.0
      %3827 = vmatprep.subr.mxu0 0.0
      %3828 = vmatpush2.msra.mxu0 0.0
      %3829 = vmatprep.subr.mxu0 0.0
      %3830 = vmatpush2.msra.mxu0 0.0
      %3831 = vmatprep.subr.mxu0 0.0
      %3832 = vmatpush2.msra.mxu0 0.0
      %3833 = vmatprep.subr.mxu0 0.0
      %3834 = vmatpush2.msra.mxu0 0.0
      %3835 = vmatprep.subr.mxu0 0.0
      %3836 = vmatpush2.msra.mxu0 0.0
      %3837 = vmatprep.subr.mxu0 0.0
      %3838 = vmatpush2.msra.mxu0 0.0
      %3839 = vmatprep.subr.mxu0 0.0
      %3840 = vmatpush2.msra.mxu0 0.0
      %3841 = vmatprep.subr.mxu0 0.0
      %3842 = vmatpush2.msra.mxu0 0.0
      %3843 = vmatprep.mubr.f32.mxu0 0.0
      %3844 = vmatmul.mubr.f32.gmra.mxu0 %v3681
      %v3845 = vpop.f32.mrf.mxu0
      %v3846 = vadd.f32 %v3678, %v3845
      %v3847 = vpop.f32.mrf.mxu0
      %3848 = vmatprep.mubr.f32.mxu0 0.0
      %3849 = vmatmul.mubr.f32.gmra.mxu0 %v3684
      %v3850 = vpop.f32.mrf.mxu0
      %v3851 = vadd.f32 %v3678, %v3850
      %v3852 = vpop.f32.mrf.mxu0
      %3853 = vmatprep.mubr.f32.mxu0 0.0
      %3854 = vmatmul.mubr.f32.gmra.mxu0 %v3687
      %v3855 = vpop.f32.mrf.mxu0
      %v3856 = vadd.f32 %v3678, %v3855
      %v3857 = vpop.f32.mrf.mxu0
      %3858 = vmatprep.mubr.f32.mxu0 0.0
      %3859 = vmatmul.mubr.f32.gmra.mxu0 %v3690
      %v3860 = vpop.f32.mrf.mxu0
      %v3861 = vadd.f32 %v3678, %v3860
      %v3862 = vpop.f32.mrf.mxu0
      %3863 = vmatprep.mubr.f32.mxu0 0.0
      %3864 = vmatmul.mubr.f32.gmra.mxu0 %v3693
      %v3865 = vpop.f32.mrf.mxu0
      %v3866 = vadd.f32 %v3678, %v3865
      %v3867 = vpop.f32.mrf.mxu0
      %3868 = vmatprep.mubr.f32.mxu0 0.0
      %3869 = vmatmul.mubr.f32.gmra.mxu0 %v3696
      %v3870 = vpop.f32.mrf.mxu0
      %v3871 = vadd.f32 %v3678, %v3870
      %v3872 = vpop.f32.mrf.mxu0
      %3873 = vmatprep.mubr.f32.mxu0 0.0
      %3874 = vmatmul.mubr.f32.gmra.mxu0 %v3699
      %v3875 = vpop.f32.mrf.mxu0
      %v3876 = vadd.f32 %v3678, %v3875
      %v3877 = vpop.f32.mrf.mxu0
      %3878 = vmatprep.mubr.f32.mxu0 0.0
      %3879 = vmatmul.mubr.f32.gmra.mxu0 %v3702
      %v3880 = vpop.f32.mrf.mxu0
      %v3881 = vadd.f32 %v3678, %v3880
      %v3882 = vpop.f32.mrf.mxu0
      %3883 = vmatprep.mubr.f32.mxu0 0.0
      %3884 = vmatmul.mubr.f32.gmra.mxu0 %v3705
      %v3885 = vpop.f32.mrf.mxu0
      %v3886 = vadd.f32 %v3678, %v3885
      %v3887 = vpop.f32.mrf.mxu0
      %3888 = vmatprep.mubr.f32.mxu0 0.0
      %3889 = vmatmul.mubr.f32.gmra.mxu0 %v3708
      %v3890 = vpop.f32.mrf.mxu0
      %v3891 = vadd.f32 %v3678, %v3890
      %v3892 = vpop.f32.mrf.mxu0
      %3893 = vmatprep.mubr.f32.mxu0 0.0
      %3894 = vmatmul.mubr.f32.gmra.mxu0 %v3711
      %v3895 = vpop.f32.mrf.mxu0
      %v3896 = vadd.f32 %v3678, %v3895
      %v3897 = vpop.f32.mrf.mxu0
      %3898 = vmatprep.mubr.f32.mxu0 0.0
      %3899 = vmatmul.mubr.f32.gmra.mxu0 %v3714
      %v3900 = vpop.f32.mrf.mxu0
      %v3901 = vadd.f32 %v3678, %v3900
      %v3902 = vpop.f32.mrf.mxu0
      %3903 = vmatprep.mubr.f32.mxu0 0.0
      %3904 = vmatmul.mubr.f32.gmra.mxu0 %v3717
      %v3905 = vpop.f32.mrf.mxu0
      %v3906 = vadd.f32 %v3678, %v3905
      %v3907 = vpop.f32.mrf.mxu0
      %3908 = vmatprep.mubr.f32.mxu0 0.0
      %3909 = vmatmul.mubr.f32.gmra.mxu0 %v3720
      %v3910 = vpop.f32.mrf.mxu0
      %v3911 = vadd.f32 %v3678, %v3910
      %v3912 = vpop.f32.mrf.mxu0
      %3913 = vmatprep.mubr.f32.mxu0 0.0
      %3914 = vmatmul.mubr.f32.gmra.mxu0 %v3723
      %v3915 = vpop.f32.mrf.mxu0
      %v3916 = vadd.f32 %v3678, %v3915
      %v3917 = vpop.f32.mrf.mxu0
      %3918 = vmatprep.mubr.f32.mxu0 0.0
      %3919 = vmatmul.mubr.f32.gmra.mxu0 %v3726
      %v3920 = vpop.f32.mrf.mxu0
      %v3921 = vadd.f32 %v3678, %v3920
      %v3922 = vpop.f32.mrf.mxu0
      %3923 = vmatprep.mubr.f32.mxu0 0.0
      %3924 = vmatmul.mubr.f32.gmra.mxu0 %v3729
      %v3925 = vpop.f32.mrf.mxu0
      %v3926 = vadd.f32 %v3678, %v3925
      %v3927 = vpop.f32.mrf.mxu0
      %3928 = vmatprep.mubr.f32.mxu0 0.0
      %3929 = vmatmul.mubr.f32.gmra.mxu0 %v3732
      %v3930 = vpop.f32.mrf.mxu0
      %v3931 = vadd.f32 %v3678, %v3930
      %v3932 = vpop.f32.mrf.mxu0
      %3933 = vmatprep.mubr.f32.mxu0 0.0
      %3934 = vmatmul.mubr.f32.gmra.mxu0 %v3735
      %v3935 = vpop.f32.mrf.mxu0
      %v3936 = vadd.f32 %v3678, %v3935
      %v3937 = vpop.f32.mrf.mxu0
      %3938 = vmatprep.mubr.f32.mxu0 0.0
      %3939 = vmatmul.mubr.f32.gmra.mxu0 %v3738
      %v3940 = vpop.f32.mrf.mxu0
      %v3941 = vadd.f32 %v3678, %v3940
      %v3942 = vpop.f32.mrf.mxu0
      %3943 = vmatprep.mubr.f32.mxu0 0.0
      %3944 = vmatmul.mubr.f32.gmra.mxu0 %v3741
      %v3945 = vpop.f32.mrf.mxu0
      %v3946 = vadd.f32 %v3678, %v3945
      %v3947 = vpop.f32.mrf.mxu0
      %3948 = vmatprep.mubr.f32.mxu0 0.0
      %3949 = vmatmul.mubr.f32.gmra.mxu0 %v3744
      %v3950 = vpop.f32.mrf.mxu0
      %v3951 = vadd.f32 %v3678, %v3950
      %v3952 = vpop.f32.mrf.mxu0
      %3953 = vmatprep.mubr.f32.mxu0 0.0
      %3954 = vmatmul.mubr.f32.gmra.mxu0 %v3747
      %v3955 = vpop.f32.mrf.mxu0
      %v3956 = vadd.f32 %v3678, %v3955
      %v3957 = vpop.f32.mrf.mxu0
      %3958 = vmatprep.mubr.f32.mxu0 0.0
      %3959 = vmatmul.mubr.f32.gmra.mxu0 %v3750
      %v3960 = vpop.f32.mrf.mxu0
      %v3961 = vadd.f32 %v3678, %v3960
      %v3962 = vpop.f32.mrf.mxu0
      %3963 = vmatprep.mubr.f32.mxu0 0.0
      %3964 = vmatmul.mubr.f32.gmra.mxu0 %v3753
      %v3965 = vpop.f32.mrf.mxu0
      %v3966 = vadd.f32 %v3678, %v3965
      %v3967 = vpop.f32.mrf.mxu0
      %3968 = vmatprep.mubr.f32.mxu0 0.0
      %3969 = vmatmul.mubr.f32.gmra.mxu0 %v3756
      %v3970 = vpop.f32.mrf.mxu0
      %v3971 = vadd.f32 %v3678, %v3970
      %v3972 = vpop.f32.mrf.mxu0
      %3973 = vmatprep.mubr.f32.mxu0 0.0
      %3974 = vmatmul.mubr.f32.gmra.mxu0 %v3759
      %v3975 = vpop.f32.mrf.mxu0
      %v3976 = vadd.f32 %v3678, %v3975
      %v3977 = vpop.f32.mrf.mxu0
      %3978 = vmatprep.mubr.f32.mxu0 0.0
      %3979 = vmatmul.mubr.f32.gmra.mxu0 %v3762
      %v3980 = vpop.f32.mrf.mxu0
      %v3981 = vadd.f32 %v3678, %v3980
      %v3982 = vpop.f32.mrf.mxu0
      %3983 = vmatprep.mubr.f32.mxu0 0.0
      %3984 = vmatmul.mubr.f32.gmra.mxu0 %v3765
      %v3985 = vpop.f32.mrf.mxu0
      %v3986 = vadd.f32 %v3678, %v3985
      %v3987 = vpop.f32.mrf.mxu0
      %3988 = vmatprep.mubr.f32.mxu0 0.0
      %3989 = vmatmul.mubr.f32.gmra.mxu0 %v3768
      %v3990 = vpop.f32.mrf.mxu0
      %v3991 = vadd.f32 %v3678, %v3990
      %v3992 = vpop.f32.mrf.mxu0
      %3993 = vmatprep.mubr.f32.mxu0 0.0
      %3994 = vmatmul.mubr.f32.gmra.mxu0 %v3771
      %v3995 = vpop.f32.mrf.mxu0
      %v3996 = vadd.f32 %v3678, %v3995
      %v3997 = vpop.f32.mrf.mxu0
      %3998 = vmatprep.mubr.f32.mxu0 0.0
      %3999 = vmatmul.mubr.f32.gmra.mxu0 %v3774
      %v4000 = vpop.f32.mrf.mxu0
      %v4001 = vadd.f32 %v3678, %v4000
      %v4002 = vpop.f32.mrf.mxu0
      %4003 = vdwg.mxu0
      %vm4036 = vcmask 1040384
      %v4037 = vrot.slane %v3846, 7
      %v4038 = vrot.slane %v3851, 7
      %v4039 = vsel %vm4036, %v4037, %v4038
      %v4040 = vrot.slane %v3856, 7
      %v4041 = vrot.slane %v3861, 7
      %v4042 = vsel %vm4036, %v4040, %v4041
      %v4043 = vrot.slane %v3866, 7
      %v4044 = vrot.slane %v3871, 7
      %v4045 = vsel %vm4036, %v4043, %v4044
      %v4046 = vrot.slane %v3876, 7
      %v4047 = vrot.slane %v3881, 7
      %v4048 = vsel %vm4036, %v4046, %v4047
      %v4049 = vrot.slane %v3886, 7
      %v4050 = vrot.slane %v3891, 7
      %v4051 = vsel %vm4036, %v4049, %v4050
      %v4052 = vrot.slane %v3896, 7
      %v4053 = vrot.slane %v3901, 7
      %v4054 = vsel %vm4036, %v4052, %v4053
      %v4055 = vrot.slane %v3906, 7
      %v4056 = vrot.slane %v3911, 7
      %v4057 = vsel %vm4036, %v4055, %v4056
      %v4058 = vrot.slane %v3916, 7
      %v4059 = vrot.slane %v3921, 7
      %v4060 = vsel %vm4036, %v4058, %v4059
      %v4061 = vrot.slane %v3926, 7
      %v4062 = vrot.slane %v3931, 7
      %v4063 = vsel %vm4036, %v4061, %v4062
      %v4064 = vrot.slane %v3936, 7
      %v4065 = vrot.slane %v3941, 7
      %v4066 = vsel %vm4036, %v4064, %v4065
      %v4067 = vrot.slane %v3946, 7
      %v4068 = vrot.slane %v3951, 7
      %v4069 = vsel %vm4036, %v4067, %v4068
      %v4070 = vrot.slane %v3956, 7
      %v4071 = vrot.slane %v3961, 7
      %v4072 = vsel %vm4036, %v4070, %v4071
      %v4073 = vrot.slane %v3966, 7
      %v4074 = vrot.slane %v3971, 7
      %v4075 = vsel %vm4036, %v4073, %v4074
      %v4076 = vrot.slane %v3976, 7
      %v4077 = vrot.slane %v3981, 7
      %v4078 = vsel %vm4036, %v4076, %v4077
      %v4079 = vrot.slane %v3986, 7
      %v4080 = vrot.slane %v3991, 7
      %v4081 = vsel %vm4036, %v4079, %v4080
      %v4082 = vrot.slane %v3996, 7
      %v4083 = vrot.slane %v4001, 7
      %v4084 = vsel %vm4036, %v4082, %v4083
      %v4133 = vadd.f32 %v309, %v4037
      %v4134 = vadd.f32 %v310, %v4039
      %v4135 = vadd.f32 %v311, %v4038
      %v4136 = vadd.f32 %v312, %v4040
      %v4137 = vadd.f32 %v313, %v4042
      %v4138 = vadd.f32 %v314, %v4041
      %v4139 = vadd.f32 %v315, %v4043
      %v4140 = vadd.f32 %v316, %v4045
      %v4141 = vadd.f32 %v317, %v4044
      %v4142 = vadd.f32 %v318, %v4046
      %v4143 = vadd.f32 %v319, %v4048
      %v4144 = vadd.f32 %v320, %v4047
      %v4145 = vadd.f32 %v321, %v4049
      %v4146 = vadd.f32 %v322, %v4051
      %v4147 = vadd.f32 %v323, %v4050
      %v4148 = vadd.f32 %v324, %v4052
      %v4149 = vadd.f32 %v325, %v4054
      %v4150 = vadd.f32 %v326, %v4053
      %v4151 = vadd.f32 %v327, %v4055
      %v4152 = vadd.f32 %v328, %v4057
      %v4153 = vadd.f32 %v329, %v4056
      %v4154 = vadd.f32 %v330, %v4058
      %v4155 = vadd.f32 %v331, %v4060
      %v4156 = vadd.f32 %v332, %v4059
      %v4157 = vadd.f32 %v333, %v4061
      %v4158 = vadd.f32 %v334, %v4063
      %v4159 = vadd.f32 %v335, %v4062
      %v4160 = vadd.f32 %v336, %v4064
      %v4161 = vadd.f32 %v337, %v4066
      %v4162 = vadd.f32 %v338, %v4065
      %v4163 = vadd.f32 %v339, %v4067
      %v4164 = vadd.f32 %v340, %v4069
      %v4165 = vadd.f32 %v341, %v4068
      %v4166 = vadd.f32 %v342, %v4070
      %v4167 = vadd.f32 %v343, %v4072
      %v4168 = vadd.f32 %v344, %v4071
      %v4169 = vadd.f32 %v345, %v4073
      %v4170 = vadd.f32 %v346, %v4075
      %v4171 = vadd.f32 %v347, %v4074
      %v4172 = vadd.f32 %v348, %v4076
      %v4173 = vadd.f32 %v349, %v4078
      %v4174 = vadd.f32 %v350, %v4077
      %v4175 = vadd.f32 %v351, %v4079
      %v4176 = vadd.f32 %v352, %v4081
      %v4177 = vadd.f32 %v353, %v4080
      %v4178 = vadd.f32 %v354, %v4082
      %v4179 = vadd.f32 %v355, %v4084
      %v4180 = vadd.f32 %v356, %v4083
      %vm4181 = vcmask 31745
      %4182 = vst.msk [vmem:[%s305 - $0x1] sm:$0xfe] %vm4181, %v4133
      %4183 = vst.msk [vmem:[%s305 + $0x7] sm:$0xff] %vm1540, %v4134
      %4184 = vst.msk [vmem:[%s305 + $0xf] sm:$0x1] %vm2301, %v4135
      %4185 = vst.msk [vmem:[%s305 + $0xf] sm:$0xfe] %vm4181, %v4136
      %4186 = vst.msk [vmem:[%s305 + $0x17] sm:$0xff] %vm1540, %v4137
      %4187 = vst.msk [vmem:[%s305 + $0x1f] sm:$0x1] %vm2301, %v4138
      %4188 = vst.msk [vmem:[%s305 + $0x1f] sm:$0xfe] %vm4181, %v4139
      %4189 = vst.msk [vmem:[%s305 + $0x27] sm:$0xff] %vm1540, %v4140
      %4190 = vst.msk [vmem:[%s305 + $0x2f] sm:$0x1] %vm2301, %v4141
      %4191 = vst.msk [vmem:[%s305 + $0x2f] sm:$0xfe] %vm4181, %v4142
      %4192 = vst.msk [vmem:[%s305 + $0x37] sm:$0xff] %vm1540, %v4143
      %4193 = vst.msk [vmem:[%s305 + $0x3f] sm:$0x1] %vm2301, %v4144
      %4194 = vst.msk [vmem:[%s305 + $0x3f] sm:$0xfe] %vm4181, %v4145
      %4195 = vst.msk [vmem:[%s305 + $0x47] sm:$0xff] %vm1540, %v4146
      %4196 = vst.msk [vmem:[%s305 + $0x4f] sm:$0x1] %vm2301, %v4147
      %4197 = vst.msk [vmem:[%s305 + $0x4f] sm:$0xfe] %vm4181, %v4148
      %4198 = vst.msk [vmem:[%s305 + $0x57] sm:$0xff] %vm1540, %v4149
      %4199 = vst.msk [vmem:[%s305 + $0x5f] sm:$0x1] %vm2301, %v4150
      %4200 = vst.msk [vmem:[%s305 + $0x5f] sm:$0xfe] %vm4181, %v4151
      %4201 = vst.msk [vmem:[%s305 + $0x67] sm:$0xff] %vm1540, %v4152
      %4202 = vst.msk [vmem:[%s305 + $0x6f] sm:$0x1] %vm2301, %v4153
      %4203 = vst.msk [vmem:[%s305 + $0x6f] sm:$0xfe] %vm4181, %v4154
      %4204 = vst.msk [vmem:[%s305 + $0x77] sm:$0xff] %vm1540, %v4155
      %4205 = vst.msk [vmem:[%s305 + $0x7f] sm:$0x1] %vm2301, %v4156
      %4206 = vst.msk [vmem:[%s305 + $0x7f] sm:$0xfe] %vm4181, %v4157
      %4207 = vst.msk [vmem:[%s305 + $0x87] sm:$0xff] %vm1540, %v4158
      %4208 = vst.msk [vmem:[%s305 + $0x8f] sm:$0x1] %vm2301, %v4159
      %4209 = vst.msk [vmem:[%s305 + $0x8f] sm:$0xfe] %vm4181, %v4160
      %4210 = vst.msk [vmem:[%s305 + $0x97] sm:$0xff] %vm1540, %v4161
      %4211 = vst.msk [vmem:[%s305 + $0x9f] sm:$0x1] %vm2301, %v4162
      %4212 = vst.msk [vmem:[%s305 + $0x9f] sm:$0xfe] %vm4181, %v4163
      %4213 = vst.msk [vmem:[%s305 + $0xa7] sm:$0xff] %vm1540, %v4164
      %4214 = vst.msk [vmem:[%s305 + $0xaf] sm:$0x1] %vm2301, %v4165
      %4215 = vst.msk [vmem:[%s305 + $0xaf] sm:$0xfe] %vm4181, %v4166
      %4216 = vst.msk [vmem:[%s305 + $0xb7] sm:$0xff] %vm1540, %v4167
      %4217 = vst.msk [vmem:[%s305 + $0xbf] sm:$0x1] %vm2301, %v4168
      %4218 = vst.msk [vmem:[%s305 + $0xbf] sm:$0xfe] %vm4181, %v4169
      %4219 = vst.msk [vmem:[%s305 + $0xc7] sm:$0xff] %vm1540, %v4170
      %4220 = vst.msk [vmem:[%s305 + $0xcf] sm:$0x1] %vm2301, %v4171
      %4221 = vst.msk [vmem:[%s305 + $0xcf] sm:$0xfe] %vm4181, %v4172
      %4222 = vst.msk [vmem:[%s305 + $0xd7] sm:$0xff] %vm1540, %v4173
      %4223 = vst.msk [vmem:[%s305 + $0xdf] sm:$0x1] %vm2301, %v4174
      %4224 = vst.msk [vmem:[%s305 + $0xdf] sm:$0xfe] %vm4181, %v4175
      %4225 = vst.msk [vmem:[%s305 + $0xe7] sm:$0xff] %vm1540, %v4176
      %4226 = vst.msk [vmem:[%s305 + $0xef] sm:$0x1] %vm2301, %v4177
      %4227 = vst.msk [vmem:[%s305 + $0xef] sm:$0xfe] %vm4181, %v4178
      %4228 = vst.msk [vmem:[%s305 + $0xf7] sm:$0xff] %vm1540, %v4179
      %4229 = vst.msk [vmem:[%s305 + $0xff] sm:$0x1] %vm2301, %v4180
      %p4230 = scmp.lt.s32.totalorder %s19, 1
      %s4231 = scalar_select %p4230, %s19, 1
      %s4232 = smul.addr %s4231, 32
      %s4233 = smul.addr %s4232, 8
      %s4234 = scalar_lea.vmem %s8, %s4233
      // Predicated region
      $region53: #{residual_block_pallas.1} parent=51 // pred_check
        %p4235 = pneg %p210
      $region54: #{residual_block_pallas.1} parent=51 // pred_check_branch
        %4237 = sbr.rel (%p4235) target = $region56
      $region55: #{residual_block_pallas.1} parent=51 // pred_region
        _
      $region56: #{residual_block_pallas.1} parent=51 // pred_fallthru
        _
    $region52: #{residual_block_pallas.1} parent=5 // pred_fallthru
      _
    %p4238 = scmp.le.s32.totalorder 2, %s14
    // Predicated region
    $region57: #{residual_block_pallas.1} parent=5 // pred_check
      %p4239 = pneg %p4238
    $region58: #{residual_block_pallas.1} parent=5 // pred_check_branch
      %4241 = sbr.rel (%p4239) target = $region60
    $region59: #{residual_block_pallas.1} parent=5 // pred_region
      %s4242 = ssub.s32 %s14, 2
      // Predicated region
      $region61: #{residual_block_pallas.1} parent=59 // pred_check
        %p4243 = pneg %p216
      $region62: #{residual_block_pallas.1} parent=59 // pred_check_branch
        %4245 = sbr.rel (%p4243) target = $region64
      $region63: #{residual_block_pallas.1} parent=59 // pred_region
        %p4246 = scmp.lt.s32.totalorder %s20, 1
        %s4247 = scalar_select %p4246, %s20, 1
        %s4248 = smul.addr %s4247, 32
        %s4249 = smul.addr %s4248, 8
        %s4250 = scalar_lea.vmem %s8, %s4249
      $region64: #{residual_block_pallas.1} parent=59 // pred_fallthru
        _
    $region60: #{residual_block_pallas.1} parent=5 // pred_fallthru
      _
  $region6: #{residual_block_pallas.1} parent=0 // loop_footer
    %s18 = sadd.s32 1, %s14
  $region7: #{residual_block_pallas.1} parent=0 // loop_footer_branch
    %13 = sbr.rel target = $region3
  $region8: #{residual_block_pallas.1} parent=0 // loop_exit
    _

</llo_original>
